<compile_context>
chip_gen: v6e
topology: v6e:2x2x1
jax: 0.10.0
libtpu: 0.0.40
codegen_flags: <defaults>
</compile_context>

<pallas_src>
import jax
import jax.numpy as jnp
from jax.experimental import pallas as pl
from jax.experimental.pallas import tpu as pltpu

_EPS = 1e-5


def _make_kernel(Ho, Wo, Hq, Wq, Cin, Cmid, Cout, stride, has_proj, use_im2col):
    """Fused forward for one image per grid step (all static Python shapes)."""
    P = stride * stride            # number of spatial parity planes
    HW = Ho * Wo
    f32 = jnp.float32
    bf16 = jnp.bfloat16

    def kernel(*refs):
        x_ref, sc1_ref, sh1_ref, b1_ref, b2_ref, w1_ref, w2_ref, w3_ref = refs[:8]
        pos = 8
        wp_ref = None
        if has_proj:
            wp_ref = refs[pos]
            pos += 1
        o_ref = refs[pos]
        tq = refs[pos + 1]
        col = refs[pos + 2] if use_im2col else None

        # ---- stage 1: bn1 -> relu (f32 VPU) -> conv1(1x1) + folded bn2 -> relu ----
        x2 = x_ref[...].reshape(P * HW, Cin).astype(f32)   # all pixels, parity-plane order
        h2 = jnp.maximum(x2 * sc1_ref[...] + sh1_ref[...], 0.0)
        h2b = h2.astype(bf16)                              # MXU operand
        t2 = jnp.dot(h2b, w1_ref[...], preferred_element_type=f32) + b1_ref[...]
        t2b = jnp.maximum(t2, 0.0).astype(bf16)            # (P*HW, Cmid)

        # ---- skip path (plane 0 holds the stride-subsampled pixels) ----
        if has_proj:
            skip = jnp.dot(h2b[:HW, :], wp_ref[...], preferred_element_type=f32)
        else:
            skip = x2[:HW, :]                              # identity: stride==1, Cin==Cout

        # ---- stage 2: scatter t into the zero-padded, parity-split scratch ----
        # tq[pr*stride + pc, iq, jq, :] == tpad[stride*iq + pr, stride*jq + pc, :].
        # Interior is written directly; only the thin border rows/columns are zeroed,
        # every step (scratch is per-core + 'parallel' grid => no program_id==0 init).
        for p in range(P):
            br, bw = p // stride, p % stride
            pw = ((br + 1) % stride) * stride + ((bw + 1) % stride)
            rq0 = (br + 1) // stride
            cq0 = (bw + 1) // stride
            blk = t2b[p * HW:(p + 1) * HW, :].reshape(Ho, Wo, Cmid)
            tq[pw, rq0:rq0 + Ho, cq0:cq0 + Wo, :] = blk
            for r in list(range(rq0)) + list(range(rq0 + Ho, Hq)):
                tq[pw, r, :, :] = jnp.zeros((Wq, Cmid), bf16)
            for c in list(range(cq0)) + list(range(cq0 + Wo, Wq)):
                tq[pw, :, c:c + 1, :] = jnp.zeros((Hq, 1, Cmid), bf16)

        # ---- stage 3: conv2 (3x3, stride) + folded bn3 -> relu ----
        taps = []
        for dy in range(3):
            for dx in range(3):
                pt = (dy % stride) * stride + (dx % stride)
                ro, co = dy // stride, dx // stride
                taps.append((dy * 3 + dx, pt, ro, co))
        if use_im2col:
            # One K=9*Cmid matmul fills the 256-deep v6e/v7x MXU; lane offsets in the
            # im2col scratch are 128-aligned by construction (Cmid % 128 == 0).
            for k, pt, ro, co in taps:
                col[:, :, k * Cmid:(k + 1) * Cmid] = tq[pt, ro:ro + Ho, co:co + Wo, :]
            acc = jnp.dot(col[...].reshape(HW, 9 * Cmid), w2_ref[...],
                          preferred_element_type=f32)
        else:
            acc = jnp.zeros((HW, Cmid), f32)
            for k, pt, ro, co in taps:
                tap = tq[pt, ro:ro + Ho, co:co + Wo, :].reshape(HW, Cmid)
                acc = acc + jnp.dot(tap, w2_ref[k], preferred_element_type=f32)
        z = jnp.maximum(acc + b2_ref[...], 0.0)            # (HW, Cmid), f32

        # ---- stage 4: conv3 (1x1) + skip ----
        o_ref[...] = jnp.dot(z.astype(bf16), w3_ref[...],
                             preferred_element_type=f32) + skip

    return kernel


def bottleneck_block_v2s3(x_nchw, params, stride):
    """Forward pass. x_nchw: (N, Cin, H, W) float32. Returns (N, Cout, Ho, Wo) float32."""
    x = jnp.transpose(x_nchw, (0, 2, 3, 1))                # NCHW -> NHWC
    N, H, W, Cin = x.shape
    Cmid = params["w1"].shape[1]
    Cout = params["w3"].shape[1]
    assert H % stride == 0 and W % stride == 0, "spatial dims must divide by stride"
    Ho, Wo = H // stride, W // stride
    HW = Ho * Wo
    P = stride * stride
    has_proj = not (Cin == Cout and stride == 1)
    # Fused-K conv2 only when lane offsets in the im2col scratch stay 128-aligned and
    # the MXU contraction would otherwise be under-filled.
    use_im2col = (Cmid % 128 == 0) and (Cmid <= 128)

    def fold(g, b, m, v):   # eval-mode BN folded to per-channel scale/shift
        scale = g / jnp.sqrt(v + _EPS)
        shift = b - m * scale
        return scale, shift

    s1, t1 = fold(params["g1"], params["b1"], params["m1"], params["v1"])
    s2, t2 = fold(params["g2"], params["b2"], params["m2"], params["v2"])
    s3, t3 = fold(params["g3"], params["b3"], params["m3"], params["v3"])

    sc1 = s1.reshape(1, Cin).astype(jnp.float32)
    sh1 = t1.reshape(1, Cin).astype(jnp.float32)
    # Fold bn2 into conv1's output channels, bn3 into conv2's output channels.
    # MXU operands (weights) are bf16; biases / BN vectors stay f32.
    w1f = (params["w1"] * s2[None, :]).astype(jnp.bfloat16)        # (Cin, Cmid)
    b1f = t2.reshape(1, Cmid).astype(jnp.float32)
    w2f = params["w2"] * s3[None, None, :]                         # (9, Cmid, Cmid)
    w2k = (w2f.reshape(9 * Cmid, Cmid) if use_im2col else w2f).astype(jnp.bfloat16)
    b2f = t3.reshape(1, Cmid).astype(jnp.float32)
    w3f = params["w3"].astype(jnp.bfloat16)                        # (Cmid, Cout)

    # Parity-split the spatial dims by `stride` so every in-kernel access is a
    # contiguous static slice; plane p = br*stride + bw holds pixels
    # (stride*a + br, stride*b + bw) at flat index a*Wo + b.
    # stride==1 is a pure reshape (no transpose pass).  Shipped as bf16 to halve DMA.
    if stride == 1:
        xp = x.reshape(N, 1, HW, Cin)
    else:
        xp = x.reshape(N, Ho, stride, Wo, stride, Cin)
        xp = xp.transpose(0, 2, 4, 1, 3, 5).reshape(N, P, HW, Cin)
    xp = xp.astype(jnp.bfloat16)
    # TODO(synk): for stride>1 the parity gather could be done in-kernel
    # (memory_space=pl.ANY + manual DMAs) to avoid this wrapper-side HBM pass.

    # Padded parity-split scratch extents (1-pixel halo).
    Hq = (H + 2 + stride - 1) // stride
    Wq = (W + 2 + stride - 1) // stride

    const_args = [sc1, sh1, b1f, b2f, w1f, w2k, w3f]
    if has_proj:
        const_args.append(params["wproj"].astype(jnp.bfloat16))

    # Grid-invariant operands: whole-array VMEM residency, no per-step double-buffer.
    invariant_spec = pl.BlockSpec(memory_space=pltpu.MemorySpace.VMEM)
    in_specs = [pl.BlockSpec((None, P, HW, Cin), lambda n: (n, 0, 0, 0))]
    in_specs += [invariant_spec] * len(const_args)

    scratch_shapes = [pltpu.VMEM((P, Hq, Wq, Cmid), jnp.bfloat16)]
    if use_im2col:
        scratch_shapes.append(pltpu.VMEM((Ho, Wo, 9 * Cmid), jnp.bfloat16))

    # Advisory cost estimate for XLA scheduling around the custom call.
    flops = (2 * N * H * W * Cin * Cmid            # conv1 (all pixels, pre-stride)
             + 2 * N * HW * 9 * Cmid * Cmid        # conv2
             + 2 * N * HW * Cmid * Cout            # conv3
             + (2 * N * HW * Cin * Cout if has_proj else 0))
    weight_bytes = sum(int(a.size) * a.dtype.itemsize for a in const_args)
    bytes_accessed = int(xp.size) * 2 + N * HW * Cout * 4 + weight_bytes
    cost = pl.CostEstimate(flops=int(flops), transcendentals=0,
                           bytes_accessed=int(bytes_accessed))

    # Per-step VMEM footprint (pipelined blocks + resident weights + scratch +
    # slab temporaries), clamped to [32 MiB, 64 MiB (v7x physical per-TC)].
    footprint = (2 * P * HW * Cin * 2              # input block, double-buffered, bf16
                 + 2 * HW * Cout * 4               # output block, double-buffered, f32
                 + weight_bytes
                 + P * Hq * Wq * Cmid * 2          # padded conv2 scratch (bf16)
                 + (HW * 9 * Cmid * 2 if use_im2col else 0)
                 + 6 * P * HW * max(Cin, Cmid, Cout) * 4)   # in-flight slab temporaries
    vmem_limit = int(min(max(footprint + (4 << 20), 32 << 20), 64 << 20))
    # TODO(synk): row-band tiling over Ho (second 'parallel' grid axis) for feature maps
    # that do not fit this per-image budget is not implemented.

    kernel = _make_kernel(Ho, Wo, Hq, Wq, Cin, Cmid, Cout, stride, has_proj, use_im2col)

    out = pl.pallas_call(
        kernel,
        out_shape=jax.ShapeDtypeStruct((N, HW, Cout), jnp.float32),
        grid_spec=pltpu.PrefetchScalarGridSpec(
            num_scalar_prefetch=0,
            grid=(N,),
            in_specs=in_specs,
            out_specs=pl.BlockSpec((None, HW, Cout), lambda n: (n, 0, 0)),
            scratch_shapes=scratch_shapes,
        ),
        compiler_params=pltpu.CompilerParams(
            dimension_semantics=("parallel",),
            vmem_limit_bytes=vmem_limit,
        ),
        cost_estimate=cost,
    )(xp, *const_args)

    out = out.reshape(N, Ho, Wo, Cout)
    return jnp.transpose(out, (0, 3, 1, 2))                # NHWC -> NCHW


# ----------------------------- reference (pure JAX, f32) -----------------------------

def ref_forward(x_nchw, params, stride):
    x = jnp.transpose(x_nchw, (0, 2, 3, 1)).astype(jnp.float32)
    N, H, W, Cin = x.shape
    Cout = params["w3"].shape[1]
    bn = lambda v, g, b, m, var: (v - m) / jnp.sqrt(var + _EPS) * g + b
    h = jax.nn.relu(bn(x, params["g1"], params["b1"], params["m1"], params["v1"]))
    has_proj = not (Cin == Cout and stride == 1)
    if has_proj:
        hs = h[:, ::stride, ::stride, :]
        skip = jnp.einsum("nhwc,cd->nhwd", hs, params["wproj"])
    else:
        skip = x
    t = jnp.einsum("nhwc,cd->nhwd", h, params["w1"])
    t = jax.nn.relu(bn(t, params["g2"], params["b2"], params["m2"], params["v2"]))
    tp = jnp.pad(t, ((0, 0), (1, 1), (1, 1), (0, 0)))
    Ho = (H - 1) // stride + 1
    Wo = (W - 1) // stride + 1
    y2 = jnp.zeros((N, Ho, Wo, t.shape[-1]), jnp.float32)
    for dy in range(3):
        for dx in range(3):
            sl = tp[:, dy:dy + (Ho - 1) * stride + 1:stride,
                    dx:dx + (Wo - 1) * stride + 1:stride, :]
            y2 = y2 + jnp.einsum("nhwc,cd->nhwd", sl, params["w2"][dy * 3 + dx])
    z = jax.nn.relu(bn(y2, params["g3"], params["b3"], params["m3"], params["v3"]))
    y = jnp.einsum("nhwc,cd->nhwd", z, params["w3"])
    return jnp.transpose(y + skip, (0, 3, 1, 2))


# ------------------------------ deterministic init ------------------------------

def init_params(key, Cin, Cmid, Cout, has_proj):
    ks = jax.random.split(key, 8)

    def bn_init(k, C):
        k1, k2, k3, k4 = jax.random.split(k, 4)
        return (1.0 + 0.1 * jax.random.normal(k1, (C,), jnp.float32),
                0.1 * jax.random.normal(k2, (C,), jnp.float32),
                0.1 * jax.random.normal(k3, (C,), jnp.float32),
                jax.random.uniform(k4, (C,), jnp.float32, 0.5, 1.5))

    p = {}
    for name, C, k in (("1", Cin, ks[0]), ("2", Cmid, ks[1]), ("3", Cmid, ks[2])):
        g, b, m, v = bn_init(k, C)
        p["g" + name], p["b" + name], p["m" + name], p["v" + name] = g, b, m, v
    # Conv weights in (in, out) / (tap, in, out) layout (== PyTorch weight transposed).
    p["w1"] = 0.2 * jax.random.normal(ks[3], (Cin, Cmid), jnp.float32)
    p["w2"] = 0.2 * jax.random.normal(ks[4], (9, Cmid, Cmid), jnp.float32)
    p["w3"] = 0.2 * jax.random.normal(ks[5], (Cmid, Cout), jnp.float32)
    if has_proj:
        p["wproj"] = 0.2 * jax.random.normal(ks[6], (Cin, Cout), jnp.float32)
    return p


def _check(out, ref):
    # bf16 MXU operands (f32 accumulation) vs. a pure-f32 reference: ~2^-9 relative
    # operand rounding accumulated over K<=9*Cmid and O(4) value magnitudes, plus a
    # tight mean-error bound to catch structural bugs (wrong tap / plane / fold).
    err = jnp.abs(out - ref)
    max_rel = float(jnp.max(err / (jnp.abs(ref) + 1.0)))
    mean_abs = float(jnp.mean(err))
    assert max_rel < 1e-1, f"max relative error too large: {max_rel}"
    assert mean_abs < 3e-2, f"mean absolute error too large: {mean_abs}"


if __name__ == "__main__":
    key = jax.random.PRNGKey(0)
    kx1, kp1, kx2, kp2 = jax.random.split(key, 4)

    # Case 1: projection path (channel change + stride 2).
    N, Cin, H, W = 2, 8, 16, 16
    Cmid, Cout, stride = 4, 16, 2
    x = jax.random.normal(kx1, (N, Cin, H, W), jnp.float32)
    params = init_params(kp1, Cin, Cmid, Cout, has_proj=True)
    out = jax.block_until_ready(bottleneck_block_v2s3(x, params, stride))
    ref = ref_forward(x, params, stride)
    assert out.shape == (N, Cout, H // stride, W // stride)
    _check(out, ref)

    # Case 2: identity skip (same channels, stride 1).
    N, Cin, H, W = 2, 8, 8, 8
    Cmid, Cout, stride = 4, 8, 1
    x = jax.random.normal(kx2, (N, Cin, H, W), jnp.float32)
    params = init_params(kp2, Cin, Cmid, Cout, has_proj=False)
    out = jax.block_until_ready(bottleneck_block_v2s3(x, params, stride))
    ref = ref_forward(x, params, stride)
    assert out.shape == (N, Cout, H, W)
    _check(out, ref)

    print("KERNEL_OK")
</pallas_src>

<mosaic_0001>
module attributes {stable_mosaic.version = 11 : i64} {
  func.func @kernel(%arg0: i32, %arg1: memref<1x4x64x8xbf16, #tpu.memory_space<vmem>>, %arg2: memref<1x8xf32, #tpu.memory_space<vmem>>, %arg3: memref<1x8xf32, #tpu.memory_space<vmem>>, %arg4: memref<1x4xf32, #tpu.memory_space<vmem>>, %arg5: memref<1x4xf32, #tpu.memory_space<vmem>>, %arg6: memref<8x4xbf16, #tpu.memory_space<vmem>>, %arg7: memref<9x4x4xbf16, #tpu.memory_space<vmem>>, %arg8: memref<4x16xbf16, #tpu.memory_space<vmem>>, %arg9: memref<8x16xbf16, #tpu.memory_space<vmem>>, %arg10: memref<1x64x16xf32, #tpu.memory_space<vmem>>, %arg11: memref<4x9x9x4xbf16, #tpu.memory_space<vmem>>) attributes {dimension_semantics = [#tpu.dimension_semantics<parallel>], iteration_bounds = array<i64: 2>, scalar_prefetch = 0 : i64, scratch_operands = 1 : i64, tpu.core_type = #tpu.core_type<tc>, window_params = [{transform_indices = @transform_0, window_bounds = array<i64: 1, 4, 64, 8>}, {pipeline_mode = #tpu.pipeline_mode<synchronous>, transform_indices = @transform_1, window_bounds = array<i64: 1, 8>}, {pipeline_mode = #tpu.pipeline_mode<synchronous>, transform_indices = @transform_2, window_bounds = array<i64: 1, 8>}, {pipeline_mode = #tpu.pipeline_mode<synchronous>, transform_indices = @transform_3, window_bounds = array<i64: 1, 4>}, {pipeline_mode = #tpu.pipeline_mode<synchronous>, transform_indices = @transform_4, window_bounds = array<i64: 1, 4>}, {pipeline_mode = #tpu.pipeline_mode<synchronous>, transform_indices = @transform_5, window_bounds = array<i64: 8, 4>}, {pipeline_mode = #tpu.pipeline_mode<synchronous>, transform_indices = @transform_6, window_bounds = array<i64: 9, 4, 4>}, {pipeline_mode = #tpu.pipeline_mode<synchronous>, transform_indices = @transform_7, window_bounds = array<i64: 4, 16>}, {pipeline_mode = #tpu.pipeline_mode<synchronous>, transform_indices = @transform_8, window_bounds = array<i64: 8, 16>}, {transform_indices = @transform_9, window_bounds = array<i64: 1, 64, 16>}]} {
    %c0 = arith.constant 0 : index
    %c0_0 = arith.constant 0 : index
    %c0_1 = arith.constant 0 : index
    %c0_2 = arith.constant 0 : index
    %0 = vector.load %arg1[%c0, %c0_0, %c0_1, %c0_2] : memref<1x4x64x8xbf16, #tpu.memory_space<vmem>>, vector<1x4x64x8xbf16>
    %1 = vector.shape_cast %0 : vector<1x4x64x8xbf16> to vector<4x64x8xbf16>
    %2 = vector.shape_cast %1 : vector<4x64x8xbf16> to vector<256x8xbf16>
    %3 = arith.extf %2 : vector<256x8xbf16> to vector<256x8xf32>
    %c0_3 = arith.constant 0 : index
    %c0_4 = arith.constant 0 : index
    %4 = vector.load %arg2[%c0_3, %c0_4] : memref<1x8xf32, #tpu.memory_space<vmem>>, vector<1x8xf32>
    %5 = vector.broadcast %4 : vector<1x8xf32> to vector<256x8xf32>
    %6 = arith.mulf %3, %5 : vector<256x8xf32>
    %c0_5 = arith.constant 0 : index
    %c0_6 = arith.constant 0 : index
    %7 = vector.load %arg3[%c0_5, %c0_6] : memref<1x8xf32, #tpu.memory_space<vmem>>, vector<1x8xf32>
    %8 = vector.broadcast %7 : vector<1x8xf32> to vector<256x8xf32>
    %9 = arith.addf %6, %8 : vector<256x8xf32>
    %cst = arith.constant 0.000000e+00 : f32
    %10 = vector.broadcast %cst : f32 to vector<256x8xf32>
    %11 = arith.maximumf %9, %10 : vector<256x8xf32>
    %12 = arith.truncf %11 : vector<256x8xf32> to vector<256x8xbf16>
    %c0_7 = arith.constant 0 : index
    %c0_8 = arith.constant 0 : index
    %13 = vector.load %arg6[%c0_7, %c0_8] : memref<8x4xbf16, #tpu.memory_space<vmem>>, vector<8x4xbf16>
    %cst_9 = arith.constant dense<0.000000e+00> : vector<256x4xf32>
    %14 = tpu.matmul %12, %13, %cst_9 {dimension_numbers = #tpu.dot_dimension_numbers<[1], [0], [0], [1], [0, 0, 1, 1], [], []>} : vector<256x8xbf16>, vector<8x4xbf16>, vector<256x4xf32> -> vector<256x4xf32>
    %c0_10 = arith.constant 0 : index
    %c0_11 = arith.constant 0 : index
    %15 = vector.load %arg4[%c0_10, %c0_11] : memref<1x4xf32, #tpu.memory_space<vmem>>, vector<1x4xf32>
    %16 = vector.broadcast %15 : vector<1x4xf32> to vector<256x4xf32>
    %17 = arith.addf %14, %16 : vector<256x4xf32>
    %cst_12 = arith.constant 0.000000e+00 : f32
    %18 = vector.broadcast %cst_12 : f32 to vector<256x4xf32>
    %19 = arith.maximumf %17, %18 : vector<256x4xf32>
    %20 = arith.truncf %19 : vector<256x4xf32> to vector<256x4xbf16>
    %21 = vector.extract_strided_slice %12 {offsets = [0, 0], sizes = [64, 8], strides = [1, 1]} : vector<256x8xbf16> to vector<64x8xbf16>
    %c0_13 = arith.constant 0 : index
    %c0_14 = arith.constant 0 : index
    %22 = vector.load %arg9[%c0_13, %c0_14] : memref<8x16xbf16, #tpu.memory_space<vmem>>, vector<8x16xbf16>
    %cst_15 = arith.constant dense<0.000000e+00> : vector<64x16xf32>
    %23 = tpu.matmul %21, %22, %cst_15 {dimension_numbers = #tpu.dot_dimension_numbers<[1], [0], [0], [1], [0, 0, 1, 1], [], []>} : vector<64x8xbf16>, vector<8x16xbf16>, vector<64x16xf32> -> vector<64x16xf32>
    %24 = vector.extract_strided_slice %20 {offsets = [0, 0], sizes = [64, 4], strides = [1, 1]} : vector<256x4xbf16> to vector<64x4xbf16>
    %25 = vector.shape_cast %24 : vector<64x4xbf16> to vector<8x8x4xbf16>
    %c3 = arith.constant 3 : index
    %c0_16 = arith.constant 0 : index
    %c0_17 = arith.constant 0 : index
    %c0_18 = arith.constant 0 : index
    %26 = vector.load %arg11[%c3, %c0_16, %c0_17, %c0_18] : memref<4x9x9x4xbf16, #tpu.memory_space<vmem>>, vector<1x8x8x4xbf16>
    %27 = vector.shape_cast %26 : vector<1x8x8x4xbf16> to vector<8x8x4xbf16>
    %28 = vector.shape_cast %25 : vector<8x8x4xbf16> to vector<1x8x8x4xbf16>
    tpu.vector_store %arg11[%c3, %c0_16, %c0_17, %c0_18], %28 {strides = array<i32>} : memref<4x9x9x4xbf16, #tpu.memory_space<vmem>>, vector<1x8x8x4xbf16>,
    %cst_19 = arith.constant 0.000000e+00 : bf16
    %29 = vector.broadcast %cst_19 : bf16 to vector<9x4xbf16>
    %c3_20 = arith.constant 3 : index
    %c8 = arith.constant 8 : index
    %c0_21 = arith.constant 0 : index
    %c0_22 = arith.constant 0 : index
    %30 = vector.load %arg11[%c3_20, %c8, %c0_21, %c0_22] : memref<4x9x9x4xbf16, #tpu.memory_space<vmem>>, vector<1x1x9x4xbf16>
    %31 = vector.shape_cast %30 : vector<1x1x9x4xbf16> to vector<9x4xbf16>
    %32 = vector.shape_cast %29 : vector<9x4xbf16> to vector<1x1x9x4xbf16>
    tpu.vector_store %arg11[%c3_20, %c8, %c0_21, %c0_22], %32 {strides = array<i32>} : memref<4x9x9x4xbf16, #tpu.memory_space<vmem>>, vector<1x1x9x4xbf16>,
    %cst_23 = arith.constant 0.000000e+00 : bf16
    %33 = vector.broadcast %cst_23 : bf16 to vector<9x1x4xbf16>
    %c3_24 = arith.constant 3 : index
    %c0_25 = arith.constant 0 : index
    %c8_26 = arith.constant 8 : index
    %c0_27 = arith.constant 0 : index
    %34 = vector.load %arg11[%c3_24, %c0_25, %c8_26, %c0_27] : memref<4x9x9x4xbf16, #tpu.memory_space<vmem>>, vector<1x9x1x4xbf16>
    %35 = vector.shape_cast %34 : vector<1x9x1x4xbf16> to vector<9x1x4xbf16>
    %36 = vector.shape_cast %33 : vector<9x1x4xbf16> to vector<1x9x1x4xbf16>
    tpu.vector_store %arg11[%c3_24, %c0_25, %c8_26, %c0_27], %36 {strides = array<i32>} : memref<4x9x9x4xbf16, #tpu.memory_space<vmem>>, vector<1x9x1x4xbf16>,
    %37 = vector.extract_strided_slice %20 {offsets = [64, 0], sizes = [64, 4], strides = [1, 1]} : vector<256x4xbf16> to vector<64x4xbf16>
    %38 = vector.shape_cast %37 : vector<64x4xbf16> to vector<8x8x4xbf16>
    %c2 = arith.constant 2 : index
    %c0_28 = arith.constant 0 : index
    %c1 = arith.constant 1 : index
    %c0_29 = arith.constant 0 : index
    %39 = vector.load %arg11[%c2, %c0_28, %c1, %c0_29] : memref<4x9x9x4xbf16, #tpu.memory_space<vmem>>, vector<1x8x8x4xbf16>
    %40 = vector.shape_cast %39 : vector<1x8x8x4xbf16> to vector<8x8x4xbf16>
    %41 = vector.shape_cast %38 : vector<8x8x4xbf16> to vector<1x8x8x4xbf16>
    tpu.vector_store %arg11[%c2, %c0_28, %c1, %c0_29], %41 {strides = array<i32>} : memref<4x9x9x4xbf16, #tpu.memory_space<vmem>>, vector<1x8x8x4xbf16>,
    %cst_30 = arith.constant 0.000000e+00 : bf16
    %42 = vector.broadcast %cst_30 : bf16 to vector<9x4xbf16>
    %c2_31 = arith.constant 2 : index
    %c8_32 = arith.constant 8 : index
    %c0_33 = arith.constant 0 : index
    %c0_34 = arith.constant 0 : index
    %43 = vector.load %arg11[%c2_31, %c8_32, %c0_33, %c0_34] : memref<4x9x9x4xbf16, #tpu.memory_space<vmem>>, vector<1x1x9x4xbf16>
    %44 = vector.shape_cast %43 : vector<1x1x9x4xbf16> to vector<9x4xbf16>
    %45 = vector.shape_cast %42 : vector<9x4xbf16> to vector<1x1x9x4xbf16>
    tpu.vector_store %arg11[%c2_31, %c8_32, %c0_33, %c0_34], %45 {strides = array<i32>} : memref<4x9x9x4xbf16, #tpu.memory_space<vmem>>, vector<1x1x9x4xbf16>,
    %cst_35 = arith.constant 0.000000e+00 : bf16
    %46 = vector.broadcast %cst_35 : bf16 to vector<9x1x4xbf16>
    %c2_36 = arith.constant 2 : index
    %c0_37 = arith.constant 0 : index
    %c0_38 = arith.constant 0 : index
    %c0_39 = arith.constant 0 : index
    %47 = vector.load %arg11[%c2_36, %c0_37, %c0_38, %c0_39] : memref<4x9x9x4xbf16, #tpu.memory_space<vmem>>, vector<1x9x1x4xbf16>
    %48 = vector.shape_cast %47 : vector<1x9x1x4xbf16> to vector<9x1x4xbf16>
    %49 = vector.shape_cast %46 : vector<9x1x4xbf16> to vector<1x9x1x4xbf16>
    tpu.vector_store %arg11[%c2_36, %c0_37, %c0_38, %c0_39], %49 {strides = array<i32>} : memref<4x9x9x4xbf16, #tpu.memory_space<vmem>>, vector<1x9x1x4xbf16>,
    %50 = vector.extract_strided_slice %20 {offsets = [128, 0], sizes = [64, 4], strides = [1, 1]} : vector<256x4xbf16> to vector<64x4xbf16>
    %51 = vector.shape_cast %50 : vector<64x4xbf16> to vector<8x8x4xbf16>
    %c1_40 = arith.constant 1 : index
    %c1_41 = arith.constant 1 : index
    %c0_42 = arith.constant 0 : index
    %c0_43 = arith.constant 0 : index
    %52 = vector.load %arg11[%c1_40, %c1_41, %c0_42, %c0_43] : memref<4x9x9x4xbf16, #tpu.memory_space<vmem>>, vector<1x8x8x4xbf16>
    %53 = vector.shape_cast %52 : vector<1x8x8x4xbf16> to vector<8x8x4xbf16>
    %54 = vector.shape_cast %51 : vector<8x8x4xbf16> to vector<1x8x8x4xbf16>
    tpu.vector_store %arg11[%c1_40, %c1_41, %c0_42, %c0_43], %54 {strides = array<i32>} : memref<4x9x9x4xbf16, #tpu.memory_space<vmem>>, vector<1x8x8x4xbf16>,
    %cst_44 = arith.constant 0.000000e+00 : bf16
    %55 = vector.broadcast %cst_44 : bf16 to vector<9x4xbf16>
    %c1_45 = arith.constant 1 : index
    %c0_46 = arith.constant 0 : index
    %c0_47 = arith.constant 0 : index
    %c0_48 = arith.constant 0 : index
    %56 = vector.load %arg11[%c1_45, %c0_46, %c0_47, %c0_48] : memref<4x9x9x4xbf16, #tpu.memory_space<vmem>>, vector<1x1x9x4xbf16>
    %57 = vector.shape_cast %56 : vector<1x1x9x4xbf16> to vector<9x4xbf16>
    %58 = vector.shape_cast %55 : vector<9x4xbf16> to vector<1x1x9x4xbf16>
    tpu.vector_store %arg11[%c1_45, %c0_46, %c0_47, %c0_48], %58 {strides = array<i32>} : memref<4x9x9x4xbf16, #tpu.memory_space<vmem>>, vector<1x1x9x4xbf16>,
    %cst_49 = arith.constant 0.000000e+00 : bf16
    %59 = vector.broadcast %cst_49 : bf16 to vector<9x1x4xbf16>
    %c1_50 = arith.constant 1 : index
    %c0_51 = arith.constant 0 : index
    %c8_52 = arith.constant 8 : index
    %c0_53 = arith.constant 0 : index
    %60 = vector.load %arg11[%c1_50, %c0_51, %c8_52, %c0_53] : memref<4x9x9x4xbf16, #tpu.memory_space<vmem>>, vector<1x9x1x4xbf16>
    %61 = vector.shape_cast %60 : vector<1x9x1x4xbf16> to vector<9x1x4xbf16>
    %62 = vector.shape_cast %59 : vector<9x1x4xbf16> to vector<1x9x1x4xbf16>
    tpu.vector_store %arg11[%c1_50, %c0_51, %c8_52, %c0_53], %62 {strides = array<i32>} : memref<4x9x9x4xbf16, #tpu.memory_space<vmem>>, vector<1x9x1x4xbf16>,
    %63 = vector.extract_strided_slice %20 {offsets = [192, 0], sizes = [64, 4], strides = [1, 1]} : vector<256x4xbf16> to vector<64x4xbf16>
    %64 = vector.shape_cast %63 : vector<64x4xbf16> to vector<8x8x4xbf16>
    %c0_54 = arith.constant 0 : index
    %c1_55 = arith.constant 1 : index
    %c1_56 = arith.constant 1 : index
    %c0_57 = arith.constant 0 : index
    %65 = vector.load %arg11[%c0_54, %c1_55, %c1_56, %c0_57] : memref<4x9x9x4xbf16, #tpu.memory_space<vmem>>, vector<1x8x8x4xbf16>
    %66 = vector.shape_cast %65 : vector<1x8x8x4xbf16> to vector<8x8x4xbf16>
    %67 = vector.shape_cast %64 : vector<8x8x4xbf16> to vector<1x8x8x4xbf16>
    tpu.vector_store %arg11[%c0_54, %c1_55, %c1_56, %c0_57], %67 {strides = array<i32>} : memref<4x9x9x4xbf16, #tpu.memory_space<vmem>>, vector<1x8x8x4xbf16>,
    %cst_58 = arith.constant 0.000000e+00 : bf16
    %68 = vector.broadcast %cst_58 : bf16 to vector<9x4xbf16>
    %c0_59 = arith.constant 0 : index
    %c0_60 = arith.constant 0 : index
    %c0_61 = arith.constant 0 : index
    %c0_62 = arith.constant 0 : index
    %69 = vector.load %arg11[%c0_59, %c0_60, %c0_61, %c0_62] : memref<4x9x9x4xbf16, #tpu.memory_space<vmem>>, vector<1x1x9x4xbf16>
    %70 = vector.shape_cast %69 : vector<1x1x9x4xbf16> to vector<9x4xbf16>
    %71 = vector.shape_cast %68 : vector<9x4xbf16> to vector<1x1x9x4xbf16>
    tpu.vector_store %arg11[%c0_59, %c0_60, %c0_61, %c0_62], %71 {strides = array<i32>} : memref<4x9x9x4xbf16, #tpu.memory_space<vmem>>, vector<1x1x9x4xbf16>,
    %cst_63 = arith.constant 0.000000e+00 : bf16
    %72 = vector.broadcast %cst_63 : bf16 to vector<9x1x4xbf16>
    %c0_64 = arith.constant 0 : index
    %c0_65 = arith.constant 0 : index
    %c0_66 = arith.constant 0 : index
    %c0_67 = arith.constant 0 : index
    %73 = vector.load %arg11[%c0_64, %c0_65, %c0_66, %c0_67] : memref<4x9x9x4xbf16, #tpu.memory_space<vmem>>, vector<1x9x1x4xbf16>
    %74 = vector.shape_cast %73 : vector<1x9x1x4xbf16> to vector<9x1x4xbf16>
    %75 = vector.shape_cast %72 : vector<9x1x4xbf16> to vector<1x9x1x4xbf16>
    tpu.vector_store %arg11[%c0_64, %c0_65, %c0_66, %c0_67], %75 {strides = array<i32>} : memref<4x9x9x4xbf16, #tpu.memory_space<vmem>>, vector<1x9x1x4xbf16>,
    %cst_68 = arith.constant 0.000000e+00 : f32
    %76 = vector.broadcast %cst_68 : f32 to vector<64x4xf32>
    %c0_69 = arith.constant 0 : index
    %c0_70 = arith.constant 0 : index
    %c0_71 = arith.constant 0 : index
    %c0_72 = arith.constant 0 : index
    %77 = vector.load %arg11[%c0_69, %c0_70, %c0_71, %c0_72] : memref<4x9x9x4xbf16, #tpu.memory_space<vmem>>, vector<1x8x8x4xbf16>
    %78 = vector.shape_cast %77 : vector<1x8x8x4xbf16> to vector<8x8x4xbf16>
    %79 = vector.shape_cast %78 : vector<8x8x4xbf16> to vector<64x4xbf16>
    %c0_73 = arith.constant 0 : index
    %c0_74 = arith.constant 0 : index
    %c0_75 = arith.constant 0 : index
    %80 = vector.load %arg7[%c0_73, %c0_74, %c0_75] : memref<9x4x4xbf16, #tpu.memory_space<vmem>>, vector<1x4x4xbf16>
    %81 = vector.shape_cast %80 : vector<1x4x4xbf16> to vector<4x4xbf16>
    %cst_76 = arith.constant dense<0.000000e+00> : vector<64x4xf32>
    %82 = tpu.matmul %79, %81, %cst_76 {dimension_numbers = #tpu.dot_dimension_numbers<[1], [0], [0], [1], [0, 0, 1, 1], [], []>} : vector<64x4xbf16>, vector<4x4xbf16>, vector<64x4xf32> -> vector<64x4xf32>
    %83 = arith.addf %76, %82 : vector<64x4xf32>
    %c1_77 = arith.constant 1 : index
    %c0_78 = arith.constant 0 : index
    %c0_79 = arith.constant 0 : index
    %c0_80 = arith.constant 0 : index
    %84 = vector.load %arg11[%c1_77, %c0_78, %c0_79, %c0_80] : memref<4x9x9x4xbf16, #tpu.memory_space<vmem>>, vector<1x8x8x4xbf16>
    %85 = vector.shape_cast %84 : vector<1x8x8x4xbf16> to vector<8x8x4xbf16>
    %86 = vector.shape_cast %85 : vector<8x8x4xbf16> to vector<64x4xbf16>
    %c1_81 = arith.constant 1 : index
    %c0_82 = arith.constant 0 : index
    %c0_83 = arith.constant 0 : index
    %87 = vector.load %arg7[%c1_81, %c0_82, %c0_83] : memref<9x4x4xbf16, #tpu.memory_space<vmem>>, vector<1x4x4xbf16>
    %88 = vector.shape_cast %87 : vector<1x4x4xbf16> to vector<4x4xbf16>
    %cst_84 = arith.constant dense<0.000000e+00> : vector<64x4xf32>
    %89 = tpu.matmul %86, %88, %cst_84 {dimension_numbers = #tpu.dot_dimension_numbers<[1], [0], [0], [1], [0, 0, 1, 1], [], []>} : vector<64x4xbf16>, vector<4x4xbf16>, vector<64x4xf32> -> vector<64x4xf32>
    %90 = arith.addf %83, %89 : vector<64x4xf32>
    %c0_85 = arith.constant 0 : index
    %c0_86 = arith.constant 0 : index
    %c1_87 = arith.constant 1 : index
    %c0_88 = arith.constant 0 : index
    %91 = vector.load %arg11[%c0_85, %c0_86, %c1_87, %c0_88] : memref<4x9x9x4xbf16, #tpu.memory_space<vmem>>, vector<1x8x8x4xbf16>
    %92 = vector.shape_cast %91 : vector<1x8x8x4xbf16> to vector<8x8x4xbf16>
    %93 = vector.shape_cast %92 : vector<8x8x4xbf16> to vector<64x4xbf16>
    %c2_89 = arith.constant 2 : index
    %c0_90 = arith.constant 0 : index
    %c0_91 = arith.constant 0 : index
    %94 = vector.load %arg7[%c2_89, %c0_90, %c0_91] : memref<9x4x4xbf16, #tpu.memory_space<vmem>>, vector<1x4x4xbf16>
    %95 = vector.shape_cast %94 : vector<1x4x4xbf16> to vector<4x4xbf16>
    %cst_92 = arith.constant dense<0.000000e+00> : vector<64x4xf32>
    %96 = tpu.matmul %93, %95, %cst_92 {dimension_numbers = #tpu.dot_dimension_numbers<[1], [0], [0], [1], [0, 0, 1, 1], [], []>} : vector<64x4xbf16>, vector<4x4xbf16>, vector<64x4xf32> -> vector<64x4xf32>
    %97 = arith.addf %90, %96 : vector<64x4xf32>
    %c2_93 = arith.constant 2 : index
    %c0_94 = arith.constant 0 : index
    %c0_95 = arith.constant 0 : index
    %c0_96 = arith.constant 0 : index
    %98 = vector.load %arg11[%c2_93, %c0_94, %c0_95, %c0_96] : memref<4x9x9x4xbf16, #tpu.memory_space<vmem>>, vector<1x8x8x4xbf16>
    %99 = vector.shape_cast %98 : vector<1x8x8x4xbf16> to vector<8x8x4xbf16>
    %100 = vector.shape_cast %99 : vector<8x8x4xbf16> to vector<64x4xbf16>
    %c3_97 = arith.constant 3 : index
    %c0_98 = arith.constant 0 : index
    %c0_99 = arith.constant 0 : index
    %101 = vector.load %arg7[%c3_97, %c0_98, %c0_99] : memref<9x4x4xbf16, #tpu.memory_space<vmem>>, vector<1x4x4xbf16>
    %102 = vector.shape_cast %101 : vector<1x4x4xbf16> to vector<4x4xbf16>
    %cst_100 = arith.constant dense<0.000000e+00> : vector<64x4xf32>
    %103 = tpu.matmul %100, %102, %cst_100 {dimension_numbers = #tpu.dot_dimension_numbers<[1], [0], [0], [1], [0, 0, 1, 1], [], []>} : vector<64x4xbf16>, vector<4x4xbf16>, vector<64x4xf32> -> vector<64x4xf32>
    %104 = arith.addf %97, %103 : vector<64x4xf32>
    %c3_101 = arith.constant 3 : index
    %c0_102 = arith.constant 0 : index
    %c0_103 = arith.constant 0 : index
    %c0_104 = arith.constant 0 : index
    %105 = vector.load %arg11[%c3_101, %c0_102, %c0_103, %c0_104] : memref<4x9x9x4xbf16, #tpu.memory_space<vmem>>, vector<1x8x8x4xbf16>
    %106 = vector.shape_cast %105 : vector<1x8x8x4xbf16> to vector<8x8x4xbf16>
    %107 = vector.shape_cast %106 : vector<8x8x4xbf16> to vector<64x4xbf16>
    %c4 = arith.constant 4 : index
    %c0_105 = arith.constant 0 : index
    %c0_106 = arith.constant 0 : index
    %108 = vector.load %arg7[%c4, %c0_105, %c0_106] : memref<9x4x4xbf16, #tpu.memory_space<vmem>>, vector<1x4x4xbf16>
    %109 = vector.shape_cast %108 : vector<1x4x4xbf16> to vector<4x4xbf16>
    %cst_107 = arith.constant dense<0.000000e+00> : vector<64x4xf32>
    %110 = tpu.matmul %107, %109, %cst_107 {dimension_numbers = #tpu.dot_dimension_numbers<[1], [0], [0], [1], [0, 0, 1, 1], [], []>} : vector<64x4xbf16>, vector<4x4xbf16>, vector<64x4xf32> -> vector<64x4xf32>
    %111 = arith.addf %104, %110 : vector<64x4xf32>
    %c2_108 = arith.constant 2 : index
    %c0_109 = arith.constant 0 : index
    %c1_110 = arith.constant 1 : index
    %c0_111 = arith.constant 0 : index
    %112 = vector.load %arg11[%c2_108, %c0_109, %c1_110, %c0_111] : memref<4x9x9x4xbf16, #tpu.memory_space<vmem>>, vector<1x8x8x4xbf16>
    %113 = vector.shape_cast %112 : vector<1x8x8x4xbf16> to vector<8x8x4xbf16>
    %114 = vector.shape_cast %113 : vector<8x8x4xbf16> to vector<64x4xbf16>
    %c5 = arith.constant 5 : index
    %c0_112 = arith.constant 0 : index
    %c0_113 = arith.constant 0 : index
    %115 = vector.load %arg7[%c5, %c0_112, %c0_113] : memref<9x4x4xbf16, #tpu.memory_space<vmem>>, vector<1x4x4xbf16>
    %116 = vector.shape_cast %115 : vector<1x4x4xbf16> to vector<4x4xbf16>
    %cst_114 = arith.constant dense<0.000000e+00> : vector<64x4xf32>
    %117 = tpu.matmul %114, %116, %cst_114 {dimension_numbers = #tpu.dot_dimension_numbers<[1], [0], [0], [1], [0, 0, 1, 1], [], []>} : vector<64x4xbf16>, vector<4x4xbf16>, vector<64x4xf32> -> vector<64x4xf32>
    %118 = arith.addf %111, %117 : vector<64x4xf32>
    %c0_115 = arith.constant 0 : index
    %c1_116 = arith.constant 1 : index
    %c0_117 = arith.constant 0 : index
    %c0_118 = arith.constant 0 : index
    %119 = vector.load %arg11[%c0_115, %c1_116, %c0_117, %c0_118] : memref<4x9x9x4xbf16, #tpu.memory_space<vmem>>, vector<1x8x8x4xbf16>
    %120 = vector.shape_cast %119 : vector<1x8x8x4xbf16> to vector<8x8x4xbf16>
    %121 = vector.shape_cast %120 : vector<8x8x4xbf16> to vector<64x4xbf16>
    %c6 = arith.constant 6 : index
    %c0_119 = arith.constant 0 : index
    %c0_120 = arith.constant 0 : index
    %122 = vector.load %arg7[%c6, %c0_119, %c0_120] : memref<9x4x4xbf16, #tpu.memory_space<vmem>>, vector<1x4x4xbf16>
    %123 = vector.shape_cast %122 : vector<1x4x4xbf16> to vector<4x4xbf16>
    %cst_121 = arith.constant dense<0.000000e+00> : vector<64x4xf32>
    %124 = tpu.matmul %121, %123, %cst_121 {dimension_numbers = #tpu.dot_dimension_numbers<[1], [0], [0], [1], [0, 0, 1, 1], [], []>} : vector<64x4xbf16>, vector<4x4xbf16>, vector<64x4xf32> -> vector<64x4xf32>
    %125 = arith.addf %118, %124 : vector<64x4xf32>
    %c1_122 = arith.constant 1 : index
    %c1_123 = arith.constant 1 : index
    %c0_124 = arith.constant 0 : index
    %c0_125 = arith.constant 0 : index
    %126 = vector.load %arg11[%c1_122, %c1_123, %c0_124, %c0_125] : memref<4x9x9x4xbf16, #tpu.memory_space<vmem>>, vector<1x8x8x4xbf16>
    %127 = vector.shape_cast %126 : vector<1x8x8x4xbf16> to vector<8x8x4xbf16>
    %128 = vector.shape_cast %127 : vector<8x8x4xbf16> to vector<64x4xbf16>
    %c7 = arith.constant 7 : index
    %c0_126 = arith.constant 0 : index
    %c0_127 = arith.constant 0 : index
    %129 = vector.load %arg7[%c7, %c0_126, %c0_127] : memref<9x4x4xbf16, #tpu.memory_space<vmem>>, vector<1x4x4xbf16>
    %130 = vector.shape_cast %129 : vector<1x4x4xbf16> to vector<4x4xbf16>
    %cst_128 = arith.constant dense<0.000000e+00> : vector<64x4xf32>
    %131 = tpu.matmul %128, %130, %cst_128 {dimension_numbers = #tpu.dot_dimension_numbers<[1], [0], [0], [1], [0, 0, 1, 1], [], []>} : vector<64x4xbf16>, vector<4x4xbf16>, vector<64x4xf32> -> vector<64x4xf32>
    %132 = arith.addf %125, %131 : vector<64x4xf32>
    %c0_129 = arith.constant 0 : index
    %c1_130 = arith.constant 1 : index
    %c1_131 = arith.constant 1 : index
    %c0_132 = arith.constant 0 : index
    %133 = vector.load %arg11[%c0_129, %c1_130, %c1_131, %c0_132] : memref<4x9x9x4xbf16, #tpu.memory_space<vmem>>, vector<1x8x8x4xbf16>
    %134 = vector.shape_cast %133 : vector<1x8x8x4xbf16> to vector<8x8x4xbf16>
    %135 = vector.shape_cast %134 : vector<8x8x4xbf16> to vector<64x4xbf16>
    %c8_133 = arith.constant 8 : index
    %c0_134 = arith.constant 0 : index
    %c0_135 = arith.constant 0 : index
    %136 = vector.load %arg7[%c8_133, %c0_134, %c0_135] : memref<9x4x4xbf16, #tpu.memory_space<vmem>>, vector<1x4x4xbf16>
    %137 = vector.shape_cast %136 : vector<1x4x4xbf16> to vector<4x4xbf16>
    %cst_136 = arith.constant dense<0.000000e+00> : vector<64x4xf32>
    %138 = tpu.matmul %135, %137, %cst_136 {dimension_numbers = #tpu.dot_dimension_numbers<[1], [0], [0], [1], [0, 0, 1, 1], [], []>} : vector<64x4xbf16>, vector<4x4xbf16>, vector<64x4xf32> -> vector<64x4xf32>
    %139 = arith.addf %132, %138 : vector<64x4xf32>
    %c0_137 = arith.constant 0 : index
    %c0_138 = arith.constant 0 : index
    %140 = vector.load %arg5[%c0_137, %c0_138] : memref<1x4xf32, #tpu.memory_space<vmem>>, vector<1x4xf32>
    %141 = vector.broadcast %140 : vector<1x4xf32> to vector<64x4xf32>
    %142 = arith.addf %139, %141 : vector<64x4xf32>
    %cst_139 = arith.constant 0.000000e+00 : f32
    %143 = vector.broadcast %cst_139 : f32 to vector<64x4xf32>
    %144 = arith.maximumf %142, %143 : vector<64x4xf32>
    %145 = arith.truncf %144 : vector<64x4xf32> to vector<64x4xbf16>
    %c0_140 = arith.constant 0 : index
    %c0_141 = arith.constant 0 : index
    %146 = vector.load %arg8[%c0_140, %c0_141] : memref<4x16xbf16, #tpu.memory_space<vmem>>, vector<4x16xbf16>
    %cst_142 = arith.constant dense<0.000000e+00> : vector<64x16xf32>
    %147 = tpu.matmul %145, %146, %cst_142 {dimension_numbers = #tpu.dot_dimension_numbers<[1], [0], [0], [1], [0, 0, 1, 1], [], []>} : vector<64x4xbf16>, vector<4x16xbf16>, vector<64x16xf32> -> vector<64x16xf32>
    %148 = arith.addf %147, %23 : vector<64x16xf32>
    %c0_143 = arith.constant 0 : index
    %c0_144 = arith.constant 0 : index
    %c0_145 = arith.constant 0 : index
    %149 = vector.load %arg10[%c0_143, %c0_144, %c0_145] : memref<1x64x16xf32, #tpu.memory_space<vmem>>, vector<1x64x16xf32>
    %150 = vector.shape_cast %149 : vector<1x64x16xf32> to vector<64x16xf32>
    %151 = vector.shape_cast %148 : vector<64x16xf32> to vector<1x64x16xf32>
    tpu.vector_store %arg10[%c0_143, %c0_144, %c0_145], %151 {strides = array<i32>} : memref<1x64x16xf32, #tpu.memory_space<vmem>>, vector<1x64x16xf32>,
    return
  }
  func.func @transform_0(%arg0: i32) -> (i32, i32, i32, i32) {
    %c0_i32 = arith.constant 0 : i32
    %c0_i32_0 = arith.constant 0 : i32
    %c0_i32_1 = arith.constant 0 : i32
    %c0_i32_2 = arith.constant 0 : i32
    return %arg0, %c0_i32, %c0_i32_0, %c0_i32_1 : i32, i32, i32, i32
  }
  func.func @transform_1(%arg0: i32) -> (i32, i32) {
    %c0_i32 = arith.constant 0 : i32
    %c0_i32_0 = arith.constant 0 : i32
    %c0_i32_1 = arith.constant 0 : i32
    return %c0_i32, %c0_i32_0 : i32, i32
  }
  func.func @transform_2(%arg0: i32) -> (i32, i32) {
    %c0_i32 = arith.constant 0 : i32
    %c0_i32_0 = arith.constant 0 : i32
    %c0_i32_1 = arith.constant 0 : i32
    return %c0_i32, %c0_i32_0 : i32, i32
  }
  func.func @transform_3(%arg0: i32) -> (i32, i32) {
    %c0_i32 = arith.constant 0 : i32
    %c0_i32_0 = arith.constant 0 : i32
    %c0_i32_1 = arith.constant 0 : i32
    return %c0_i32, %c0_i32_0 : i32, i32
  }
  func.func @transform_4(%arg0: i32) -> (i32, i32) {
    %c0_i32 = arith.constant 0 : i32
    %c0_i32_0 = arith.constant 0 : i32
    %c0_i32_1 = arith.constant 0 : i32
    return %c0_i32, %c0_i32_0 : i32, i32
  }
  func.func @transform_5(%arg0: i32) -> (i32, i32) {
    %c0_i32 = arith.constant 0 : i32
    %c0_i32_0 = arith.constant 0 : i32
    %c0_i32_1 = arith.constant 0 : i32
    return %c0_i32, %c0_i32_0 : i32, i32
  }
  func.func @transform_6(%arg0: i32) -> (i32, i32, i32) {
    %c0_i32 = arith.constant 0 : i32
    %c0_i32_0 = arith.constant 0 : i32
    %c0_i32_1 = arith.constant 0 : i32
    %c0_i32_2 = arith.constant 0 : i32
    return %c0_i32, %c0_i32_0, %c0_i32_1 : i32, i32, i32
  }
  func.func @transform_7(%arg0: i32) -> (i32, i32) {
    %c0_i32 = arith.constant 0 : i32
    %c0_i32_0 = arith.constant 0 : i32
    %c0_i32_1 = arith.constant 0 : i32
    return %c0_i32, %c0_i32_0 : i32, i32
  }
  func.func @transform_8(%arg0: i32) -> (i32, i32) {
    %c0_i32 = arith.constant 0 : i32
    %c0_i32_0 = arith.constant 0 : i32
    %c0_i32_1 = arith.constant 0 : i32
    return %c0_i32, %c0_i32_0 : i32, i32
  }
  func.func @transform_9(%arg0: i32) -> (i32, i32, i32) {
    %c0_i32 = arith.constant 0 : i32
    %c0_i32_0 = arith.constant 0 : i32
    %c0_i32_1 = arith.constant 0 : i32
    return %arg0, %c0_i32, %c0_i32_0 : i32, i32, i32
  }
}

</mosaic_0001>

<llo_original>
// kernel: tpu_custom_call.1
$region0: #{tpu_custom_call.1}
  #allocation0 [shape = 'u32[]', space=smem, size = 0x4, offset = 0x4, fixed_abs, tag = 'smem constant byte address 0x4 - core index']
  #allocation1 [shape = 'u32[144,128]{1,0:T(1,128)}', space=vmem, size = 0x12000, scoped, tag = 'internal scratch']
  #allocation2 [shape = 'bf16[4,9,9,4]{3,2,1,0:T(8,128)(2,1)}', space=vmem, size = 0x24000, scoped, tag = 'scratch operand']
  %s0 = inlined_call_operand.vmem [shape: bf16[2,4,64,8], index: 0, kind: input, shape index: {}]
  %s1 = inlined_call_operand.vmem [shape: f32[1,8], index: 1, kind: input, shape index: {}]
  %s2 = inlined_call_operand.vmem [shape: f32[1,8], index: 2, kind: input, shape index: {}]
  %s3 = inlined_call_operand.vmem [shape: f32[1,4], index: 3, kind: input, shape index: {}]
  %s4 = inlined_call_operand.vmem [shape: f32[1,4], index: 4, kind: input, shape index: {}]
  %s5 = inlined_call_operand.vmem [shape: bf16[8,4], index: 5, kind: input, shape index: {}]
  %s6 = inlined_call_operand.vmem [shape: bf16[9,4,4], index: 6, kind: input, shape index: {}]
  %s7 = inlined_call_operand.vmem [shape: bf16[4,16], index: 7, kind: input, shape index: {}]
  %s8 = inlined_call_operand.vmem [shape: bf16[8,16], index: 8, kind: input, shape index: {}]
  %s9 = inlined_call_operand.vmem [shape: f32[2,64,16], index: 9, kind: output, shape index: {}]
  %s10 = sld [smem:[#allocation0]]
  $region69: #{tpu_custom_call.1} parent=0
    _
  %s12 = ssub.s32 1, %s10
  %s13 = scalar_select 0, %s12, %s10
  loop: start=0, step=1, limit=4
  $region2: #{tpu_custom_call.1} parent=0 // loop_pre_header
    _
  $region3: #{tpu_custom_call.1} parent=0 // loop_header
    %s15 = sphi 0, %s19
    %p16 = scmp.ge.s32.totalorder %s15, 4
    %s25 = sphi 0, %s27
    %s28 = sphi 0, %s25
    %s29 = sphi 0, %s28
    %s45 = sphi 0, %s29
    %s49 = sphi 0, %s49
    %s51 = sphi 0, %s49
    %s52 = sphi 0, %s51
    %s66 = sphi 0, %s52
    %s70 = sphi 0, %s70
    %s72 = sphi 0, %s70
    %s73 = sphi 0, %s72
    %s87 = sphi 0, %s73
    %s91 = sphi 0, %s91
    %s93 = sphi 0, %s91
    %s94 = sphi 0, %s93
    %s108 = sphi 0, %s94
    %s112 = sphi 0, %s112
    %s114 = sphi 0, %s112
    %s115 = sphi 0, %s114
    %s129 = sphi 0, %s115
    %s133 = sphi 0, %s133
    %s135 = sphi 0, %s133
    %s136 = sphi 0, %s135
    %s150 = sphi 0, %s136
    %s154 = sphi 0, %s154
    %s156 = sphi 0, %s154
    %s157 = sphi 0, %s156
    %s171 = sphi 0, %s157
    %s175 = sphi 0, %s175
    %s177 = sphi 0, %s175
    %s178 = sphi 0, %s177
    %s192 = sphi 0, %s178
    %s196 = sphi 0, %s196
    %s198 = sphi 0, %s196
    %s199 = sphi 0, %s198
    %s213 = sphi 0, %s199
    %s219 = sphi 0, %s221
    %s222 = sphi 0, %s219
    %s223 = sphi 0, %s222
    %s239 = sphi 0, %s223
  $region4: #{tpu_custom_call.1} parent=0 // loop_header_branch
    %18 = sbr.rel (%p16) target = $region8
  $region5: #{tpu_custom_call.1} parent=0 // loop_body
    %s20 = ssub.s32 %s15, 1
    %s21 = ssub.s32 %s15, 2
    %s22 = sadd.s32 %s15, 1
    %s23 = ssub.s32 %s15, %s22
    %p24 = scmp.eq.s32.totalorder %s23, 0
    %s26 = sadd.s32 %s25, 1
    %s27 = scalar_select %p24, %s25, %s26
    %p30 = pneg %p24
    %p31 = scmp.eq.s32.totalorder %s15, 1
    %p32 = por %p30, %p31
    %p33 = scmp.ne.s32.totalorder %s25, %s28
    %p34 = scmp.eq.s32.totalorder %s15, 0
    %p35 = por %p33, %p34
    %p36 = scmp.ne.s32.totalorder %s25, %s28
    %p37 = scmp.eq.s32.totalorder %s20, 1
    %p38 = por %p36, %p37
    %p39 = scmp.ne.s32.totalorder %s28, %s29
    %p40 = scmp.eq.s32.totalorder %s20, 0
    %p41 = por %p39, %p40
    %p42 = scmp.ne.s32.totalorder %s28, %s29
    %p43 = scmp.eq.s32.totalorder %s21, 1
    %p44 = por %p42, %p43
    %p46 = scmp.ne.s32.totalorder %s29, %s45
    %p47 = scmp.eq.s32.totalorder %s21, 0
    %p48 = por %p46, %p47
    %s50 = sadd.s32 %s49, 1
    %p53 = scmp.eq.s32.totalorder %s15, 1
    %p54 = scmp.ne.s32.totalorder %s49, %s51
    %p55 = scmp.eq.s32.totalorder %s15, 0
    %p56 = por %p54, %p55
    %p57 = scmp.ne.s32.totalorder %s49, %s51
    %p58 = scmp.eq.s32.totalorder %s20, 1
    %p59 = por %p57, %p58
    %p60 = scmp.ne.s32.totalorder %s51, %s52
    %p61 = scmp.eq.s32.totalorder %s20, 0
    %p62 = por %p60, %p61
    %p63 = scmp.ne.s32.totalorder %s51, %s52
    %p64 = scmp.eq.s32.totalorder %s21, 1
    %p65 = por %p63, %p64
    %p67 = scmp.ne.s32.totalorder %s52, %s66
    %p68 = scmp.eq.s32.totalorder %s21, 0
    %p69 = por %p67, %p68
    %s71 = sadd.s32 %s70, 1
    %p74 = scmp.eq.s32.totalorder %s15, 1
    %p75 = scmp.ne.s32.totalorder %s70, %s72
    %p76 = scmp.eq.s32.totalorder %s15, 0
    %p77 = por %p75, %p76
    %p78 = scmp.ne.s32.totalorder %s70, %s72
    %p79 = scmp.eq.s32.totalorder %s20, 1
    %p80 = por %p78, %p79
    %p81 = scmp.ne.s32.totalorder %s72, %s73
    %p82 = scmp.eq.s32.totalorder %s20, 0
    %p83 = por %p81, %p82
    %p84 = scmp.ne.s32.totalorder %s72, %s73
    %p85 = scmp.eq.s32.totalorder %s21, 1
    %p86 = por %p84, %p85
    %p88 = scmp.ne.s32.totalorder %s73, %s87
    %p89 = scmp.eq.s32.totalorder %s21, 0
    %p90 = por %p88, %p89
    %s92 = sadd.s32 %s91, 1
    %p95 = scmp.eq.s32.totalorder %s15, 1
    %p96 = scmp.ne.s32.totalorder %s91, %s93
    %p97 = scmp.eq.s32.totalorder %s15, 0
    %p98 = por %p96, %p97
    %p99 = scmp.ne.s32.totalorder %s91, %s93
    %p100 = scmp.eq.s32.totalorder %s20, 1
    %p101 = por %p99, %p100
    %p102 = scmp.ne.s32.totalorder %s93, %s94
    %p103 = scmp.eq.s32.totalorder %s20, 0
    %p104 = por %p102, %p103
    %p105 = scmp.ne.s32.totalorder %s93, %s94
    %p106 = scmp.eq.s32.totalorder %s21, 1
    %p107 = por %p105, %p106
    %p109 = scmp.ne.s32.totalorder %s94, %s108
    %p110 = scmp.eq.s32.totalorder %s21, 0
    %p111 = por %p109, %p110
    %s113 = sadd.s32 %s112, 1
    %p116 = scmp.eq.s32.totalorder %s15, 1
    %p117 = scmp.ne.s32.totalorder %s112, %s114
    %p118 = scmp.eq.s32.totalorder %s15, 0
    %p119 = por %p117, %p118
    %p120 = scmp.ne.s32.totalorder %s112, %s114
    %p121 = scmp.eq.s32.totalorder %s20, 1
    %p122 = por %p120, %p121
    %p123 = scmp.ne.s32.totalorder %s114, %s115
    %p124 = scmp.eq.s32.totalorder %s20, 0
    %p125 = por %p123, %p124
    %p126 = scmp.ne.s32.totalorder %s114, %s115
    %p127 = scmp.eq.s32.totalorder %s21, 1
    %p128 = por %p126, %p127
    %p130 = scmp.ne.s32.totalorder %s115, %s129
    %p131 = scmp.eq.s32.totalorder %s21, 0
    %p132 = por %p130, %p131
    %s134 = sadd.s32 %s133, 1
    %p137 = scmp.eq.s32.totalorder %s15, 1
    %p138 = scmp.ne.s32.totalorder %s133, %s135
    %p139 = scmp.eq.s32.totalorder %s15, 0
    %p140 = por %p138, %p139
    %p141 = scmp.ne.s32.totalorder %s133, %s135
    %p142 = scmp.eq.s32.totalorder %s20, 1
    %p143 = por %p141, %p142
    %p144 = scmp.ne.s32.totalorder %s135, %s136
    %p145 = scmp.eq.s32.totalorder %s20, 0
    %p146 = por %p144, %p145
    %p147 = scmp.ne.s32.totalorder %s135, %s136
    %p148 = scmp.eq.s32.totalorder %s21, 1
    %p149 = por %p147, %p148
    %p151 = scmp.ne.s32.totalorder %s136, %s150
    %p152 = scmp.eq.s32.totalorder %s21, 0
    %p153 = por %p151, %p152
    %s155 = sadd.s32 %s154, 1
    %p158 = scmp.eq.s32.totalorder %s15, 1
    %p159 = scmp.ne.s32.totalorder %s154, %s156
    %p160 = scmp.eq.s32.totalorder %s15, 0
    %p161 = por %p159, %p160
    %p162 = scmp.ne.s32.totalorder %s154, %s156
    %p163 = scmp.eq.s32.totalorder %s20, 1
    %p164 = por %p162, %p163
    %p165 = scmp.ne.s32.totalorder %s156, %s157
    %p166 = scmp.eq.s32.totalorder %s20, 0
    %p167 = por %p165, %p166
    %p168 = scmp.ne.s32.totalorder %s156, %s157
    %p169 = scmp.eq.s32.totalorder %s21, 1
    %p170 = por %p168, %p169
    %p172 = scmp.ne.s32.totalorder %s157, %s171
    %p173 = scmp.eq.s32.totalorder %s21, 0
    %p174 = por %p172, %p173
    %s176 = sadd.s32 %s175, 1
    %p179 = scmp.eq.s32.totalorder %s15, 1
    %p180 = scmp.ne.s32.totalorder %s175, %s177
    %p181 = scmp.eq.s32.totalorder %s15, 0
    %p182 = por %p180, %p181
    %p183 = scmp.ne.s32.totalorder %s175, %s177
    %p184 = scmp.eq.s32.totalorder %s20, 1
    %p185 = por %p183, %p184
    %p186 = scmp.ne.s32.totalorder %s177, %s178
    %p187 = scmp.eq.s32.totalorder %s20, 0
    %p188 = por %p186, %p187
    %p189 = scmp.ne.s32.totalorder %s177, %s178
    %p190 = scmp.eq.s32.totalorder %s21, 1
    %p191 = por %p189, %p190
    %p193 = scmp.ne.s32.totalorder %s178, %s192
    %p194 = scmp.eq.s32.totalorder %s21, 0
    %p195 = por %p193, %p194
    %s197 = sadd.s32 %s196, 1
    %p200 = scmp.eq.s32.totalorder %s15, 1
    %p201 = scmp.ne.s32.totalorder %s196, %s198
    %p202 = scmp.eq.s32.totalorder %s15, 0
    %p203 = por %p201, %p202
    %p204 = scmp.ne.s32.totalorder %s196, %s198
    %p205 = scmp.eq.s32.totalorder %s20, 1
    %p206 = por %p204, %p205
    %p207 = scmp.ne.s32.totalorder %s198, %s199
    %p208 = scmp.eq.s32.totalorder %s20, 0
    %p209 = por %p207, %p208
    %p210 = scmp.ne.s32.totalorder %s198, %s199
    %p211 = scmp.eq.s32.totalorder %s21, 1
    %p212 = por %p210, %p211
    %p214 = scmp.ne.s32.totalorder %s199, %s213
    %p215 = scmp.eq.s32.totalorder %s21, 0
    %p216 = por %p214, %p215
    %s217 = ssub.s32 %s15, %s22
    %p218 = scmp.eq.s32.totalorder %s217, 0
    %s220 = sadd.s32 %s219, 1
    %s221 = scalar_select %p218, %s219, %s220
    %p224 = pneg %p218
    %p225 = scmp.eq.s32.totalorder %s15, 1
    %p226 = por %p224, %p225
    %p227 = scmp.ne.s32.totalorder %s219, %s222
    %p228 = scmp.eq.s32.totalorder %s15, 0
    %p229 = por %p227, %p228
    %p230 = scmp.ne.s32.totalorder %s219, %s222
    %p231 = scmp.eq.s32.totalorder %s20, 1
    %p232 = por %p230, %p231
    %p233 = scmp.ne.s32.totalorder %s222, %s223
    %p234 = scmp.eq.s32.totalorder %s20, 0
    %p235 = por %p233, %p234
    %p236 = scmp.ne.s32.totalorder %s222, %s223
    %p237 = scmp.eq.s32.totalorder %s21, 1
    %p238 = por %p236, %p237
    %p240 = scmp.ne.s32.totalorder %s223, %s239
    %p241 = scmp.eq.s32.totalorder %s21, 0
    %p242 = por %p240, %p241
    %p243 = scmp.le.s32.totalorder 1, %s15
    %p244 = scmp.lt.s32.totalorder %s15, 3
    %p245 = pnand %p243, %p244
    %p246 = pneg %p245
    // Predicated region
    $region9: #{tpu_custom_call.1} parent=5 // pred_check
      _
    $region10: #{tpu_custom_call.1} parent=5 // pred_check_branch
      %248 = sbr.rel (%p245) target = $region12
    $region11: #{tpu_custom_call.1} parent=5 // pred_region
      %s249 = ssub.s32 %s15, 1
      // Predicated region
      $region13: #{tpu_custom_call.1} parent=11 // pred_check
        %p250 = pneg %p62
      $region14: #{tpu_custom_call.1} parent=11 // pred_check_branch
        %252 = sbr.rel (%p250) target = $region16
      $region15: #{tpu_custom_call.1} parent=11 // pred_region
        _
      $region16: #{tpu_custom_call.1} parent=11 // pred_fallthru
        _
      // Predicated region
      $region17: #{tpu_custom_call.1} parent=11 // pred_check
        %p253 = pneg %p83
      $region18: #{tpu_custom_call.1} parent=11 // pred_check_branch
        %255 = sbr.rel (%p253) target = $region20
      $region19: #{tpu_custom_call.1} parent=11 // pred_region
        _
      $region20: #{tpu_custom_call.1} parent=11 // pred_fallthru
        _
      // Predicated region
      $region21: #{tpu_custom_call.1} parent=11 // pred_check
        %p256 = pneg %p104
      $region22: #{tpu_custom_call.1} parent=11 // pred_check_branch
        %258 = sbr.rel (%p256) target = $region24
      $region23: #{tpu_custom_call.1} parent=11 // pred_region
        _
      $region24: #{tpu_custom_call.1} parent=11 // pred_fallthru
        _
      // Predicated region
      $region25: #{tpu_custom_call.1} parent=11 // pred_check
        %p259 = pneg %p125
      $region26: #{tpu_custom_call.1} parent=11 // pred_check_branch
        %261 = sbr.rel (%p259) target = $region28
      $region27: #{tpu_custom_call.1} parent=11 // pred_region
        _
      $region28: #{tpu_custom_call.1} parent=11 // pred_fallthru
        _
      // Predicated region
      $region29: #{tpu_custom_call.1} parent=11 // pred_check
        %p262 = pneg %p146
      $region30: #{tpu_custom_call.1} parent=11 // pred_check_branch
        %264 = sbr.rel (%p262) target = $region32
      $region31: #{tpu_custom_call.1} parent=11 // pred_region
        _
      $region32: #{tpu_custom_call.1} parent=11 // pred_fallthru
        _
      // Predicated region
      $region33: #{tpu_custom_call.1} parent=11 // pred_check
        %p265 = pneg %p167
      $region34: #{tpu_custom_call.1} parent=11 // pred_check_branch
        %267 = sbr.rel (%p265) target = $region36
      $region35: #{tpu_custom_call.1} parent=11 // pred_region
        _
      $region36: #{tpu_custom_call.1} parent=11 // pred_fallthru
        _
      // Predicated region
      $region37: #{tpu_custom_call.1} parent=11 // pred_check
        %p268 = pneg %p188
      $region38: #{tpu_custom_call.1} parent=11 // pred_check_branch
        %270 = sbr.rel (%p268) target = $region40
      $region39: #{tpu_custom_call.1} parent=11 // pred_region
        _
      $region40: #{tpu_custom_call.1} parent=11 // pred_fallthru
        _
      // Predicated region
      $region41: #{tpu_custom_call.1} parent=11 // pred_check
        %p271 = pneg %p209
      $region42: #{tpu_custom_call.1} parent=11 // pred_check_branch
        %273 = sbr.rel (%p271) target = $region44
      $region43: #{tpu_custom_call.1} parent=11 // pred_region
        _
      $region44: #{tpu_custom_call.1} parent=11 // pred_fallthru
        _
    $region12: #{tpu_custom_call.1} parent=5 // pred_fallthru
      _
    %p274 = scmp.lt.s32.totalorder %s15, 2
    // Predicated region
    $region45: #{tpu_custom_call.1} parent=5 // pred_check
      %p275 = pneg %p274
    $region46: #{tpu_custom_call.1} parent=5 // pred_check_branch
      %277 = sbr.rel (%p275) target = $region48
    $region47: #{tpu_custom_call.1} parent=5 // pred_region
      // Predicated region
      $region49: #{tpu_custom_call.1} parent=47 // pred_check
        %p278 = pneg %p35
      $region50: #{tpu_custom_call.1} parent=47 // pred_check_branch
        %280 = sbr.rel (%p278) target = $region52
      $region51: #{tpu_custom_call.1} parent=47 // pred_region
        %p281 = scmp.lt.s32.totalorder %s15, 1
        %s282 = scalar_select %p281, %s15, 1
        %s283 = smul.addr %s282, 32
        %s284 = smul.addr %s283, 4
        %s285 = scalar_lea.vmem %s0, %s284
      $region52: #{tpu_custom_call.1} parent=47 // pred_fallthru
        _
    $region48: #{tpu_custom_call.1} parent=5 // pred_fallthru
      _
    %p286 = scmp.le.s32.totalorder 1, %s15
    %p287 = scmp.lt.s32.totalorder %s15, 3
    %p288 = pnand %p286, %p287
    %p289 = pneg %p288
    // Predicated region
    $region53: #{tpu_custom_call.1} parent=5 // pred_check
      _
    $region54: #{tpu_custom_call.1} parent=5 // pred_check_branch
      %291 = sbr.rel (%p288) target = $region56
    $region55: #{tpu_custom_call.1} parent=5 // pred_region
      %s292 = ssub.s32 %s15, 1
      %p293 = scmp.lt.s32.totalorder %s20, 1
      %s294 = scalar_select %p293, %s20, 1
      %s295 = smul.addr %s294, 32
      %s296 = smul.addr %s295, 4
      %s297 = scalar_lea.vmem %s0, %s296
      %p298 = pneg %p41
      %p299 = pneg %p38
      %p300 = pneg %p62
      %p301 = pneg %p59
      %p302 = pneg %p83
      %p303 = pneg %p80
      %p304 = pneg %p104
      %p305 = pneg %p101
      %p306 = pneg %p125
      %p307 = pneg %p122
      %p308 = pneg %p146
      %p309 = pneg %p143
      %p310 = pneg %p167
      %p311 = pneg %p164
      %p312 = pneg %p188
      %p313 = pneg %p185
      %p314 = pneg %p209
      %p315 = pneg %p206
      %p316 = pneg %p235
      %p317 = pneg %p232
      %p318 = scmp.lt.s32.totalorder %s20, 1
      %s319 = scalar_select %p318, %s20, 1
      %s320 = smul.addr %s319, 8
      %s321 = smul.addr %s320, 8
      %s322 = scalar_lea.vmem %s9, %s321
      %p323 = scmp.lt.s32.totalorder %s20, 1
      %s324 = scalar_select %p323, %s20, 1
      %s325 = smul.addr %s324, 32
      %s326 = smul.addr %s325, 4
      %s327 = scalar_lea.vmem %s0, %s326
      %p328 = scmp.lt.s32.totalorder %s20, 1
      %s329 = scalar_select %p328, %s20, 1
      %s330 = smul.addr %s329, 8
      %s331 = smul.addr %s330, 8
      %s332 = scalar_lea.vmem %s9, %s331
      %v334 = vld [vmem:[%s327] sm:$0xf]
      %v335 = vld [vmem:[%s327 + $0x4] sm:$0xf]
      %v336 = vld [vmem:[%s327 + $0x8] sm:$0xf]
      %v337 = vld [vmem:[%s327 + $0xc] sm:$0xf]
      %v338 = vld [vmem:[%s327 + $0x10] sm:$0xf]
      %v339 = vld [vmem:[%s327 + $0x14] sm:$0xf]
      %v340 = vld [vmem:[%s327 + $0x18] sm:$0xf]
      %v341 = vld [vmem:[%s327 + $0x1c] sm:$0xf]
      %v342 = vld [vmem:[%s327 + $0x20] sm:$0xf]
      %v343 = vld [vmem:[%s327 + $0x24] sm:$0xf]
      %v344 = vld [vmem:[%s327 + $0x28] sm:$0xf]
      %v345 = vld [vmem:[%s327 + $0x2c] sm:$0xf]
      %v346 = vld [vmem:[%s327 + $0x30] sm:$0xf]
      %v347 = vld [vmem:[%s327 + $0x34] sm:$0xf]
      %v348 = vld [vmem:[%s327 + $0x38] sm:$0xf]
      %v349 = vld [vmem:[%s327 + $0x3c] sm:$0xf]
      %v350 = vld [vmem:[%s327 + $0x40] sm:$0xf]
      %v351 = vld [vmem:[%s327 + $0x44] sm:$0xf]
      %v352 = vld [vmem:[%s327 + $0x48] sm:$0xf]
      %v353 = vld [vmem:[%s327 + $0x4c] sm:$0xf]
      %v354 = vld [vmem:[%s327 + $0x50] sm:$0xf]
      %v355 = vld [vmem:[%s327 + $0x54] sm:$0xf]
      %v356 = vld [vmem:[%s327 + $0x58] sm:$0xf]
      %v357 = vld [vmem:[%s327 + $0x5c] sm:$0xf]
      %v358 = vld [vmem:[%s327 + $0x60] sm:$0xf]
      %v359 = vld [vmem:[%s327 + $0x64] sm:$0xf]
      %v360 = vld [vmem:[%s327 + $0x68] sm:$0xf]
      %v361 = vld [vmem:[%s327 + $0x6c] sm:$0xf]
      %v362 = vld [vmem:[%s327 + $0x70] sm:$0xf]
      %v363 = vld [vmem:[%s327 + $0x74] sm:$0xf]
      %v364 = vld [vmem:[%s327 + $0x78] sm:$0xf]
      %v365 = vld [vmem:[%s327 + $0x7c] sm:$0xf]
      %v366 = vunpack.c.l.bf16 %v334
      %v367 = vunpack.c.l.bf16 %v335
      %v368 = vunpack.c.l.bf16 %v336
      %v369 = vunpack.c.l.bf16 %v337
      %v370 = vunpack.c.l.bf16 %v338
      %v371 = vunpack.c.l.bf16 %v339
      %v372 = vunpack.c.l.bf16 %v340
      %v373 = vunpack.c.l.bf16 %v341
      %v374 = vunpack.c.l.bf16 %v342
      %v375 = vunpack.c.l.bf16 %v343
      %v376 = vunpack.c.l.bf16 %v344
      %v377 = vunpack.c.l.bf16 %v345
      %v378 = vunpack.c.l.bf16 %v346
      %v379 = vunpack.c.l.bf16 %v347
      %v380 = vunpack.c.l.bf16 %v348
      %v381 = vunpack.c.l.bf16 %v349
      %v382 = vunpack.c.l.bf16 %v350
      %v383 = vunpack.c.l.bf16 %v351
      %v384 = vunpack.c.l.bf16 %v352
      %v385 = vunpack.c.l.bf16 %v353
      %v386 = vunpack.c.l.bf16 %v354
      %v387 = vunpack.c.l.bf16 %v355
      %v388 = vunpack.c.l.bf16 %v356
      %v389 = vunpack.c.l.bf16 %v357
      %v390 = vunpack.c.l.bf16 %v358
      %v391 = vunpack.c.l.bf16 %v359
      %v392 = vunpack.c.l.bf16 %v360
      %v393 = vunpack.c.l.bf16 %v361
      %v394 = vunpack.c.l.bf16 %v362
      %v395 = vunpack.c.l.bf16 %v363
      %v396 = vunpack.c.l.bf16 %v364
      %v397 = vunpack.c.l.bf16 %v365
      %v398 = vld [vmem:[%s1] sm:$0x1]
      %v400 = vlaneseq
      %v401 = vshrl.u32 %v400, 7
      %v402 = vsub.s32 0, %v401
      %v403 = vrot.slane %v398, %v402
      %v405 = vmul.f32 %v366, %v403
      %v406 = vmul.f32 %v367, %v403
      %v407 = vmul.f32 %v368, %v403
      %v408 = vmul.f32 %v369, %v403
      %v409 = vmul.f32 %v370, %v403
      %v410 = vmul.f32 %v371, %v403
      %v411 = vmul.f32 %v372, %v403
      %v412 = vmul.f32 %v373, %v403
      %v413 = vmul.f32 %v374, %v403
      %v414 = vmul.f32 %v375, %v403
      %v415 = vmul.f32 %v376, %v403
      %v416 = vmul.f32 %v377, %v403
      %v417 = vmul.f32 %v378, %v403
      %v418 = vmul.f32 %v379, %v403
      %v419 = vmul.f32 %v380, %v403
      %v420 = vmul.f32 %v381, %v403
      %v421 = vmul.f32 %v382, %v403
      %v422 = vmul.f32 %v383, %v403
      %v423 = vmul.f32 %v384, %v403
      %v424 = vmul.f32 %v385, %v403
      %v425 = vmul.f32 %v386, %v403
      %v426 = vmul.f32 %v387, %v403
      %v427 = vmul.f32 %v388, %v403
      %v428 = vmul.f32 %v389, %v403
      %v429 = vmul.f32 %v390, %v403
      %v430 = vmul.f32 %v391, %v403
      %v431 = vmul.f32 %v392, %v403
      %v432 = vmul.f32 %v393, %v403
      %v433 = vmul.f32 %v394, %v403
      %v434 = vmul.f32 %v395, %v403
      %v435 = vmul.f32 %v396, %v403
      %v436 = vmul.f32 %v397, %v403
      %v437 = vld [vmem:[%s2] sm:$0x1]
      %v439 = vlaneseq
      %v440 = vshrl.u32 %v439, 7
      %v441 = vsub.s32 0, %v440
      %v442 = vrot.slane %v437, %v441
      %v444 = vadd.f32 %v405, %v442
      %v445 = vadd.f32 %v406, %v442
      %v446 = vadd.f32 %v407, %v442
      %v447 = vadd.f32 %v408, %v442
      %v448 = vadd.f32 %v409, %v442
      %v449 = vadd.f32 %v410, %v442
      %v450 = vadd.f32 %v411, %v442
      %v451 = vadd.f32 %v412, %v442
      %v452 = vadd.f32 %v413, %v442
      %v453 = vadd.f32 %v414, %v442
      %v454 = vadd.f32 %v415, %v442
      %v455 = vadd.f32 %v416, %v442
      %v456 = vadd.f32 %v417, %v442
      %v457 = vadd.f32 %v418, %v442
      %v458 = vadd.f32 %v419, %v442
      %v459 = vadd.f32 %v420, %v442
      %v460 = vadd.f32 %v421, %v442
      %v461 = vadd.f32 %v422, %v442
      %v462 = vadd.f32 %v423, %v442
      %v463 = vadd.f32 %v424, %v442
      %v464 = vadd.f32 %v425, %v442
      %v465 = vadd.f32 %v426, %v442
      %v466 = vadd.f32 %v427, %v442
      %v467 = vadd.f32 %v428, %v442
      %v468 = vadd.f32 %v429, %v442
      %v469 = vadd.f32 %v430, %v442
      %v470 = vadd.f32 %v431, %v442
      %v471 = vadd.f32 %v432, %v442
      %v472 = vadd.f32 %v433, %v442
      %v473 = vadd.f32 %v434, %v442
      %v474 = vadd.f32 %v435, %v442
      %v475 = vadd.f32 %v436, %v442
      %v476 = vmax.f32 %v444, 0.0
      %v477 = vmax.f32 %v445, 0.0
      %v478 = vmax.f32 %v446, 0.0
      %v479 = vmax.f32 %v447, 0.0
      %v480 = vmax.f32 %v448, 0.0
      %v481 = vmax.f32 %v449, 0.0
      %v482 = vmax.f32 %v450, 0.0
      %v483 = vmax.f32 %v451, 0.0
      %v484 = vmax.f32 %v452, 0.0
      %v485 = vmax.f32 %v453, 0.0
      %v486 = vmax.f32 %v454, 0.0
      %v487 = vmax.f32 %v455, 0.0
      %v488 = vmax.f32 %v456, 0.0
      %v489 = vmax.f32 %v457, 0.0
      %v490 = vmax.f32 %v458, 0.0
      %v491 = vmax.f32 %v459, 0.0
      %v492 = vmax.f32 %v460, 0.0
      %v493 = vmax.f32 %v461, 0.0
      %v494 = vmax.f32 %v462, 0.0
      %v495 = vmax.f32 %v463, 0.0
      %v496 = vmax.f32 %v464, 0.0
      %v497 = vmax.f32 %v465, 0.0
      %v498 = vmax.f32 %v466, 0.0
      %v499 = vmax.f32 %v467, 0.0
      %v500 = vmax.f32 %v468, 0.0
      %v501 = vmax.f32 %v469, 0.0
      %v502 = vmax.f32 %v470, 0.0
      %v503 = vmax.f32 %v471, 0.0
      %v504 = vmax.f32 %v472, 0.0
      %v505 = vmax.f32 %v473, 0.0
      %v506 = vmax.f32 %v474, 0.0
      %v507 = vmax.f32 %v475, 0.0
      %v508 = vpack.c.bf16 %v477, %v476
      %v509 = vpack.c.bf16 %v479, %v478
      %v510 = vpack.c.bf16 %v481, %v480
      %v511 = vpack.c.bf16 %v483, %v482
      %v512 = vpack.c.bf16 %v485, %v484
      %v513 = vpack.c.bf16 %v487, %v486
      %v514 = vpack.c.bf16 %v489, %v488
      %v515 = vpack.c.bf16 %v491, %v490
      %v516 = vpack.c.bf16 %v493, %v492
      %v517 = vpack.c.bf16 %v495, %v494
      %v518 = vpack.c.bf16 %v497, %v496
      %v519 = vpack.c.bf16 %v499, %v498
      %v520 = vpack.c.bf16 %v501, %v500
      %v521 = vpack.c.bf16 %v503, %v502
      %v522 = vpack.c.bf16 %v505, %v504
      %v523 = vpack.c.bf16 %v507, %v506
      %v524 = vld [vmem:[%s5] sm:$0xf]
      %v525 = vld [vmem:[%s3] sm:$0x1]
      %v527 = vlaneseq
      %v528 = vshrl.u32 %v527, 7
      %v529 = vsub.s32 0, %v528
      %v530 = vrot.slane %v525, %v529
      %vm532 = vcmask 64512
      %v534 = vsel %vm532, %v508, 0
      %v537 = vsel %vm532, %v509, 0
      %v540 = vsel %vm532, %v510, 0
      %v543 = vsel %vm532, %v511, 0
      %v546 = vsel %vm532, %v512, 0
      %v549 = vsel %vm532, %v513, 0
      %v552 = vsel %vm532, %v514, 0
      %v555 = vsel %vm532, %v515, 0
      %v558 = vsel %vm532, %v516, 0
      %v561 = vsel %vm532, %v517, 0
      %v564 = vsel %vm532, %v518, 0
      %v567 = vsel %vm532, %v519, 0
      %v570 = vsel %vm532, %v520, 0
      %v573 = vsel %vm532, %v521, 0
      %v576 = vsel %vm532, %v522, 0
      %v579 = vsel %vm532, %v523, 0
      %vm581 = vcmask 1043456
      %v583 = vsel %vm581, %v524, 0
      %585 = vmatprep.subr.bf16.mxu0 0
      %586 = vmatpush1.bf16.msra.mxu0 0
      %587 = vmatprep.subr.bf16.mxu0 0
      %588 = vmatpush1.bf16.msra.mxu0 0
      %589 = vmatprep.subr.bf16.mxu0 0
      %590 = vmatpush1.bf16.msra.mxu0 0
      %591 = vmatprep.subr.bf16.mxu0 0
      %592 = vmatpush1.bf16.msra.mxu0 0
      %593 = vmatprep.subr.bf16.mxu0 0
      %594 = vmatpush1.bf16.msra.mxu0 0
      %595 = vmatprep.subr.bf16.mxu0 0
      %596 = vmatpush1.bf16.msra.mxu0 0
      %597 = vmatprep.subr.bf16.mxu0 0
      %598 = vmatpush1.bf16.msra.mxu0 0
      %599 = vmatprep.subr.bf16.mxu0 0
      %600 = vmatpush1.bf16.msra.mxu0 %v583
      %601 = vmatprep.subr.bf16.mxu0 0
      %602 = vmatpush2.bf16.msra.mxu0 0
      %603 = vmatprep.subr.bf16.mxu0 0
      %604 = vmatpush2.bf16.msra.mxu0 0
      %605 = vmatprep.subr.bf16.mxu0 0
      %606 = vmatpush2.bf16.msra.mxu0 0
      %607 = vmatprep.subr.bf16.mxu0 0
      %608 = vmatpush2.bf16.msra.mxu0 0
      %609 = vmatprep.subr.bf16.mxu0 0
      %610 = vmatpush2.bf16.msra.mxu0 0
      %611 = vmatprep.subr.bf16.mxu0 0
      %612 = vmatpush2.bf16.msra.mxu0 0
      %613 = vmatprep.subr.bf16.mxu0 0
      %614 = vmatpush2.bf16.msra.mxu0 0
      %615 = vmatprep.subr.bf16.mxu0 0
      %616 = vmatpush2.bf16.msra.mxu0 0
      %617 = vmatprep.mubr.bf16.mxu0 0
      %618 = vmatmul.mubr.bf16.gmra.mxu0 %v534
      %v619 = vpop.f32.mrf.mxu0
      %v620 = vadd.f32 %v530, %v619
      %v621 = vpop.f32.mrf.mxu0
      %v622 = vpop.f32.mrf.mxu0
      %v623 = vadd.f32 %v530, %v622
      %v624 = vpop.f32.mrf.mxu0
      %625 = vmatprep.mubr.bf16.mxu0 0
      %626 = vmatmul.mubr.bf16.gmra.mxu0 %v537
      %v627 = vpop.f32.mrf.mxu0
      %v628 = vadd.f32 %v530, %v627
      %v629 = vpop.f32.mrf.mxu0
      %v630 = vpop.f32.mrf.mxu0
      %v631 = vadd.f32 %v530, %v630
      %v632 = vpop.f32.mrf.mxu0
      %633 = vmatprep.mubr.bf16.mxu0 0
      %634 = vmatmul.mubr.bf16.gmra.mxu0 %v540
      %v635 = vpop.f32.mrf.mxu0
      %v636 = vadd.f32 %v530, %v635
      %v637 = vpop.f32.mrf.mxu0
      %v638 = vpop.f32.mrf.mxu0
      %v639 = vadd.f32 %v530, %v638
      %v640 = vpop.f32.mrf.mxu0
      %641 = vmatprep.mubr.bf16.mxu0 0
      %642 = vmatmul.mubr.bf16.gmra.mxu0 %v543
      %v643 = vpop.f32.mrf.mxu0
      %v644 = vadd.f32 %v530, %v643
      %v645 = vpop.f32.mrf.mxu0
      %v646 = vpop.f32.mrf.mxu0
      %v647 = vadd.f32 %v530, %v646
      %v648 = vpop.f32.mrf.mxu0
      %649 = vmatprep.mubr.bf16.mxu0 0
      %650 = vmatmul.mubr.bf16.gmra.mxu0 %v546
      %v651 = vpop.f32.mrf.mxu0
      %v652 = vadd.f32 %v530, %v651
      %v653 = vpop.f32.mrf.mxu0
      %v654 = vpop.f32.mrf.mxu0
      %v655 = vadd.f32 %v530, %v654
      %v656 = vpop.f32.mrf.mxu0
      %657 = vmatprep.mubr.bf16.mxu0 0
      %658 = vmatmul.mubr.bf16.gmra.mxu0 %v549
      %v659 = vpop.f32.mrf.mxu0
      %v660 = vadd.f32 %v530, %v659
      %v661 = vpop.f32.mrf.mxu0
      %v662 = vpop.f32.mrf.mxu0
      %v663 = vadd.f32 %v530, %v662
      %v664 = vpop.f32.mrf.mxu0
      %665 = vmatprep.mubr.bf16.mxu0 0
      %666 = vmatmul.mubr.bf16.gmra.mxu0 %v552
      %v667 = vpop.f32.mrf.mxu0
      %v668 = vadd.f32 %v530, %v667
      %v669 = vpop.f32.mrf.mxu0
      %v670 = vpop.f32.mrf.mxu0
      %v671 = vadd.f32 %v530, %v670
      %v672 = vpop.f32.mrf.mxu0
      %673 = vmatprep.mubr.bf16.mxu0 0
      %674 = vmatmul.mubr.bf16.gmra.mxu0 %v555
      %v675 = vpop.f32.mrf.mxu0
      %v676 = vadd.f32 %v530, %v675
      %v677 = vpop.f32.mrf.mxu0
      %v678 = vpop.f32.mrf.mxu0
      %v679 = vadd.f32 %v530, %v678
      %v680 = vpop.f32.mrf.mxu0
      %681 = vmatprep.mubr.bf16.mxu0 0
      %682 = vmatmul.mubr.bf16.gmra.mxu0 %v558
      %v683 = vpop.f32.mrf.mxu0
      %v684 = vadd.f32 %v530, %v683
      %v685 = vpop.f32.mrf.mxu0
      %v686 = vpop.f32.mrf.mxu0
      %v687 = vadd.f32 %v530, %v686
      %v688 = vpop.f32.mrf.mxu0
      %689 = vmatprep.mubr.bf16.mxu0 0
      %690 = vmatmul.mubr.bf16.gmra.mxu0 %v561
      %v691 = vpop.f32.mrf.mxu0
      %v692 = vadd.f32 %v530, %v691
      %v693 = vpop.f32.mrf.mxu0
      %v694 = vpop.f32.mrf.mxu0
      %v695 = vadd.f32 %v530, %v694
      %v696 = vpop.f32.mrf.mxu0
      %697 = vmatprep.mubr.bf16.mxu0 0
      %698 = vmatmul.mubr.bf16.gmra.mxu0 %v564
      %v699 = vpop.f32.mrf.mxu0
      %v700 = vadd.f32 %v530, %v699
      %v701 = vpop.f32.mrf.mxu0
      %v702 = vpop.f32.mrf.mxu0
      %v703 = vadd.f32 %v530, %v702
      %v704 = vpop.f32.mrf.mxu0
      %705 = vmatprep.mubr.bf16.mxu0 0
      %706 = vmatmul.mubr.bf16.gmra.mxu0 %v567
      %v707 = vpop.f32.mrf.mxu0
      %v708 = vadd.f32 %v530, %v707
      %v709 = vpop.f32.mrf.mxu0
      %v710 = vpop.f32.mrf.mxu0
      %v711 = vadd.f32 %v530, %v710
      %v712 = vpop.f32.mrf.mxu0
      %713 = vmatprep.mubr.bf16.mxu0 0
      %714 = vmatmul.mubr.bf16.gmra.mxu0 %v570
      %v715 = vpop.f32.mrf.mxu0
      %v716 = vadd.f32 %v530, %v715
      %v717 = vpop.f32.mrf.mxu0
      %v718 = vpop.f32.mrf.mxu0
      %v719 = vadd.f32 %v530, %v718
      %v720 = vpop.f32.mrf.mxu0
      %721 = vmatprep.mubr.bf16.mxu0 0
      %722 = vmatmul.mubr.bf16.gmra.mxu0 %v573
      %v723 = vpop.f32.mrf.mxu0
      %v724 = vadd.f32 %v530, %v723
      %v725 = vpop.f32.mrf.mxu0
      %v726 = vpop.f32.mrf.mxu0
      %v727 = vadd.f32 %v530, %v726
      %v728 = vpop.f32.mrf.mxu0
      %729 = vmatprep.mubr.bf16.mxu0 0
      %730 = vmatmul.mubr.bf16.gmra.mxu0 %v576
      %v731 = vpop.f32.mrf.mxu0
      %v732 = vadd.f32 %v530, %v731
      %v733 = vpop.f32.mrf.mxu0
      %v734 = vpop.f32.mrf.mxu0
      %v735 = vadd.f32 %v530, %v734
      %v736 = vpop.f32.mrf.mxu0
      %737 = vmatprep.mubr.bf16.mxu0 0
      %738 = vmatmul.mubr.bf16.gmra.mxu0 %v579
      %v739 = vpop.f32.mrf.mxu0
      %v740 = vadd.f32 %v530, %v739
      %v741 = vpop.f32.mrf.mxu0
      %v742 = vpop.f32.mrf.mxu0
      %v743 = vadd.f32 %v530, %v742
      %v744 = vpop.f32.mrf.mxu0
      %745 = vdwg.mxu0
      %v746 = vmax.f32 %v620, 0.0
      %v747 = vmax.f32 %v623, 0.0
      %v748 = vmax.f32 %v628, 0.0
      %v749 = vmax.f32 %v631, 0.0
      %v750 = vmax.f32 %v636, 0.0
      %v751 = vmax.f32 %v639, 0.0
      %v752 = vmax.f32 %v644, 0.0
      %v753 = vmax.f32 %v647, 0.0
      %v754 = vmax.f32 %v652, 0.0
      %v755 = vmax.f32 %v655, 0.0
      %v756 = vmax.f32 %v660, 0.0
      %v757 = vmax.f32 %v663, 0.0
      %v758 = vmax.f32 %v668, 0.0
      %v759 = vmax.f32 %v671, 0.0
      %v760 = vmax.f32 %v676, 0.0
      %v761 = vmax.f32 %v679, 0.0
      %v762 = vmax.f32 %v684, 0.0
      %v763 = vmax.f32 %v687, 0.0
      %v764 = vmax.f32 %v692, 0.0
      %v765 = vmax.f32 %v695, 0.0
      %v766 = vmax.f32 %v700, 0.0
      %v767 = vmax.f32 %v703, 0.0
      %v768 = vmax.f32 %v708, 0.0
      %v769 = vmax.f32 %v711, 0.0
      %v770 = vmax.f32 %v716, 0.0
      %v771 = vmax.f32 %v719, 0.0
      %v772 = vmax.f32 %v724, 0.0
      %v773 = vmax.f32 %v727, 0.0
      %v774 = vmax.f32 %v732, 0.0
      %v775 = vmax.f32 %v735, 0.0
      %v776 = vmax.f32 %v740, 0.0
      %v777 = vmax.f32 %v743, 0.0
      %v778 = vpack.c.bf16 %v747, %v746
      %v779 = vpack.c.bf16 %v749, %v748
      %v780 = vpack.c.bf16 %v751, %v750
      %v781 = vpack.c.bf16 %v753, %v752
      %v782 = vpack.c.bf16 %v755, %v754
      %v783 = vpack.c.bf16 %v757, %v756
      %v784 = vpack.c.bf16 %v759, %v758
      %v785 = vpack.c.bf16 %v761, %v760
      %v786 = vpack.c.bf16 %v763, %v762
      %v787 = vpack.c.bf16 %v765, %v764
      %v788 = vpack.c.bf16 %v767, %v766
      %v789 = vpack.c.bf16 %v769, %v768
      %v790 = vpack.c.bf16 %v771, %v770
      %v791 = vpack.c.bf16 %v773, %v772
      %v792 = vpack.c.bf16 %v775, %v774
      %v793 = vpack.c.bf16 %v777, %v776
      %v794 = vld [vmem:[%s8] sm:$0xf]
      %v796 = vsel %vm581, %v794, 0
      %798 = vmatprep.subr.bf16.mxu0 0
      %799 = vmatpush1.bf16.msra.mxu0 0
      %800 = vmatprep.subr.bf16.mxu0 0
      %801 = vmatpush1.bf16.msra.mxu0 0
      %802 = vmatprep.subr.bf16.mxu0 0
      %803 = vmatpush1.bf16.msra.mxu0 0
      %804 = vmatprep.subr.bf16.mxu0 0
      %805 = vmatpush1.bf16.msra.mxu0 0
      %806 = vmatprep.subr.bf16.mxu0 0
      %807 = vmatpush1.bf16.msra.mxu0 0
      %808 = vmatprep.subr.bf16.mxu0 0
      %809 = vmatpush1.bf16.msra.mxu0 0
      %810 = vmatprep.subr.bf16.mxu0 0
      %811 = vmatpush1.bf16.msra.mxu0 0
      %812 = vmatprep.subr.bf16.mxu0 0
      %813 = vmatpush1.bf16.msra.mxu0 %v796
      %814 = vmatprep.subr.bf16.mxu0 0
      %815 = vmatpush2.bf16.msra.mxu0 0
      %816 = vmatprep.subr.bf16.mxu0 0
      %817 = vmatpush2.bf16.msra.mxu0 0
      %818 = vmatprep.subr.bf16.mxu0 0
      %819 = vmatpush2.bf16.msra.mxu0 0
      %820 = vmatprep.subr.bf16.mxu0 0
      %821 = vmatpush2.bf16.msra.mxu0 0
      %822 = vmatprep.subr.bf16.mxu0 0
      %823 = vmatpush2.bf16.msra.mxu0 0
      %824 = vmatprep.subr.bf16.mxu0 0
      %825 = vmatpush2.bf16.msra.mxu0 0
      %826 = vmatprep.subr.bf16.mxu0 0
      %827 = vmatpush2.bf16.msra.mxu0 0
      %828 = vmatprep.subr.bf16.mxu0 0
      %829 = vmatpush2.bf16.msra.mxu0 0
      %830 = vmatprep.mubr.bf16.mxu0 0
      %831 = vmatmul.mubr.bf16.gmra.mxu0 %v534
      %v832 = vpop.f32.mrf.mxu0
      %v833 = vadd.f32 0.0, %v832
      %v834 = vpop.f32.mrf.mxu0
      %v835 = vpop.f32.mrf.mxu0
      %v836 = vadd.f32 0.0, %v835
      %v837 = vpop.f32.mrf.mxu0
      %838 = vmatprep.mubr.bf16.mxu0 0
      %839 = vmatmul.mubr.bf16.gmra.mxu0 %v537
      %v840 = vpop.f32.mrf.mxu0
      %v841 = vadd.f32 0.0, %v840
      %v842 = vpop.f32.mrf.mxu0
      %v843 = vpop.f32.mrf.mxu0
      %v844 = vadd.f32 0.0, %v843
      %v845 = vpop.f32.mrf.mxu0
      %846 = vmatprep.mubr.bf16.mxu0 0
      %847 = vmatmul.mubr.bf16.gmra.mxu0 %v540
      %v848 = vpop.f32.mrf.mxu0
      %v849 = vadd.f32 0.0, %v848
      %v850 = vpop.f32.mrf.mxu0
      %v851 = vpop.f32.mrf.mxu0
      %v852 = vadd.f32 0.0, %v851
      %v853 = vpop.f32.mrf.mxu0
      %854 = vmatprep.mubr.bf16.mxu0 0
      %855 = vmatmul.mubr.bf16.gmra.mxu0 %v543
      %v856 = vpop.f32.mrf.mxu0
      %v857 = vadd.f32 0.0, %v856
      %v858 = vpop.f32.mrf.mxu0
      %v859 = vpop.f32.mrf.mxu0
      %v860 = vadd.f32 0.0, %v859
      %v861 = vpop.f32.mrf.mxu0
      %862 = vdwg.mxu0
      %v867 = vunpack.c.l.b16 %v778
      %v868 = vunpack.c.h.b16 %v778
      %v869 = vunpack.c.l.b16 %v779
      %v870 = vunpack.c.h.b16 %v779
      %v871 = vunpack.c.l.b16 %v780
      %v872 = vunpack.c.h.b16 %v780
      %v873 = vunpack.c.l.b16 %v781
      %v874 = vunpack.c.h.b16 %v781
      %v875 = vpack.c.b16 %v867, %v867
      %v876 = vpack.c.b16 %v868, %v868
      %v877 = vpack.c.b16 %v869, %v869
      %v878 = vpack.c.b16 %v870, %v870
      %v879 = vpack.c.b16 %v871, %v871
      %v880 = vpack.c.b16 %v872, %v872
      %v881 = vpack.c.b16 %v873, %v873
      %v882 = vpack.c.b16 %v874, %v874
      %s891 = scalar_lea.vmem [#allocation2], 216
      %vm892 = vcmask 27648
      %893 = vst.msk [vmem:[%s891] sm:$0xf] %vm892, %v875
      %894 = vst.msk [vmem:[%s891 + $0x8] sm:$0xf] %vm892, %v876
      %895 = vst.msk [vmem:[%s891 + $0x10] sm:$0xf] %vm892, %v877
      %896 = vst.msk [vmem:[%s891 + $0x18] sm:$0xf] %vm892, %v878
      %897 = vst.msk [vmem:[%s891 + $0x20] sm:$0xf] %vm892, %v879
      %898 = vst.msk [vmem:[%s891 + $0x28] sm:$0xf] %vm892, %v880
      %899 = vst.msk [vmem:[%s891 + $0x30] sm:$0xf] %vm892, %v881
      %900 = vst.msk [vmem:[%s891 + $0x38] sm:$0xf] %vm892, %v882
      %s901 = scalar_lea.vmem [#allocation2], 280
      %902 = vst.msk [vmem:[%s901] sm:$0xf] %vm892, 0
      %vm903 = vcmask 24576
      %vm904 = vsmask.f32 256
      %vm905 = vmand %vm903, %vm904
      %v906 = vld [vmem:[%s901 + $0x4] sm:$0x1]
      %v907 = vsel %vm905, 0, %v906
      %908 = vst [vmem:[%s901 + $0x4] sm:$0x1] %v907
      %v909 = vld [vmem:[%s891 + $0x4] sm:$0x1]
      %v910 = vsel %vm905, 0, %v909
      %911 = vst [vmem:[%s891 + $0x4] sm:$0x1] %v910
      %v912 = vld [vmem:[%s891 + $0xc] sm:$0x1]
      %v913 = vsel %vm905, 0, %v912
      %914 = vst [vmem:[%s891 + $0xc] sm:$0x1] %v913
      %v915 = vld [vmem:[%s891 + $0x14] sm:$0x1]
      %v916 = vsel %vm905, 0, %v915
      %917 = vst [vmem:[%s891 + $0x14] sm:$0x1] %v916
      %v918 = vld [vmem:[%s891 + $0x1c] sm:$0x1]
      %v919 = vsel %vm905, 0, %v918
      %920 = vst [vmem:[%s891 + $0x1c] sm:$0x1] %v919
      %v921 = vld [vmem:[%s891 + $0x24] sm:$0x1]
      %v922 = vsel %vm905, 0, %v921
      %923 = vst [vmem:[%s891 + $0x24] sm:$0x1] %v922
      %v924 = vld [vmem:[%s891 + $0x2c] sm:$0x1]
      %v925 = vsel %vm905, 0, %v924
      %926 = vst [vmem:[%s891 + $0x2c] sm:$0x1] %v925
      %v927 = vld [vmem:[%s891 + $0x34] sm:$0x1]
      %v928 = vsel %vm905, 0, %v927
      %929 = vst [vmem:[%s891 + $0x34] sm:$0x1] %v928
      %v930 = vld [vmem:[%s891 + $0x3c] sm:$0x1]
      %v931 = vsel %vm905, 0, %v930
      %932 = vst [vmem:[%s891 + $0x3c] sm:$0x1] %v931
      %v933 = vld [vmem:[%s891 + $0x44] sm:$0x1]
      %v934 = vsel %vm905, 0, %v933
      %935 = vst [vmem:[%s891 + $0x44] sm:$0x1] %v934
      %v940 = vunpack.c.l.b16 %v782
      %v941 = vunpack.c.h.b16 %v782
      %v942 = vunpack.c.l.b16 %v783
      %v943 = vunpack.c.h.b16 %v783
      %v944 = vunpack.c.l.b16 %v784
      %v945 = vunpack.c.h.b16 %v784
      %v946 = vunpack.c.l.b16 %v785
      %v947 = vunpack.c.h.b16 %v785
      %v948 = vpack.c.b16 %v940, %v940
      %v949 = vpack.c.b16 %v941, %v941
      %v950 = vpack.c.b16 %v942, %v942
      %v951 = vpack.c.b16 %v943, %v943
      %v952 = vpack.c.b16 %v944, %v944
      %v953 = vpack.c.b16 %v945, %v945
      %v954 = vpack.c.b16 %v946, %v946
      %v955 = vpack.c.b16 %v947, %v947
      %v957 = vshrl.u32 %v948, 16
      %v959 = vrot.slane %v957, 7
      %v960 = vshll.u32 %v948, 16
      %v962 = vor.u32 %v959, %v960
      %v963 = vrot.slane %v959, 4
      %v965 = vshrl.u32 %v949, 16
      %v967 = vrot.slane %v965, 7
      %v968 = vshll.u32 %v949, 16
      %v970 = vor.u32 %v967, %v968
      %v971 = vrot.slane %v967, 4
      %v973 = vshrl.u32 %v950, 16
      %v975 = vrot.slane %v973, 7
      %v976 = vshll.u32 %v950, 16
      %v978 = vor.u32 %v975, %v976
      %v979 = vrot.slane %v975, 4
      %v981 = vshrl.u32 %v951, 16
      %v983 = vrot.slane %v981, 7
      %v984 = vshll.u32 %v951, 16
      %v986 = vor.u32 %v983, %v984
      %v987 = vrot.slane %v983, 4
      %v989 = vshrl.u32 %v952, 16
      %v991 = vrot.slane %v989, 7
      %v992 = vshll.u32 %v952, 16
      %v994 = vor.u32 %v991, %v992
      %v995 = vrot.slane %v991, 4
      %v997 = vshrl.u32 %v953, 16
      %v999 = vrot.slane %v997, 7
      %v1000 = vshll.u32 %v953, 16
      %v1002 = vor.u32 %v999, %v1000
      %v1003 = vrot.slane %v999, 4
      %v1005 = vshrl.u32 %v954, 16
      %v1007 = vrot.slane %v1005, 7
      %v1008 = vshll.u32 %v954, 16
      %v1010 = vor.u32 %v1007, %v1008
      %v1011 = vrot.slane %v1007, 4
      %v1013 = vshrl.u32 %v955, 16
      %v1015 = vrot.slane %v1013, 7
      %v1016 = vshll.u32 %v955, 16
      %v1018 = vor.u32 %v1015, %v1016
      %v1019 = vrot.slane %v1015, 4
      %s1036 = scalar_lea.vmem [#allocation2], 144
      %vm1037 = vcmask 27648
      %vm1038 = vsmask.f32 7938
      %vm1039 = vmand %vm1037, %vm1038
      %v1040 = vld [vmem:[%s1036] sm:$0xf]
      %v1041 = vsel %vm1039, %v962, %v1040
      %1042 = vst [vmem:[%s1036] sm:$0xf] %v1041
      %v1043 = vld [vmem:[%s1036 + $0x4] sm:$0x1]
      %v1044 = vsel %vm905, %v963, %v1043
      %1045 = vst [vmem:[%s1036 + $0x4] sm:$0x1] %v1044
      %v1046 = vld [vmem:[%s1036 + $0x8] sm:$0xf]
      %v1047 = vsel %vm1039, %v970, %v1046
      %1048 = vst [vmem:[%s1036 + $0x8] sm:$0xf] %v1047
      %v1049 = vld [vmem:[%s1036 + $0xc] sm:$0x1]
      %v1050 = vsel %vm905, %v971, %v1049
      %1051 = vst [vmem:[%s1036 + $0xc] sm:$0x1] %v1050
      %v1052 = vld [vmem:[%s1036 + $0x10] sm:$0xf]
      %v1053 = vsel %vm1039, %v978, %v1052
      %1054 = vst [vmem:[%s1036 + $0x10] sm:$0xf] %v1053
      %v1055 = vld [vmem:[%s1036 + $0x14] sm:$0x1]
      %v1056 = vsel %vm905, %v979, %v1055
      %1057 = vst [vmem:[%s1036 + $0x14] sm:$0x1] %v1056
      %v1058 = vld [vmem:[%s1036 + $0x18] sm:$0xf]
      %v1059 = vsel %vm1039, %v986, %v1058
      %1060 = vst [vmem:[%s1036 + $0x18] sm:$0xf] %v1059
      %v1061 = vld [vmem:[%s1036 + $0x1c] sm:$0x1]
      %v1062 = vsel %vm905, %v987, %v1061
      %1063 = vst [vmem:[%s1036 + $0x1c] sm:$0x1] %v1062
      %v1064 = vld [vmem:[%s1036 + $0x20] sm:$0xf]
      %v1065 = vsel %vm1039, %v994, %v1064
      %1066 = vst [vmem:[%s1036 + $0x20] sm:$0xf] %v1065
      %v1067 = vld [vmem:[%s1036 + $0x24] sm:$0x1]
      %v1068 = vsel %vm905, %v995, %v1067
      %1069 = vst [vmem:[%s1036 + $0x24] sm:$0x1] %v1068
      %v1070 = vld [vmem:[%s1036 + $0x28] sm:$0xf]
      %v1071 = vsel %vm1039, %v1002, %v1070
      %1072 = vst [vmem:[%s1036 + $0x28] sm:$0xf] %v1071
      %v1073 = vld [vmem:[%s1036 + $0x2c] sm:$0x1]
      %v1074 = vsel %vm905, %v1003, %v1073
      %1075 = vst [vmem:[%s1036 + $0x2c] sm:$0x1] %v1074
      %v1076 = vld [vmem:[%s1036 + $0x30] sm:$0xf]
      %v1077 = vsel %vm1039, %v1010, %v1076
      %1078 = vst [vmem:[%s1036 + $0x30] sm:$0xf] %v1077
      %v1079 = vld [vmem:[%s1036 + $0x34] sm:$0x1]
      %v1080 = vsel %vm905, %v1011, %v1079
      %1081 = vst [vmem:[%s1036 + $0x34] sm:$0x1] %v1080
      %v1082 = vld [vmem:[%s1036 + $0x38] sm:$0xf]
      %v1083 = vsel %vm1039, %v1018, %v1082
      %1084 = vst [vmem:[%s1036 + $0x38] sm:$0xf] %v1083
      %v1085 = vld [vmem:[%s1036 + $0x3c] sm:$0x1]
      %v1086 = vsel %vm905, %v1019, %v1085
      %1087 = vst [vmem:[%s1036 + $0x3c] sm:$0x1] %v1086
      %s1088 = scalar_lea.vmem [#allocation2], 208
      %1089 = vst.msk [vmem:[%s1088] sm:$0xf] %vm892, 0
      %v1090 = vld [vmem:[%s1088 + $0x4] sm:$0x1]
      %v1091 = vsel %vm905, 0, %v1090
      %1092 = vst [vmem:[%s1088 + $0x4] sm:$0x1] %v1091
      %v1093 = vld [vmem:[%s1036] sm:$0x1]
      %v1094 = vsel %vm905, 0, %v1093
      %1095 = vst [vmem:[%s1036] sm:$0x1] %v1094
      %v1096 = vld [vmem:[%s1036 + $0x8] sm:$0x1]
      %v1097 = vsel %vm905, 0, %v1096
      %1098 = vst [vmem:[%s1036 + $0x8] sm:$0x1] %v1097
      %v1099 = vld [vmem:[%s1036 + $0x10] sm:$0x1]
      %v1100 = vsel %vm905, 0, %v1099
      %1101 = vst [vmem:[%s1036 + $0x10] sm:$0x1] %v1100
      %v1102 = vld [vmem:[%s1036 + $0x18] sm:$0x1]
      %v1103 = vsel %vm905, 0, %v1102
      %1104 = vst [vmem:[%s1036 + $0x18] sm:$0x1] %v1103
      %v1105 = vld [vmem:[%s1036 + $0x20] sm:$0x1]
      %v1106 = vsel %vm905, 0, %v1105
      %1107 = vst [vmem:[%s1036 + $0x20] sm:$0x1] %v1106
      %v1108 = vld [vmem:[%s1036 + $0x28] sm:$0x1]
      %v1109 = vsel %vm905, 0, %v1108
      %1110 = vst [vmem:[%s1036 + $0x28] sm:$0x1] %v1109
      %v1111 = vld [vmem:[%s1036 + $0x30] sm:$0x1]
      %v1112 = vsel %vm905, 0, %v1111
      %1113 = vst [vmem:[%s1036 + $0x30] sm:$0x1] %v1112
      %v1114 = vld [vmem:[%s1036 + $0x38] sm:$0x1]
      %v1115 = vsel %vm905, 0, %v1114
      %1116 = vst [vmem:[%s1036 + $0x38] sm:$0x1] %v1115
      %v1117 = vld [vmem:[%s1036 + $0x40] sm:$0x1]
      %v1118 = vsel %vm905, 0, %v1117
      %1119 = vst [vmem:[%s1036 + $0x40] sm:$0x1] %v1118
      %v1124 = vunpack.c.l.b16 %v786
      %v1125 = vunpack.c.h.b16 %v786
      %v1126 = vunpack.c.l.b16 %v787
      %v1127 = vunpack.c.h.b16 %v787
      %v1128 = vunpack.c.l.b16 %v788
      %v1129 = vunpack.c.h.b16 %v788
      %v1130 = vunpack.c.l.b16 %v789
      %v1131 = vunpack.c.h.b16 %v789
      %v1132 = vpack.c.b16 %v1124, %v1124
      %v1133 = vpack.c.b16 %v1125, %v1125
      %v1134 = vpack.c.b16 %v1126, %v1126
      %v1135 = vpack.c.b16 %v1127, %v1127
      %v1136 = vpack.c.b16 %v1128, %v1128
      %v1137 = vpack.c.b16 %v1129, %v1129
      %v1138 = vpack.c.b16 %v1130, %v1130
      %v1139 = vpack.c.b16 %v1131, %v1131
      %s1148 = scalar_lea.vmem [#allocation2], 80
      %1149 = vst.msk [vmem:[%s1148] sm:$0xf] %vm892, %v1132
      %1150 = vst.msk [vmem:[%s1148 + $0x8] sm:$0xf] %vm892, %v1133
      %1151 = vst.msk [vmem:[%s1148 + $0x10] sm:$0xf] %vm892, %v1134
      %1152 = vst.msk [vmem:[%s1148 + $0x18] sm:$0xf] %vm892, %v1135
      %1153 = vst.msk [vmem:[%s1148 + $0x20] sm:$0xf] %vm892, %v1136
      %1154 = vst.msk [vmem:[%s1148 + $0x28] sm:$0xf] %vm892, %v1137
      %1155 = vst.msk [vmem:[%s1148 + $0x30] sm:$0xf] %vm892, %v1138
      %1156 = vst.msk [vmem:[%s1148 + $0x38] sm:$0xf] %vm892, %v1139
      %s1157 = scalar_lea.vmem [#allocation2], 72
      %1158 = vst.msk [vmem:[%s1157] sm:$0xf] %vm892, 0
      %v1159 = vld [vmem:[%s1157 + $0x4] sm:$0x1]
      %v1160 = vsel %vm905, 0, %v1159
      %1161 = vst [vmem:[%s1157 + $0x4] sm:$0x1] %v1160
      %v1162 = vld [vmem:[%s1157 + $0x4] sm:$0x1]
      %v1163 = vsel %vm905, 0, %v1162
      %1164 = vst [vmem:[%s1157 + $0x4] sm:$0x1] %v1163
      %v1165 = vld [vmem:[%s1157 + $0xc] sm:$0x1]
      %v1166 = vsel %vm905, 0, %v1165
      %1167 = vst [vmem:[%s1157 + $0xc] sm:$0x1] %v1166
      %v1168 = vld [vmem:[%s1157 + $0x14] sm:$0x1]
      %v1169 = vsel %vm905, 0, %v1168
      %1170 = vst [vmem:[%s1157 + $0x14] sm:$0x1] %v1169
      %v1171 = vld [vmem:[%s1157 + $0x1c] sm:$0x1]
      %v1172 = vsel %vm905, 0, %v1171
      %1173 = vst [vmem:[%s1157 + $0x1c] sm:$0x1] %v1172
      %v1174 = vld [vmem:[%s1157 + $0x24] sm:$0x1]
      %v1175 = vsel %vm905, 0, %v1174
      %1176 = vst [vmem:[%s1157 + $0x24] sm:$0x1] %v1175
      %v1177 = vld [vmem:[%s1157 + $0x2c] sm:$0x1]
      %v1178 = vsel %vm905, 0, %v1177
      %1179 = vst [vmem:[%s1157 + $0x2c] sm:$0x1] %v1178
      %v1180 = vld [vmem:[%s1157 + $0x34] sm:$0x1]
      %v1181 = vsel %vm905, 0, %v1180
      %1182 = vst [vmem:[%s1157 + $0x34] sm:$0x1] %v1181
      %v1183 = vld [vmem:[%s1157 + $0x3c] sm:$0x1]
      %v1184 = vsel %vm905, 0, %v1183
      %1185 = vst [vmem:[%s1157 + $0x3c] sm:$0x1] %v1184
      %v1186 = vld [vmem:[%s1157 + $0x44] sm:$0x1]
      %v1187 = vsel %vm905, 0, %v1186
      %1188 = vst [vmem:[%s1157 + $0x44] sm:$0x1] %v1187
      %v1193 = vunpack.c.l.b16 %v790
      %v1194 = vunpack.c.h.b16 %v790
      %v1195 = vunpack.c.l.b16 %v791
      %v1196 = vunpack.c.h.b16 %v791
      %v1197 = vunpack.c.l.b16 %v792
      %v1198 = vunpack.c.h.b16 %v792
      %v1199 = vunpack.c.l.b16 %v793
      %v1200 = vunpack.c.h.b16 %v793
      %v1201 = vpack.c.b16 %v1193, %v1193
      %v1202 = vpack.c.b16 %v1194, %v1194
      %v1203 = vpack.c.b16 %v1195, %v1195
      %v1204 = vpack.c.b16 %v1196, %v1196
      %v1205 = vpack.c.b16 %v1197, %v1197
      %v1206 = vpack.c.b16 %v1198, %v1198
      %v1207 = vpack.c.b16 %v1199, %v1199
      %v1208 = vpack.c.b16 %v1200, %v1200
      %v1210 = vshrl.u32 %v1201, 16
      %v1212 = vrot.slane %v1210, 7
      %v1213 = vshll.u32 %v1201, 16
      %v1215 = vor.u32 %v1212, %v1213
      %v1216 = vrot.slane %v1212, 4
      %v1218 = vshrl.u32 %v1202, 16
      %v1220 = vrot.slane %v1218, 7
      %v1221 = vshll.u32 %v1202, 16
      %v1223 = vor.u32 %v1220, %v1221
      %v1224 = vrot.slane %v1220, 4
      %v1226 = vshrl.u32 %v1203, 16
      %v1228 = vrot.slane %v1226, 7
      %v1229 = vshll.u32 %v1203, 16
      %v1231 = vor.u32 %v1228, %v1229
      %v1232 = vrot.slane %v1228, 4
      %v1234 = vshrl.u32 %v1204, 16
      %v1236 = vrot.slane %v1234, 7
      %v1237 = vshll.u32 %v1204, 16
      %v1239 = vor.u32 %v1236, %v1237
      %v1240 = vrot.slane %v1236, 4
      %v1242 = vshrl.u32 %v1205, 16
      %v1244 = vrot.slane %v1242, 7
      %v1245 = vshll.u32 %v1205, 16
      %v1247 = vor.u32 %v1244, %v1245
      %v1248 = vrot.slane %v1244, 4
      %v1250 = vshrl.u32 %v1206, 16
      %v1252 = vrot.slane %v1250, 7
      %v1253 = vshll.u32 %v1206, 16
      %v1255 = vor.u32 %v1252, %v1253
      %v1256 = vrot.slane %v1252, 4
      %v1258 = vshrl.u32 %v1207, 16
      %v1260 = vrot.slane %v1258, 7
      %v1261 = vshll.u32 %v1207, 16
      %v1263 = vor.u32 %v1260, %v1261
      %v1264 = vrot.slane %v1260, 4
      %v1266 = vshrl.u32 %v1208, 16
      %v1268 = vrot.slane %v1266, 7
      %v1269 = vshll.u32 %v1208, 16
      %v1271 = vor.u32 %v1268, %v1269
      %v1272 = vrot.slane %v1268, 4
      %s1289 = scalar_lea.vmem [#allocation2], 8
      %v1290 = vld [vmem:[%s1289] sm:$0xf]
      %v1291 = vsel %vm1039, %v1215, %v1290
      %1292 = vst [vmem:[%s1289] sm:$0xf] %v1291
      %v1293 = vld [vmem:[%s1289 + $0x4] sm:$0x1]
      %v1294 = vsel %vm905, %v1216, %v1293
      %1295 = vst [vmem:[%s1289 + $0x4] sm:$0x1] %v1294
      %v1296 = vld [vmem:[%s1289 + $0x8] sm:$0xf]
      %v1297 = vsel %vm1039, %v1223, %v1296
      %1298 = vst [vmem:[%s1289 + $0x8] sm:$0xf] %v1297
      %v1299 = vld [vmem:[%s1289 + $0xc] sm:$0x1]
      %v1300 = vsel %vm905, %v1224, %v1299
      %1301 = vst [vmem:[%s1289 + $0xc] sm:$0x1] %v1300
      %v1302 = vld [vmem:[%s1289 + $0x10] sm:$0xf]
      %v1303 = vsel %vm1039, %v1231, %v1302
      %1304 = vst [vmem:[%s1289 + $0x10] sm:$0xf] %v1303
      %v1305 = vld [vmem:[%s1289 + $0x14] sm:$0x1]
      %v1306 = vsel %vm905, %v1232, %v1305
      %1307 = vst [vmem:[%s1289 + $0x14] sm:$0x1] %v1306
      %v1308 = vld [vmem:[%s1289 + $0x18] sm:$0xf]
      %v1309 = vsel %vm1039, %v1239, %v1308
      %1310 = vst [vmem:[%s1289 + $0x18] sm:$0xf] %v1309
      %v1311 = vld [vmem:[%s1289 + $0x1c] sm:$0x1]
      %v1312 = vsel %vm905, %v1240, %v1311
      %1313 = vst [vmem:[%s1289 + $0x1c] sm:$0x1] %v1312
      %v1314 = vld [vmem:[%s1289 + $0x20] sm:$0xf]
      %v1315 = vsel %vm1039, %v1247, %v1314
      %1316 = vst [vmem:[%s1289 + $0x20] sm:$0xf] %v1315
      %v1317 = vld [vmem:[%s1289 + $0x24] sm:$0x1]
      %v1318 = vsel %vm905, %v1248, %v1317
      %1319 = vst [vmem:[%s1289 + $0x24] sm:$0x1] %v1318
      %v1320 = vld [vmem:[%s1289 + $0x28] sm:$0xf]
      %v1321 = vsel %vm1039, %v1255, %v1320
      %1322 = vst [vmem:[%s1289 + $0x28] sm:$0xf] %v1321
      %v1323 = vld [vmem:[%s1289 + $0x2c] sm:$0x1]
      %v1324 = vsel %vm905, %v1256, %v1323
      %1325 = vst [vmem:[%s1289 + $0x2c] sm:$0x1] %v1324
      %v1326 = vld [vmem:[%s1289 + $0x30] sm:$0xf]
      %v1327 = vsel %vm1039, %v1263, %v1326
      %1328 = vst [vmem:[%s1289 + $0x30] sm:$0xf] %v1327
      %v1329 = vld [vmem:[%s1289 + $0x34] sm:$0x1]
      %v1330 = vsel %vm905, %v1264, %v1329
      %1331 = vst [vmem:[%s1289 + $0x34] sm:$0x1] %v1330
      %v1332 = vld [vmem:[%s1289 + $0x38] sm:$0xf]
      %v1333 = vsel %vm1039, %v1271, %v1332
      %1334 = vst [vmem:[%s1289 + $0x38] sm:$0xf] %v1333
      %v1335 = vld [vmem:[%s1289 + $0x3c] sm:$0x1]
      %v1336 = vsel %vm905, %v1272, %v1335
      %1337 = vst [vmem:[%s1289 + $0x3c] sm:$0x1] %v1336
      %1338 = vst.msk [vmem:[#allocation2] sm:$0xf] %vm892, 0
      %v1339 = vld [vmem:[#allocation2 + $0x4] sm:$0x1]
      %v1340 = vsel %vm905, 0, %v1339
      %1341 = vst [vmem:[#allocation2 + $0x4] sm:$0x1] %v1340
      %v1342 = vld [vmem:[#allocation2] sm:$0x1]
      %v1343 = vsel %vm905, 0, %v1342
      %1344 = vst [vmem:[#allocation2] sm:$0x1] %v1343
      %v1345 = vld [vmem:[#allocation2 + $0x8] sm:$0x1]
      %v1346 = vsel %vm905, 0, %v1345
      %1347 = vst [vmem:[#allocation2 + $0x8] sm:$0x1] %v1346
      %v1348 = vld [vmem:[#allocation2 + $0x10] sm:$0x1]
      %v1349 = vsel %vm905, 0, %v1348
      %1350 = vst [vmem:[#allocation2 + $0x10] sm:$0x1] %v1349
      %v1351 = vld [vmem:[#allocation2 + $0x18] sm:$0x1]
      %v1352 = vsel %vm905, 0, %v1351
      %1353 = vst [vmem:[#allocation2 + $0x18] sm:$0x1] %v1352
      %v1354 = vld [vmem:[#allocation2 + $0x20] sm:$0x1]
      %v1355 = vsel %vm905, 0, %v1354
      %1356 = vst [vmem:[#allocation2 + $0x20] sm:$0x1] %v1355
      %v1357 = vld [vmem:[#allocation2 + $0x28] sm:$0x1]
      %v1358 = vsel %vm905, 0, %v1357
      %1359 = vst [vmem:[#allocation2 + $0x28] sm:$0x1] %v1358
      %v1360 = vld [vmem:[#allocation2 + $0x30] sm:$0x1]
      %v1361 = vsel %vm905, 0, %v1360
      %1362 = vst [vmem:[#allocation2 + $0x30] sm:$0x1] %v1361
      %v1363 = vld [vmem:[#allocation2 + $0x38] sm:$0x1]
      %v1364 = vsel %vm905, 0, %v1363
      %1365 = vst [vmem:[#allocation2 + $0x38] sm:$0x1] %v1364
      %v1366 = vld [vmem:[#allocation2 + $0x40] sm:$0x1]
      %v1367 = vsel %vm905, 0, %v1366
      %1368 = vst [vmem:[#allocation2 + $0x40] sm:$0x1] %v1367
      %v1369 = vld [vmem:[#allocation2] sm:$0xf]
      %v1370 = vld [vmem:[#allocation2 + $0x8] sm:$0xf]
      %v1371 = vld [vmem:[#allocation2 + $0x10] sm:$0xf]
      %v1372 = vld [vmem:[#allocation2 + $0x18] sm:$0xf]
      %v1373 = vld [vmem:[#allocation2 + $0x20] sm:$0xf]
      %v1374 = vld [vmem:[#allocation2 + $0x28] sm:$0xf]
      %v1375 = vld [vmem:[#allocation2 + $0x30] sm:$0xf]
      %v1376 = vld [vmem:[#allocation2 + $0x38] sm:$0xf]
      %v1377 = vld [vmem:[%s6] sm:$0x3]
      %v1378 = vld [vmem:[%s1157] sm:$0xf]
      %v1379 = vld [vmem:[%s1157 + $0x8] sm:$0xf]
      %v1380 = vld [vmem:[%s1157 + $0x10] sm:$0xf]
      %v1381 = vld [vmem:[%s1157 + $0x18] sm:$0xf]
      %v1382 = vld [vmem:[%s1157 + $0x20] sm:$0xf]
      %v1383 = vld [vmem:[%s1157 + $0x28] sm:$0xf]
      %v1384 = vld [vmem:[%s1157 + $0x30] sm:$0xf]
      %v1385 = vld [vmem:[%s1157 + $0x38] sm:$0xf]
      %s1386 = scalar_lea.vmem %s6, 2
      %v1387 = vld [vmem:[%s1386] sm:$0x3]
      %v1396 = vunpack.c.l.b16 %v1378
      %v1397 = vunpack.c.l.b16 %v1379
      %v1398 = vunpack.c.l.b16 %v1380
      %v1399 = vunpack.c.l.b16 %v1381
      %v1400 = vunpack.c.l.b16 %v1382
      %v1401 = vunpack.c.l.b16 %v1383
      %v1402 = vunpack.c.l.b16 %v1384
      %v1403 = vunpack.c.l.b16 %v1385
      %v1404 = vpack.c.b16 %v1397, %v1396
      %v1405 = vpack.c.b16 %v1399, %v1398
      %v1406 = vpack.c.b16 %v1401, %v1400
      %v1407 = vpack.c.b16 %v1403, %v1402
      %vm1408 = vcmask 31744
      %v1410 = vsel %vm1408, %v1404, 0
      %v1413 = vsel %vm1408, %v1405, 0
      %v1416 = vsel %vm1408, %v1406, 0
      %v1419 = vsel %vm1408, %v1407, 0
      %vm1421 = vcmask 1041408
      %v1423 = vsel %vm1421, %v1387, 0
      %1425 = vmatprep.subr.bf16.mxu0 0
      %1426 = vmatpush1.bf16.msra.mxu0 0
      %1427 = vmatprep.subr.bf16.mxu0 0
      %1428 = vmatpush1.bf16.msra.mxu0 0
      %1429 = vmatprep.subr.bf16.mxu0 0
      %1430 = vmatpush1.bf16.msra.mxu0 0
      %1431 = vmatprep.subr.bf16.mxu0 0
      %1432 = vmatpush1.bf16.msra.mxu0 0
      %1433 = vmatprep.subr.bf16.mxu0 0
      %1434 = vmatpush1.bf16.msra.mxu0 0
      %1435 = vmatprep.subr.bf16.mxu0 0
      %1436 = vmatpush1.bf16.msra.mxu0 0
      %1437 = vmatprep.subr.bf16.mxu0 0
      %1438 = vmatpush1.bf16.msra.mxu0 0
      %1439 = vmatprep.subr.bf16.mxu0 0
      %1440 = vmatpush1.bf16.msra.mxu0 %v1423
      %1441 = vmatprep.subr.bf16.mxu0 0
      %1442 = vmatpush2.bf16.msra.mxu0 0
      %1443 = vmatprep.subr.bf16.mxu0 0
      %1444 = vmatpush2.bf16.msra.mxu0 0
      %1445 = vmatprep.subr.bf16.mxu0 0
      %1446 = vmatpush2.bf16.msra.mxu0 0
      %1447 = vmatprep.subr.bf16.mxu0 0
      %1448 = vmatpush2.bf16.msra.mxu0 0
      %1449 = vmatprep.subr.bf16.mxu0 0
      %1450 = vmatpush2.bf16.msra.mxu0 0
      %1451 = vmatprep.subr.bf16.mxu0 0
      %1452 = vmatpush2.bf16.msra.mxu0 0
      %1453 = vmatprep.subr.bf16.mxu0 0
      %1454 = vmatpush2.bf16.msra.mxu0 0
      %1455 = vmatprep.subr.bf16.mxu0 0
      %1456 = vmatpush2.bf16.msra.mxu0 0
      %1457 = vmatprep.mubr.bf16.mxu0 0
      %1458 = vmatmul.mubr.bf16.gmra.mxu0 %v1410
      %v1459 = vpop.f32.mrf.mxu0
      %v1460 = vadd.f32 0.0, %v1459
      %v1461 = vpop.f32.mrf.mxu0
      %v1462 = vpop.f32.mrf.mxu0
      %v1463 = vadd.f32 0.0, %v1462
      %v1464 = vpop.f32.mrf.mxu0
      %1465 = vmatprep.mubr.bf16.mxu0 0
      %1466 = vmatmul.mubr.bf16.gmra.mxu0 %v1413
      %v1467 = vpop.f32.mrf.mxu0
      %v1468 = vadd.f32 0.0, %v1467
      %v1469 = vpop.f32.mrf.mxu0
      %v1470 = vpop.f32.mrf.mxu0
      %v1471 = vadd.f32 0.0, %v1470
      %v1472 = vpop.f32.mrf.mxu0
      %1473 = vmatprep.mubr.bf16.mxu0 0
      %1474 = vmatmul.mubr.bf16.gmra.mxu0 %v1416
      %v1475 = vpop.f32.mrf.mxu0
      %v1476 = vadd.f32 0.0, %v1475
      %v1477 = vpop.f32.mrf.mxu0
      %v1478 = vpop.f32.mrf.mxu0
      %v1479 = vadd.f32 0.0, %v1478
      %v1480 = vpop.f32.mrf.mxu0
      %1481 = vmatprep.mubr.bf16.mxu0 0
      %1482 = vmatmul.mubr.bf16.gmra.mxu0 %v1419
      %v1483 = vpop.f32.mrf.mxu0
      %v1484 = vadd.f32 0.0, %v1483
      %v1485 = vpop.f32.mrf.mxu0
      %v1486 = vpop.f32.mrf.mxu0
      %v1487 = vadd.f32 0.0, %v1486
      %v1488 = vpop.f32.mrf.mxu0
      %1489 = vdwg.mxu0
      %v1498 = vunpack.c.l.b16 %v1369
      %v1499 = vunpack.c.l.b16 %v1370
      %v1500 = vunpack.c.l.b16 %v1371
      %v1501 = vunpack.c.l.b16 %v1372
      %v1502 = vunpack.c.l.b16 %v1373
      %v1503 = vunpack.c.l.b16 %v1374
      %v1504 = vunpack.c.l.b16 %v1375
      %v1505 = vunpack.c.l.b16 %v1376
      %v1506 = vpack.c.b16 %v1499, %v1498
      %v1507 = vpack.c.b16 %v1501, %v1500
      %v1508 = vpack.c.b16 %v1503, %v1502
      %v1509 = vpack.c.b16 %v1505, %v1504
      %v1511 = vsel %vm1408, %v1506, 0
      %v1514 = vsel %vm1408, %v1507, 0
      %v1517 = vsel %vm1408, %v1508, 0
      %v1520 = vsel %vm1408, %v1509, 0
      %v1523 = vsel %vm1421, %v1377, 0
      %1525 = vmatprep.subr.bf16.mxu0 0
      %1526 = vmatpush1.bf16.msra.mxu0 0
      %1527 = vmatprep.subr.bf16.mxu0 0
      %1528 = vmatpush1.bf16.msra.mxu0 0
      %1529 = vmatprep.subr.bf16.mxu0 0
      %1530 = vmatpush1.bf16.msra.mxu0 0
      %1531 = vmatprep.subr.bf16.mxu0 0
      %1532 = vmatpush1.bf16.msra.mxu0 0
      %1533 = vmatprep.subr.bf16.mxu0 0
      %1534 = vmatpush1.bf16.msra.mxu0 0
      %1535 = vmatprep.subr.bf16.mxu0 0
      %1536 = vmatpush1.bf16.msra.mxu0 0
      %1537 = vmatprep.subr.bf16.mxu0 0
      %1538 = vmatpush1.bf16.msra.mxu0 0
      %1539 = vmatprep.subr.bf16.mxu0 0
      %1540 = vmatpush1.bf16.msra.mxu0 %v1523
      %1541 = vmatprep.subr.bf16.mxu0 0
      %1542 = vmatpush2.bf16.msra.mxu0 0
      %1543 = vmatprep.subr.bf16.mxu0 0
      %1544 = vmatpush2.bf16.msra.mxu0 0
      %1545 = vmatprep.subr.bf16.mxu0 0
      %1546 = vmatpush2.bf16.msra.mxu0 0
      %1547 = vmatprep.subr.bf16.mxu0 0
      %1548 = vmatpush2.bf16.msra.mxu0 0
      %1549 = vmatprep.subr.bf16.mxu0 0
      %1550 = vmatpush2.bf16.msra.mxu0 0
      %1551 = vmatprep.subr.bf16.mxu0 0
      %1552 = vmatpush2.bf16.msra.mxu0 0
      %1553 = vmatprep.subr.bf16.mxu0 0
      %1554 = vmatpush2.bf16.msra.mxu0 0
      %1555 = vmatprep.subr.bf16.mxu0 0
      %1556 = vmatpush2.bf16.msra.mxu0 0
      %1557 = vmatprep.mubr.bf16.mxu0 0
      %1558 = vmatmul.mubr.bf16.gmra.mxu0 %v1511
      %v1559 = vpop.f32.mrf.mxu0
      %v1560 = vadd.f32 %v1460, %v1559
      %v1561 = vpop.f32.mrf.mxu0
      %v1562 = vpop.f32.mrf.mxu0
      %v1563 = vadd.f32 %v1463, %v1562
      %v1564 = vpop.f32.mrf.mxu0
      %1565 = vmatprep.mubr.bf16.mxu0 0
      %1566 = vmatmul.mubr.bf16.gmra.mxu0 %v1514
      %v1567 = vpop.f32.mrf.mxu0
      %v1568 = vadd.f32 %v1468, %v1567
      %v1569 = vpop.f32.mrf.mxu0
      %v1570 = vpop.f32.mrf.mxu0
      %v1571 = vadd.f32 %v1471, %v1570
      %v1572 = vpop.f32.mrf.mxu0
      %1573 = vmatprep.mubr.bf16.mxu0 0
      %1574 = vmatmul.mubr.bf16.gmra.mxu0 %v1517
      %v1575 = vpop.f32.mrf.mxu0
      %v1576 = vadd.f32 %v1476, %v1575
      %v1577 = vpop.f32.mrf.mxu0
      %v1578 = vpop.f32.mrf.mxu0
      %v1579 = vadd.f32 %v1479, %v1578
      %v1580 = vpop.f32.mrf.mxu0
      %1581 = vmatprep.mubr.bf16.mxu0 0
      %1582 = vmatmul.mubr.bf16.gmra.mxu0 %v1520
      %v1583 = vpop.f32.mrf.mxu0
      %v1584 = vadd.f32 %v1484, %v1583
      %v1585 = vpop.f32.mrf.mxu0
      %v1586 = vpop.f32.mrf.mxu0
      %v1587 = vadd.f32 %v1487, %v1586
      %v1588 = vpop.f32.mrf.mxu0
      %1589 = vdwg.mxu0
      %v1590 = vld [vmem:[#allocation2] sm:$0xf]
      %v1591 = vld [vmem:[#allocation2 + $0x4] sm:$0x1]
      %v1592 = vld [vmem:[#allocation2 + $0x8] sm:$0xf]
      %v1593 = vld [vmem:[#allocation2 + $0xc] sm:$0x1]
      %v1594 = vld [vmem:[#allocation2 + $0x10] sm:$0xf]
      %v1595 = vld [vmem:[#allocation2 + $0x14] sm:$0x1]
      %v1596 = vld [vmem:[#allocation2 + $0x18] sm:$0xf]
      %v1597 = vld [vmem:[#allocation2 + $0x1c] sm:$0x1]
      %v1598 = vld [vmem:[#allocation2 + $0x20] sm:$0xf]
      %v1599 = vld [vmem:[#allocation2 + $0x24] sm:$0x1]
      %v1600 = vld [vmem:[#allocation2 + $0x28] sm:$0xf]
      %v1601 = vld [vmem:[#allocation2 + $0x2c] sm:$0x1]
      %v1602 = vld [vmem:[#allocation2 + $0x30] sm:$0xf]
      %v1603 = vld [vmem:[#allocation2 + $0x34] sm:$0x1]
      %v1604 = vld [vmem:[#allocation2 + $0x38] sm:$0xf]
      %v1605 = vld [vmem:[#allocation2 + $0x3c] sm:$0x1]
      %vm1606 = vsmask.f32 3328
      %vm1607 = vsmask.f32 7440
      %vm1608 = vmor %vm1606, %vm1607
      %v1610 = vshrl.u32 %v1590, 16
      %v1612 = vrot.slane %v1610, 4
      %v1613 = vshll.u32 %v1590, 16
      %v1615 = vrot.slane %v1613, 5
      %v1616 = vor.u32 %v1612, %v1615
      %v1617 = vrot.slane %v1616, 4
      %v1619 = vshll.u32 %v1591, 16
      %v1621 = vrot.slane %v1619, 5
      %v1622 = vsel %vm1608, %v1617, %v1621
      %v1624 = vshrl.u32 %v1592, 16
      %v1626 = vrot.slane %v1624, 4
      %v1627 = vshll.u32 %v1592, 16
      %v1629 = vrot.slane %v1627, 5
      %v1630 = vor.u32 %v1626, %v1629
      %v1631 = vrot.slane %v1630, 4
      %v1633 = vshll.u32 %v1593, 16
      %v1635 = vrot.slane %v1633, 5
      %v1636 = vsel %vm1608, %v1631, %v1635
      %v1638 = vshrl.u32 %v1594, 16
      %v1640 = vrot.slane %v1638, 4
      %v1641 = vshll.u32 %v1594, 16
      %v1643 = vrot.slane %v1641, 5
      %v1644 = vor.u32 %v1640, %v1643
      %v1645 = vrot.slane %v1644, 4
      %v1647 = vshll.u32 %v1595, 16
      %v1649 = vrot.slane %v1647, 5
      %v1650 = vsel %vm1608, %v1645, %v1649
      %v1652 = vshrl.u32 %v1596, 16
      %v1654 = vrot.slane %v1652, 4
      %v1655 = vshll.u32 %v1596, 16
      %v1657 = vrot.slane %v1655, 5
      %v1658 = vor.u32 %v1654, %v1657
      %v1659 = vrot.slane %v1658, 4
      %v1661 = vshll.u32 %v1597, 16
      %v1663 = vrot.slane %v1661, 5
      %v1664 = vsel %vm1608, %v1659, %v1663
      %v1666 = vshrl.u32 %v1598, 16
      %v1668 = vrot.slane %v1666, 4
      %v1669 = vshll.u32 %v1598, 16
      %v1671 = vrot.slane %v1669, 5
      %v1672 = vor.u32 %v1668, %v1671
      %v1673 = vrot.slane %v1672, 4
      %v1675 = vshll.u32 %v1599, 16
      %v1677 = vrot.slane %v1675, 5
      %v1678 = vsel %vm1608, %v1673, %v1677
      %v1680 = vshrl.u32 %v1600, 16
      %v1682 = vrot.slane %v1680, 4
      %v1683 = vshll.u32 %v1600, 16
      %v1685 = vrot.slane %v1683, 5
      %v1686 = vor.u32 %v1682, %v1685
      %v1687 = vrot.slane %v1686, 4
      %v1689 = vshll.u32 %v1601, 16
      %v1691 = vrot.slane %v1689, 5
      %v1692 = vsel %vm1608, %v1687, %v1691
      %v1694 = vshrl.u32 %v1602, 16
      %v1696 = vrot.slane %v1694, 4
      %v1697 = vshll.u32 %v1602, 16
      %v1699 = vrot.slane %v1697, 5
      %v1700 = vor.u32 %v1696, %v1699
      %v1701 = vrot.slane %v1700, 4
      %v1703 = vshll.u32 %v1603, 16
      %v1705 = vrot.slane %v1703, 5
      %v1706 = vsel %vm1608, %v1701, %v1705
      %v1708 = vshrl.u32 %v1604, 16
      %v1710 = vrot.slane %v1708, 4
      %v1711 = vshll.u32 %v1604, 16
      %v1713 = vrot.slane %v1711, 5
      %v1714 = vor.u32 %v1710, %v1713
      %v1715 = vrot.slane %v1714, 4
      %v1717 = vshll.u32 %v1605, 16
      %v1719 = vrot.slane %v1717, 5
      %v1720 = vsel %vm1608, %v1715, %v1719
      %s1721 = scalar_lea.vmem %s6, 4
      %v1722 = vld [vmem:[%s1721] sm:$0x3]
      %v1723 = vunpack.c.l.b16 %v1622
      %v1724 = vunpack.c.l.b16 %v1636
      %v1725 = vunpack.c.l.b16 %v1650
      %v1726 = vunpack.c.l.b16 %v1664
      %v1727 = vunpack.c.l.b16 %v1678
      %v1728 = vunpack.c.l.b16 %v1692
      %v1729 = vunpack.c.l.b16 %v1706
      %v1730 = vunpack.c.l.b16 %v1720
      %v1731 = vpack.c.b16 %v1724, %v1723
      %v1732 = vpack.c.b16 %v1726, %v1725
      %v1733 = vpack.c.b16 %v1728, %v1727
      %v1734 = vpack.c.b16 %v1730, %v1729
      %v1736 = vsel %vm1408, %v1731, 0
      %v1739 = vsel %vm1408, %v1732, 0
      %v1742 = vsel %vm1408, %v1733, 0
      %v1745 = vsel %vm1408, %v1734, 0
      %v1748 = vsel %vm1421, %v1722, 0
      %1750 = vmatprep.subr.bf16.mxu0 0
      %1751 = vmatpush1.bf16.msra.mxu0 0
      %1752 = vmatprep.subr.bf16.mxu0 0
      %1753 = vmatpush1.bf16.msra.mxu0 0
      %1754 = vmatprep.subr.bf16.mxu0 0
      %1755 = vmatpush1.bf16.msra.mxu0 0
      %1756 = vmatprep.subr.bf16.mxu0 0
      %1757 = vmatpush1.bf16.msra.mxu0 0
      %1758 = vmatprep.subr.bf16.mxu0 0
      %1759 = vmatpush1.bf16.msra.mxu0 0
      %1760 = vmatprep.subr.bf16.mxu0 0
      %1761 = vmatpush1.bf16.msra.mxu0 0
      %1762 = vmatprep.subr.bf16.mxu0 0
      %1763 = vmatpush1.bf16.msra.mxu0 0
      %1764 = vmatprep.subr.bf16.mxu0 0
      %1765 = vmatpush1.bf16.msra.mxu0 %v1748
      %1766 = vmatprep.subr.bf16.mxu0 0
      %1767 = vmatpush2.bf16.msra.mxu0 0
      %1768 = vmatprep.subr.bf16.mxu0 0
      %1769 = vmatpush2.bf16.msra.mxu0 0
      %1770 = vmatprep.subr.bf16.mxu0 0
      %1771 = vmatpush2.bf16.msra.mxu0 0
      %1772 = vmatprep.subr.bf16.mxu0 0
      %1773 = vmatpush2.bf16.msra.mxu0 0
      %1774 = vmatprep.subr.bf16.mxu0 0
      %1775 = vmatpush2.bf16.msra.mxu0 0
      %1776 = vmatprep.subr.bf16.mxu0 0
      %1777 = vmatpush2.bf16.msra.mxu0 0
      %1778 = vmatprep.subr.bf16.mxu0 0
      %1779 = vmatpush2.bf16.msra.mxu0 0
      %1780 = vmatprep.subr.bf16.mxu0 0
      %1781 = vmatpush2.bf16.msra.mxu0 0
      %1782 = vmatprep.mubr.bf16.mxu0 0
      %1783 = vmatmul.mubr.bf16.gmra.mxu0 %v1736
      %v1784 = vpop.f32.mrf.mxu0
      %v1785 = vadd.f32 0.0, %v1784
      %v1786 = vpop.f32.mrf.mxu0
      %v1787 = vpop.f32.mrf.mxu0
      %v1788 = vadd.f32 0.0, %v1787
      %v1789 = vpop.f32.mrf.mxu0
      %1790 = vmatprep.mubr.bf16.mxu0 0
      %1791 = vmatmul.mubr.bf16.gmra.mxu0 %v1739
      %v1792 = vpop.f32.mrf.mxu0
      %v1793 = vadd.f32 0.0, %v1792
      %v1794 = vpop.f32.mrf.mxu0
      %v1795 = vpop.f32.mrf.mxu0
      %v1796 = vadd.f32 0.0, %v1795
      %v1797 = vpop.f32.mrf.mxu0
      %1798 = vmatprep.mubr.bf16.mxu0 0
      %1799 = vmatmul.mubr.bf16.gmra.mxu0 %v1742
      %v1800 = vpop.f32.mrf.mxu0
      %v1801 = vadd.f32 0.0, %v1800
      %v1802 = vpop.f32.mrf.mxu0
      %v1803 = vpop.f32.mrf.mxu0
      %v1804 = vadd.f32 0.0, %v1803
      %v1805 = vpop.f32.mrf.mxu0
      %1806 = vmatprep.mubr.bf16.mxu0 0
      %1807 = vmatmul.mubr.bf16.gmra.mxu0 %v1745
      %v1808 = vpop.f32.mrf.mxu0
      %v1809 = vadd.f32 0.0, %v1808
      %v1810 = vpop.f32.mrf.mxu0
      %v1811 = vpop.f32.mrf.mxu0
      %v1812 = vadd.f32 0.0, %v1811
      %v1813 = vpop.f32.mrf.mxu0
      %1814 = vdwg.mxu0
      %v1815 = vadd.f32 %v1560, %v1785
      %v1816 = vadd.f32 %v1563, %v1788
      %v1817 = vadd.f32 %v1568, %v1793
      %v1818 = vadd.f32 %v1571, %v1796
      %v1819 = vadd.f32 %v1576, %v1801
      %v1820 = vadd.f32 %v1579, %v1804
      %v1821 = vadd.f32 %v1584, %v1809
      %v1822 = vadd.f32 %v1587, %v1812
      %v1823 = vld [vmem:[%s1036] sm:$0xf]
      %v1824 = vld [vmem:[%s1036 + $0x8] sm:$0xf]
      %v1825 = vld [vmem:[%s1036 + $0x10] sm:$0xf]
      %v1826 = vld [vmem:[%s1036 + $0x18] sm:$0xf]
      %v1827 = vld [vmem:[%s1036 + $0x20] sm:$0xf]
      %v1828 = vld [vmem:[%s1036 + $0x28] sm:$0xf]
      %v1829 = vld [vmem:[%s1036 + $0x30] sm:$0xf]
      %v1830 = vld [vmem:[%s1036 + $0x38] sm:$0xf]
      %s1831 = scalar_lea.vmem %s6, 6
      %v1832 = vld [vmem:[%s1831] sm:$0x3]
      %v1841 = vunpack.c.l.b16 %v1823
      %v1842 = vunpack.c.l.b16 %v1824
      %v1843 = vunpack.c.l.b16 %v1825
      %v1844 = vunpack.c.l.b16 %v1826
      %v1845 = vunpack.c.l.b16 %v1827
      %v1846 = vunpack.c.l.b16 %v1828
      %v1847 = vunpack.c.l.b16 %v1829
      %v1848 = vunpack.c.l.b16 %v1830
      %v1849 = vpack.c.b16 %v1842, %v1841
      %v1850 = vpack.c.b16 %v1844, %v1843
      %v1851 = vpack.c.b16 %v1846, %v1845
      %v1852 = vpack.c.b16 %v1848, %v1847
      %v1854 = vsel %vm1408, %v1849, 0
      %v1857 = vsel %vm1408, %v1850, 0
      %v1860 = vsel %vm1408, %v1851, 0
      %v1863 = vsel %vm1408, %v1852, 0
      %v1866 = vsel %vm1421, %v1832, 0
      %1868 = vmatprep.subr.bf16.mxu0 0
      %1869 = vmatpush1.bf16.msra.mxu0 0
      %1870 = vmatprep.subr.bf16.mxu0 0
      %1871 = vmatpush1.bf16.msra.mxu0 0
      %1872 = vmatprep.subr.bf16.mxu0 0
      %1873 = vmatpush1.bf16.msra.mxu0 0
      %1874 = vmatprep.subr.bf16.mxu0 0
      %1875 = vmatpush1.bf16.msra.mxu0 0
      %1876 = vmatprep.subr.bf16.mxu0 0
      %1877 = vmatpush1.bf16.msra.mxu0 0
      %1878 = vmatprep.subr.bf16.mxu0 0
      %1879 = vmatpush1.bf16.msra.mxu0 0
      %1880 = vmatprep.subr.bf16.mxu0 0
      %1881 = vmatpush1.bf16.msra.mxu0 0
      %1882 = vmatprep.subr.bf16.mxu0 0
      %1883 = vmatpush1.bf16.msra.mxu0 %v1866
      %1884 = vmatprep.subr.bf16.mxu0 0
      %1885 = vmatpush2.bf16.msra.mxu0 0
      %1886 = vmatprep.subr.bf16.mxu0 0
      %1887 = vmatpush2.bf16.msra.mxu0 0
      %1888 = vmatprep.subr.bf16.mxu0 0
      %1889 = vmatpush2.bf16.msra.mxu0 0
      %1890 = vmatprep.subr.bf16.mxu0 0
      %1891 = vmatpush2.bf16.msra.mxu0 0
      %1892 = vmatprep.subr.bf16.mxu0 0
      %1893 = vmatpush2.bf16.msra.mxu0 0
      %1894 = vmatprep.subr.bf16.mxu0 0
      %1895 = vmatpush2.bf16.msra.mxu0 0
      %1896 = vmatprep.subr.bf16.mxu0 0
      %1897 = vmatpush2.bf16.msra.mxu0 0
      %1898 = vmatprep.subr.bf16.mxu0 0
      %1899 = vmatpush2.bf16.msra.mxu0 0
      %1900 = vmatprep.mubr.bf16.mxu0 0
      %1901 = vmatmul.mubr.bf16.gmra.mxu0 %v1854
      %v1902 = vpop.f32.mrf.mxu0
      %v1903 = vadd.f32 0.0, %v1902
      %v1904 = vpop.f32.mrf.mxu0
      %v1905 = vpop.f32.mrf.mxu0
      %v1906 = vadd.f32 0.0, %v1905
      %v1907 = vpop.f32.mrf.mxu0
      %1908 = vmatprep.mubr.bf16.mxu0 0
      %1909 = vmatmul.mubr.bf16.gmra.mxu0 %v1857
      %v1910 = vpop.f32.mrf.mxu0
      %v1911 = vadd.f32 0.0, %v1910
      %v1912 = vpop.f32.mrf.mxu0
      %v1913 = vpop.f32.mrf.mxu0
      %v1914 = vadd.f32 0.0, %v1913
      %v1915 = vpop.f32.mrf.mxu0
      %1916 = vmatprep.mubr.bf16.mxu0 0
      %1917 = vmatmul.mubr.bf16.gmra.mxu0 %v1860
      %v1918 = vpop.f32.mrf.mxu0
      %v1919 = vadd.f32 0.0, %v1918
      %v1920 = vpop.f32.mrf.mxu0
      %v1921 = vpop.f32.mrf.mxu0
      %v1922 = vadd.f32 0.0, %v1921
      %v1923 = vpop.f32.mrf.mxu0
      %1924 = vmatprep.mubr.bf16.mxu0 0
      %1925 = vmatmul.mubr.bf16.gmra.mxu0 %v1863
      %v1926 = vpop.f32.mrf.mxu0
      %v1927 = vadd.f32 0.0, %v1926
      %v1928 = vpop.f32.mrf.mxu0
      %v1929 = vpop.f32.mrf.mxu0
      %v1930 = vadd.f32 0.0, %v1929
      %v1931 = vpop.f32.mrf.mxu0
      %1932 = vdwg.mxu0
      %v1933 = vadd.f32 %v1815, %v1903
      %v1934 = vadd.f32 %v1816, %v1906
      %v1935 = vadd.f32 %v1817, %v1911
      %v1936 = vadd.f32 %v1818, %v1914
      %v1937 = vadd.f32 %v1819, %v1919
      %v1938 = vadd.f32 %v1820, %v1922
      %v1939 = vadd.f32 %v1821, %v1927
      %v1940 = vadd.f32 %v1822, %v1930
      %v1941 = vld [vmem:[%s891] sm:$0xf]
      %v1942 = vld [vmem:[%s891 + $0x8] sm:$0xf]
      %v1943 = vld [vmem:[%s891 + $0x10] sm:$0xf]
      %v1944 = vld [vmem:[%s891 + $0x18] sm:$0xf]
      %v1945 = vld [vmem:[%s891 + $0x20] sm:$0xf]
      %v1946 = vld [vmem:[%s891 + $0x28] sm:$0xf]
      %v1947 = vld [vmem:[%s891 + $0x30] sm:$0xf]
      %v1948 = vld [vmem:[%s891 + $0x38] sm:$0xf]
      %s1949 = scalar_lea.vmem %s6, 8
      %v1950 = vld [vmem:[%s1949] sm:$0x3]
      %v1959 = vunpack.c.l.b16 %v1941
      %v1960 = vunpack.c.l.b16 %v1942
      %v1961 = vunpack.c.l.b16 %v1943
      %v1962 = vunpack.c.l.b16 %v1944
      %v1963 = vunpack.c.l.b16 %v1945
      %v1964 = vunpack.c.l.b16 %v1946
      %v1965 = vunpack.c.l.b16 %v1947
      %v1966 = vunpack.c.l.b16 %v1948
      %v1967 = vpack.c.b16 %v1960, %v1959
      %v1968 = vpack.c.b16 %v1962, %v1961
      %v1969 = vpack.c.b16 %v1964, %v1963
      %v1970 = vpack.c.b16 %v1966, %v1965
      %v1972 = vsel %vm1408, %v1967, 0
      %v1975 = vsel %vm1408, %v1968, 0
      %v1978 = vsel %vm1408, %v1969, 0
      %v1981 = vsel %vm1408, %v1970, 0
      %v1984 = vsel %vm1421, %v1950, 0
      %1986 = vmatprep.subr.bf16.mxu0 0
      %1987 = vmatpush1.bf16.msra.mxu0 0
      %1988 = vmatprep.subr.bf16.mxu0 0
      %1989 = vmatpush1.bf16.msra.mxu0 0
      %1990 = vmatprep.subr.bf16.mxu0 0
      %1991 = vmatpush1.bf16.msra.mxu0 0
      %1992 = vmatprep.subr.bf16.mxu0 0
      %1993 = vmatpush1.bf16.msra.mxu0 0
      %1994 = vmatprep.subr.bf16.mxu0 0
      %1995 = vmatpush1.bf16.msra.mxu0 0
      %1996 = vmatprep.subr.bf16.mxu0 0
      %1997 = vmatpush1.bf16.msra.mxu0 0
      %1998 = vmatprep.subr.bf16.mxu0 0
      %1999 = vmatpush1.bf16.msra.mxu0 0
      %2000 = vmatprep.subr.bf16.mxu0 0
      %2001 = vmatpush1.bf16.msra.mxu0 %v1984
      %2002 = vmatprep.subr.bf16.mxu0 0
      %2003 = vmatpush2.bf16.msra.mxu0 0
      %2004 = vmatprep.subr.bf16.mxu0 0
      %2005 = vmatpush2.bf16.msra.mxu0 0
      %2006 = vmatprep.subr.bf16.mxu0 0
      %2007 = vmatpush2.bf16.msra.mxu0 0
      %2008 = vmatprep.subr.bf16.mxu0 0
      %2009 = vmatpush2.bf16.msra.mxu0 0
      %2010 = vmatprep.subr.bf16.mxu0 0
      %2011 = vmatpush2.bf16.msra.mxu0 0
      %2012 = vmatprep.subr.bf16.mxu0 0
      %2013 = vmatpush2.bf16.msra.mxu0 0
      %2014 = vmatprep.subr.bf16.mxu0 0
      %2015 = vmatpush2.bf16.msra.mxu0 0
      %2016 = vmatprep.subr.bf16.mxu0 0
      %2017 = vmatpush2.bf16.msra.mxu0 0
      %2018 = vmatprep.mubr.bf16.mxu0 0
      %2019 = vmatmul.mubr.bf16.gmra.mxu0 %v1972
      %v2020 = vpop.f32.mrf.mxu0
      %v2021 = vadd.f32 0.0, %v2020
      %v2022 = vpop.f32.mrf.mxu0
      %v2023 = vpop.f32.mrf.mxu0
      %v2024 = vadd.f32 0.0, %v2023
      %v2025 = vpop.f32.mrf.mxu0
      %2026 = vmatprep.mubr.bf16.mxu0 0
      %2027 = vmatmul.mubr.bf16.gmra.mxu0 %v1975
      %v2028 = vpop.f32.mrf.mxu0
      %v2029 = vadd.f32 0.0, %v2028
      %v2030 = vpop.f32.mrf.mxu0
      %v2031 = vpop.f32.mrf.mxu0
      %v2032 = vadd.f32 0.0, %v2031
      %v2033 = vpop.f32.mrf.mxu0
      %2034 = vmatprep.mubr.bf16.mxu0 0
      %2035 = vmatmul.mubr.bf16.gmra.mxu0 %v1978
      %v2036 = vpop.f32.mrf.mxu0
      %v2037 = vadd.f32 0.0, %v2036
      %v2038 = vpop.f32.mrf.mxu0
      %v2039 = vpop.f32.mrf.mxu0
      %v2040 = vadd.f32 0.0, %v2039
      %v2041 = vpop.f32.mrf.mxu0
      %2042 = vmatprep.mubr.bf16.mxu0 0
      %2043 = vmatmul.mubr.bf16.gmra.mxu0 %v1981
      %v2044 = vpop.f32.mrf.mxu0
      %v2045 = vadd.f32 0.0, %v2044
      %v2046 = vpop.f32.mrf.mxu0
      %v2047 = vpop.f32.mrf.mxu0
      %v2048 = vadd.f32 0.0, %v2047
      %v2049 = vpop.f32.mrf.mxu0
      %2050 = vdwg.mxu0
      %v2051 = vadd.f32 %v1933, %v2021
      %v2052 = vadd.f32 %v1934, %v2024
      %v2053 = vadd.f32 %v1935, %v2029
      %v2054 = vadd.f32 %v1936, %v2032
      %v2055 = vadd.f32 %v1937, %v2037
      %v2056 = vadd.f32 %v1938, %v2040
      %v2057 = vadd.f32 %v1939, %v2045
      %v2058 = vadd.f32 %v1940, %v2048
      %v2059 = vld [vmem:[%s1036] sm:$0xf]
      %v2060 = vld [vmem:[%s1036 + $0x4] sm:$0x1]
      %v2061 = vld [vmem:[%s1036 + $0x8] sm:$0xf]
      %v2062 = vld [vmem:[%s1036 + $0xc] sm:$0x1]
      %v2063 = vld [vmem:[%s1036 + $0x10] sm:$0xf]
      %v2064 = vld [vmem:[%s1036 + $0x14] sm:$0x1]
      %v2065 = vld [vmem:[%s1036 + $0x18] sm:$0xf]
      %v2066 = vld [vmem:[%s1036 + $0x1c] sm:$0x1]
      %v2067 = vld [vmem:[%s1036 + $0x20] sm:$0xf]
      %v2068 = vld [vmem:[%s1036 + $0x24] sm:$0x1]
      %v2069 = vld [vmem:[%s1036 + $0x28] sm:$0xf]
      %v2070 = vld [vmem:[%s1036 + $0x2c] sm:$0x1]
      %v2071 = vld [vmem:[%s1036 + $0x30] sm:$0xf]
      %v2072 = vld [vmem:[%s1036 + $0x34] sm:$0x1]
      %v2073 = vld [vmem:[%s1036 + $0x38] sm:$0xf]
      %v2074 = vld [vmem:[%s1036 + $0x3c] sm:$0x1]
      %v2076 = vshrl.u32 %v2059, 16
      %v2078 = vrot.slane %v2076, 4
      %v2079 = vshll.u32 %v2059, 16
      %v2081 = vrot.slane %v2079, 5
      %v2082 = vor.u32 %v2078, %v2081
      %v2083 = vrot.slane %v2082, 4
      %v2085 = vshll.u32 %v2060, 16
      %v2087 = vrot.slane %v2085, 5
      %v2088 = vsel %vm1608, %v2083, %v2087
      %v2090 = vshrl.u32 %v2061, 16
      %v2092 = vrot.slane %v2090, 4
      %v2093 = vshll.u32 %v2061, 16
      %v2095 = vrot.slane %v2093, 5
      %v2096 = vor.u32 %v2092, %v2095
      %v2097 = vrot.slane %v2096, 4
      %v2099 = vshll.u32 %v2062, 16
      %v2101 = vrot.slane %v2099, 5
      %v2102 = vsel %vm1608, %v2097, %v2101
      %v2104 = vshrl.u32 %v2063, 16
      %v2106 = vrot.slane %v2104, 4
      %v2107 = vshll.u32 %v2063, 16
      %v2109 = vrot.slane %v2107, 5
      %v2110 = vor.u32 %v2106, %v2109
      %v2111 = vrot.slane %v2110, 4
      %v2113 = vshll.u32 %v2064, 16
      %v2115 = vrot.slane %v2113, 5
      %v2116 = vsel %vm1608, %v2111, %v2115
      %v2118 = vshrl.u32 %v2065, 16
      %v2120 = vrot.slane %v2118, 4
      %v2121 = vshll.u32 %v2065, 16
      %v2123 = vrot.slane %v2121, 5
      %v2124 = vor.u32 %v2120, %v2123
      %v2125 = vrot.slane %v2124, 4
      %v2127 = vshll.u32 %v2066, 16
      %v2129 = vrot.slane %v2127, 5
      %v2130 = vsel %vm1608, %v2125, %v2129
      %v2132 = vshrl.u32 %v2067, 16
      %v2134 = vrot.slane %v2132, 4
      %v2135 = vshll.u32 %v2067, 16
      %v2137 = vrot.slane %v2135, 5
      %v2138 = vor.u32 %v2134, %v2137
      %v2139 = vrot.slane %v2138, 4
      %v2141 = vshll.u32 %v2068, 16
      %v2143 = vrot.slane %v2141, 5
      %v2144 = vsel %vm1608, %v2139, %v2143
      %v2146 = vshrl.u32 %v2069, 16
      %v2148 = vrot.slane %v2146, 4
      %v2149 = vshll.u32 %v2069, 16
      %v2151 = vrot.slane %v2149, 5
      %v2152 = vor.u32 %v2148, %v2151
      %v2153 = vrot.slane %v2152, 4
      %v2155 = vshll.u32 %v2070, 16
      %v2157 = vrot.slane %v2155, 5
      %v2158 = vsel %vm1608, %v2153, %v2157
      %v2160 = vshrl.u32 %v2071, 16
      %v2162 = vrot.slane %v2160, 4
      %v2163 = vshll.u32 %v2071, 16
      %v2165 = vrot.slane %v2163, 5
      %v2166 = vor.u32 %v2162, %v2165
      %v2167 = vrot.slane %v2166, 4
      %v2169 = vshll.u32 %v2072, 16
      %v2171 = vrot.slane %v2169, 5
      %v2172 = vsel %vm1608, %v2167, %v2171
      %v2174 = vshrl.u32 %v2073, 16
      %v2176 = vrot.slane %v2174, 4
      %v2177 = vshll.u32 %v2073, 16
      %v2179 = vrot.slane %v2177, 5
      %v2180 = vor.u32 %v2176, %v2179
      %v2181 = vrot.slane %v2180, 4
      %v2183 = vshll.u32 %v2074, 16
      %v2185 = vrot.slane %v2183, 5
      %v2186 = vsel %vm1608, %v2181, %v2185
      %s2187 = scalar_lea.vmem %s6, 10
      %v2188 = vld [vmem:[%s2187] sm:$0x3]
      %v2189 = vunpack.c.l.b16 %v2088
      %v2190 = vunpack.c.l.b16 %v2102
      %v2191 = vunpack.c.l.b16 %v2116
      %v2192 = vunpack.c.l.b16 %v2130
      %v2193 = vunpack.c.l.b16 %v2144
      %v2194 = vunpack.c.l.b16 %v2158
      %v2195 = vunpack.c.l.b16 %v2172
      %v2196 = vunpack.c.l.b16 %v2186
      %v2197 = vpack.c.b16 %v2190, %v2189
      %v2198 = vpack.c.b16 %v2192, %v2191
      %v2199 = vpack.c.b16 %v2194, %v2193
      %v2200 = vpack.c.b16 %v2196, %v2195
      %v2202 = vsel %vm1408, %v2197, 0
      %v2205 = vsel %vm1408, %v2198, 0
      %v2208 = vsel %vm1408, %v2199, 0
      %v2211 = vsel %vm1408, %v2200, 0
      %v2214 = vsel %vm1421, %v2188, 0
      %2216 = vmatprep.subr.bf16.mxu0 0
      %2217 = vmatpush1.bf16.msra.mxu0 0
      %2218 = vmatprep.subr.bf16.mxu0 0
      %2219 = vmatpush1.bf16.msra.mxu0 0
      %2220 = vmatprep.subr.bf16.mxu0 0
      %2221 = vmatpush1.bf16.msra.mxu0 0
      %2222 = vmatprep.subr.bf16.mxu0 0
      %2223 = vmatpush1.bf16.msra.mxu0 0
      %2224 = vmatprep.subr.bf16.mxu0 0
      %2225 = vmatpush1.bf16.msra.mxu0 0
      %2226 = vmatprep.subr.bf16.mxu0 0
      %2227 = vmatpush1.bf16.msra.mxu0 0
      %2228 = vmatprep.subr.bf16.mxu0 0
      %2229 = vmatpush1.bf16.msra.mxu0 0
      %2230 = vmatprep.subr.bf16.mxu0 0
      %2231 = vmatpush1.bf16.msra.mxu0 %v2214
      %2232 = vmatprep.subr.bf16.mxu0 0
      %2233 = vmatpush2.bf16.msra.mxu0 0
      %2234 = vmatprep.subr.bf16.mxu0 0
      %2235 = vmatpush2.bf16.msra.mxu0 0
      %2236 = vmatprep.subr.bf16.mxu0 0
      %2237 = vmatpush2.bf16.msra.mxu0 0
      %2238 = vmatprep.subr.bf16.mxu0 0
      %2239 = vmatpush2.bf16.msra.mxu0 0
      %2240 = vmatprep.subr.bf16.mxu0 0
      %2241 = vmatpush2.bf16.msra.mxu0 0
      %2242 = vmatprep.subr.bf16.mxu0 0
      %2243 = vmatpush2.bf16.msra.mxu0 0
      %2244 = vmatprep.subr.bf16.mxu0 0
      %2245 = vmatpush2.bf16.msra.mxu0 0
      %2246 = vmatprep.subr.bf16.mxu0 0
      %2247 = vmatpush2.bf16.msra.mxu0 0
      %2248 = vmatprep.mubr.bf16.mxu0 0
      %2249 = vmatmul.mubr.bf16.gmra.mxu0 %v2202
      %v2250 = vpop.f32.mrf.mxu0
      %v2251 = vadd.f32 0.0, %v2250
      %v2252 = vpop.f32.mrf.mxu0
      %v2253 = vpop.f32.mrf.mxu0
      %v2254 = vadd.f32 0.0, %v2253
      %v2255 = vpop.f32.mrf.mxu0
      %2256 = vmatprep.mubr.bf16.mxu0 0
      %2257 = vmatmul.mubr.bf16.gmra.mxu0 %v2205
      %v2258 = vpop.f32.mrf.mxu0
      %v2259 = vadd.f32 0.0, %v2258
      %v2260 = vpop.f32.mrf.mxu0
      %v2261 = vpop.f32.mrf.mxu0
      %v2262 = vadd.f32 0.0, %v2261
      %v2263 = vpop.f32.mrf.mxu0
      %2264 = vmatprep.mubr.bf16.mxu0 0
      %2265 = vmatmul.mubr.bf16.gmra.mxu0 %v2208
      %v2266 = vpop.f32.mrf.mxu0
      %v2267 = vadd.f32 0.0, %v2266
      %v2268 = vpop.f32.mrf.mxu0
      %v2269 = vpop.f32.mrf.mxu0
      %v2270 = vadd.f32 0.0, %v2269
      %v2271 = vpop.f32.mrf.mxu0
      %2272 = vmatprep.mubr.bf16.mxu0 0
      %2273 = vmatmul.mubr.bf16.gmra.mxu0 %v2211
      %v2274 = vpop.f32.mrf.mxu0
      %v2275 = vadd.f32 0.0, %v2274
      %v2276 = vpop.f32.mrf.mxu0
      %v2277 = vpop.f32.mrf.mxu0
      %v2278 = vadd.f32 0.0, %v2277
      %v2279 = vpop.f32.mrf.mxu0
      %2280 = vdwg.mxu0
      %v2281 = vadd.f32 %v2051, %v2251
      %v2282 = vadd.f32 %v2052, %v2254
      %v2283 = vadd.f32 %v2053, %v2259
      %v2284 = vadd.f32 %v2054, %v2262
      %v2285 = vadd.f32 %v2055, %v2267
      %v2286 = vadd.f32 %v2056, %v2270
      %v2287 = vadd.f32 %v2057, %v2275
      %v2288 = vadd.f32 %v2058, %v2278
      %v2289 = vld [vmem:[%s1289] sm:$0xf]
      %v2290 = vld [vmem:[%s1289 + $0x8] sm:$0xf]
      %v2291 = vld [vmem:[%s1289 + $0x10] sm:$0xf]
      %v2292 = vld [vmem:[%s1289 + $0x18] sm:$0xf]
      %v2293 = vld [vmem:[%s1289 + $0x20] sm:$0xf]
      %v2294 = vld [vmem:[%s1289 + $0x28] sm:$0xf]
      %v2295 = vld [vmem:[%s1289 + $0x30] sm:$0xf]
      %v2296 = vld [vmem:[%s1289 + $0x38] sm:$0xf]
      %s2297 = scalar_lea.vmem %s6, 12
      %v2298 = vld [vmem:[%s2297] sm:$0x3]
      %v2307 = vunpack.c.l.b16 %v2289
      %v2308 = vunpack.c.l.b16 %v2290
      %v2309 = vunpack.c.l.b16 %v2291
      %v2310 = vunpack.c.l.b16 %v2292
      %v2311 = vunpack.c.l.b16 %v2293
      %v2312 = vunpack.c.l.b16 %v2294
      %v2313 = vunpack.c.l.b16 %v2295
      %v2314 = vunpack.c.l.b16 %v2296
      %v2315 = vpack.c.b16 %v2308, %v2307
      %v2316 = vpack.c.b16 %v2310, %v2309
      %v2317 = vpack.c.b16 %v2312, %v2311
      %v2318 = vpack.c.b16 %v2314, %v2313
      %v2320 = vsel %vm1408, %v2315, 0
      %v2323 = vsel %vm1408, %v2316, 0
      %v2326 = vsel %vm1408, %v2317, 0
      %v2329 = vsel %vm1408, %v2318, 0
      %v2332 = vsel %vm1421, %v2298, 0
      %2334 = vmatprep.subr.bf16.mxu0 0
      %2335 = vmatpush1.bf16.msra.mxu0 0
      %2336 = vmatprep.subr.bf16.mxu0 0
      %2337 = vmatpush1.bf16.msra.mxu0 0
      %2338 = vmatprep.subr.bf16.mxu0 0
      %2339 = vmatpush1.bf16.msra.mxu0 0
      %2340 = vmatprep.subr.bf16.mxu0 0
      %2341 = vmatpush1.bf16.msra.mxu0 0
      %2342 = vmatprep.subr.bf16.mxu0 0
      %2343 = vmatpush1.bf16.msra.mxu0 0
      %2344 = vmatprep.subr.bf16.mxu0 0
      %2345 = vmatpush1.bf16.msra.mxu0 0
      %2346 = vmatprep.subr.bf16.mxu0 0
      %2347 = vmatpush1.bf16.msra.mxu0 0
      %2348 = vmatprep.subr.bf16.mxu0 0
      %2349 = vmatpush1.bf16.msra.mxu0 %v2332
      %2350 = vmatprep.subr.bf16.mxu0 0
      %2351 = vmatpush2.bf16.msra.mxu0 0
      %2352 = vmatprep.subr.bf16.mxu0 0
      %2353 = vmatpush2.bf16.msra.mxu0 0
      %2354 = vmatprep.subr.bf16.mxu0 0
      %2355 = vmatpush2.bf16.msra.mxu0 0
      %2356 = vmatprep.subr.bf16.mxu0 0
      %2357 = vmatpush2.bf16.msra.mxu0 0
      %2358 = vmatprep.subr.bf16.mxu0 0
      %2359 = vmatpush2.bf16.msra.mxu0 0
      %2360 = vmatprep.subr.bf16.mxu0 0
      %2361 = vmatpush2.bf16.msra.mxu0 0
      %2362 = vmatprep.subr.bf16.mxu0 0
      %2363 = vmatpush2.bf16.msra.mxu0 0
      %2364 = vmatprep.subr.bf16.mxu0 0
      %2365 = vmatpush2.bf16.msra.mxu0 0
      %2366 = vmatprep.mubr.bf16.mxu0 0
      %2367 = vmatmul.mubr.bf16.gmra.mxu0 %v2320
      %v2368 = vpop.f32.mrf.mxu0
      %v2369 = vadd.f32 0.0, %v2368
      %v2370 = vpop.f32.mrf.mxu0
      %v2371 = vpop.f32.mrf.mxu0
      %v2372 = vadd.f32 0.0, %v2371
      %v2373 = vpop.f32.mrf.mxu0
      %2374 = vmatprep.mubr.bf16.mxu0 0
      %2375 = vmatmul.mubr.bf16.gmra.mxu0 %v2323
      %v2376 = vpop.f32.mrf.mxu0
      %v2377 = vadd.f32 0.0, %v2376
      %v2378 = vpop.f32.mrf.mxu0
      %v2379 = vpop.f32.mrf.mxu0
      %v2380 = vadd.f32 0.0, %v2379
      %v2381 = vpop.f32.mrf.mxu0
      %2382 = vmatprep.mubr.bf16.mxu0 0
      %2383 = vmatmul.mubr.bf16.gmra.mxu0 %v2326
      %v2384 = vpop.f32.mrf.mxu0
      %v2385 = vadd.f32 0.0, %v2384
      %v2386 = vpop.f32.mrf.mxu0
      %v2387 = vpop.f32.mrf.mxu0
      %v2388 = vadd.f32 0.0, %v2387
      %v2389 = vpop.f32.mrf.mxu0
      %2390 = vmatprep.mubr.bf16.mxu0 0
      %2391 = vmatmul.mubr.bf16.gmra.mxu0 %v2329
      %v2392 = vpop.f32.mrf.mxu0
      %v2393 = vadd.f32 0.0, %v2392
      %v2394 = vpop.f32.mrf.mxu0
      %v2395 = vpop.f32.mrf.mxu0
      %v2396 = vadd.f32 0.0, %v2395
      %v2397 = vpop.f32.mrf.mxu0
      %2398 = vdwg.mxu0
      %v2399 = vadd.f32 %v2281, %v2369
      %v2400 = vadd.f32 %v2282, %v2372
      %v2401 = vadd.f32 %v2283, %v2377
      %v2402 = vadd.f32 %v2284, %v2380
      %v2403 = vadd.f32 %v2285, %v2385
      %v2404 = vadd.f32 %v2286, %v2388
      %v2405 = vadd.f32 %v2287, %v2393
      %v2406 = vadd.f32 %v2288, %v2396
      %v2407 = vld [vmem:[%s1148] sm:$0xf]
      %v2408 = vld [vmem:[%s1148 + $0x8] sm:$0xf]
      %v2409 = vld [vmem:[%s1148 + $0x10] sm:$0xf]
      %v2410 = vld [vmem:[%s1148 + $0x18] sm:$0xf]
      %v2411 = vld [vmem:[%s1148 + $0x20] sm:$0xf]
      %v2412 = vld [vmem:[%s1148 + $0x28] sm:$0xf]
      %v2413 = vld [vmem:[%s1148 + $0x30] sm:$0xf]
      %v2414 = vld [vmem:[%s1148 + $0x38] sm:$0xf]
      %s2415 = scalar_lea.vmem %s6, 14
      %v2416 = vld [vmem:[%s2415] sm:$0x3]
      %v2425 = vunpack.c.l.b16 %v2407
      %v2426 = vunpack.c.l.b16 %v2408
      %v2427 = vunpack.c.l.b16 %v2409
      %v2428 = vunpack.c.l.b16 %v2410
      %v2429 = vunpack.c.l.b16 %v2411
      %v2430 = vunpack.c.l.b16 %v2412
      %v2431 = vunpack.c.l.b16 %v2413
      %v2432 = vunpack.c.l.b16 %v2414
      %v2433 = vpack.c.b16 %v2426, %v2425
      %v2434 = vpack.c.b16 %v2428, %v2427
      %v2435 = vpack.c.b16 %v2430, %v2429
      %v2436 = vpack.c.b16 %v2432, %v2431
      %v2438 = vsel %vm1408, %v2433, 0
      %v2441 = vsel %vm1408, %v2434, 0
      %v2444 = vsel %vm1408, %v2435, 0
      %v2447 = vsel %vm1408, %v2436, 0
      %v2450 = vsel %vm1421, %v2416, 0
      %2452 = vmatprep.subr.bf16.mxu0 0
      %2453 = vmatpush1.bf16.msra.mxu0 0
      %2454 = vmatprep.subr.bf16.mxu0 0
      %2455 = vmatpush1.bf16.msra.mxu0 0
      %2456 = vmatprep.subr.bf16.mxu0 0
      %2457 = vmatpush1.bf16.msra.mxu0 0
      %2458 = vmatprep.subr.bf16.mxu0 0
      %2459 = vmatpush1.bf16.msra.mxu0 0
      %2460 = vmatprep.subr.bf16.mxu0 0
      %2461 = vmatpush1.bf16.msra.mxu0 0
      %2462 = vmatprep.subr.bf16.mxu0 0
      %2463 = vmatpush1.bf16.msra.mxu0 0
      %2464 = vmatprep.subr.bf16.mxu0 0
      %2465 = vmatpush1.bf16.msra.mxu0 0
      %2466 = vmatprep.subr.bf16.mxu0 0
      %2467 = vmatpush1.bf16.msra.mxu0 %v2450
      %2468 = vmatprep.subr.bf16.mxu0 0
      %2469 = vmatpush2.bf16.msra.mxu0 0
      %2470 = vmatprep.subr.bf16.mxu0 0
      %2471 = vmatpush2.bf16.msra.mxu0 0
      %2472 = vmatprep.subr.bf16.mxu0 0
      %2473 = vmatpush2.bf16.msra.mxu0 0
      %2474 = vmatprep.subr.bf16.mxu0 0
      %2475 = vmatpush2.bf16.msra.mxu0 0
      %2476 = vmatprep.subr.bf16.mxu0 0
      %2477 = vmatpush2.bf16.msra.mxu0 0
      %2478 = vmatprep.subr.bf16.mxu0 0
      %2479 = vmatpush2.bf16.msra.mxu0 0
      %2480 = vmatprep.subr.bf16.mxu0 0
      %2481 = vmatpush2.bf16.msra.mxu0 0
      %2482 = vmatprep.subr.bf16.mxu0 0
      %2483 = vmatpush2.bf16.msra.mxu0 0
      %2484 = vmatprep.mubr.bf16.mxu0 0
      %2485 = vmatmul.mubr.bf16.gmra.mxu0 %v2438
      %v2486 = vpop.f32.mrf.mxu0
      %v2487 = vadd.f32 0.0, %v2486
      %v2488 = vpop.f32.mrf.mxu0
      %v2489 = vpop.f32.mrf.mxu0
      %v2490 = vadd.f32 0.0, %v2489
      %v2491 = vpop.f32.mrf.mxu0
      %2492 = vmatprep.mubr.bf16.mxu0 0
      %2493 = vmatmul.mubr.bf16.gmra.mxu0 %v2441
      %v2494 = vpop.f32.mrf.mxu0
      %v2495 = vadd.f32 0.0, %v2494
      %v2496 = vpop.f32.mrf.mxu0
      %v2497 = vpop.f32.mrf.mxu0
      %v2498 = vadd.f32 0.0, %v2497
      %v2499 = vpop.f32.mrf.mxu0
      %2500 = vmatprep.mubr.bf16.mxu0 0
      %2501 = vmatmul.mubr.bf16.gmra.mxu0 %v2444
      %v2502 = vpop.f32.mrf.mxu0
      %v2503 = vadd.f32 0.0, %v2502
      %v2504 = vpop.f32.mrf.mxu0
      %v2505 = vpop.f32.mrf.mxu0
      %v2506 = vadd.f32 0.0, %v2505
      %v2507 = vpop.f32.mrf.mxu0
      %2508 = vmatprep.mubr.bf16.mxu0 0
      %2509 = vmatmul.mubr.bf16.gmra.mxu0 %v2447
      %v2510 = vpop.f32.mrf.mxu0
      %v2511 = vadd.f32 0.0, %v2510
      %v2512 = vpop.f32.mrf.mxu0
      %v2513 = vpop.f32.mrf.mxu0
      %v2514 = vadd.f32 0.0, %v2513
      %v2515 = vpop.f32.mrf.mxu0
      %2516 = vdwg.mxu0
      %v2517 = vadd.f32 %v2399, %v2487
      %v2518 = vadd.f32 %v2400, %v2490
      %v2519 = vadd.f32 %v2401, %v2495
      %v2520 = vadd.f32 %v2402, %v2498
      %v2521 = vadd.f32 %v2403, %v2503
      %v2522 = vadd.f32 %v2404, %v2506
      %v2523 = vadd.f32 %v2405, %v2511
      %v2524 = vadd.f32 %v2406, %v2514
      %v2525 = vld [vmem:[%s1289] sm:$0xf]
      %v2526 = vld [vmem:[%s1289 + $0x4] sm:$0x1]
      %v2527 = vld [vmem:[%s1289 + $0x8] sm:$0xf]
      %v2528 = vld [vmem:[%s1289 + $0xc] sm:$0x1]
      %v2529 = vld [vmem:[%s1289 + $0x10] sm:$0xf]
      %v2530 = vld [vmem:[%s1289 + $0x14] sm:$0x1]
      %v2531 = vld [vmem:[%s1289 + $0x18] sm:$0xf]
      %v2532 = vld [vmem:[%s1289 + $0x1c] sm:$0x1]
      %v2533 = vld [vmem:[%s1289 + $0x20] sm:$0xf]
      %v2534 = vld [vmem:[%s1289 + $0x24] sm:$0x1]
      %v2535 = vld [vmem:[%s1289 + $0x28] sm:$0xf]
      %v2536 = vld [vmem:[%s1289 + $0x2c] sm:$0x1]
      %v2537 = vld [vmem:[%s1289 + $0x30] sm:$0xf]
      %v2538 = vld [vmem:[%s1289 + $0x34] sm:$0x1]
      %v2539 = vld [vmem:[%s1289 + $0x38] sm:$0xf]
      %v2540 = vld [vmem:[%s1289 + $0x3c] sm:$0x1]
      %v2542 = vshrl.u32 %v2525, 16
      %v2544 = vrot.slane %v2542, 4
      %v2545 = vshll.u32 %v2525, 16
      %v2547 = vrot.slane %v2545, 5
      %v2548 = vor.u32 %v2544, %v2547
      %v2549 = vrot.slane %v2548, 4
      %v2551 = vshll.u32 %v2526, 16
      %v2553 = vrot.slane %v2551, 5
      %v2554 = vsel %vm1608, %v2549, %v2553
      %v2556 = vshrl.u32 %v2527, 16
      %v2558 = vrot.slane %v2556, 4
      %v2559 = vshll.u32 %v2527, 16
      %v2561 = vrot.slane %v2559, 5
      %v2562 = vor.u32 %v2558, %v2561
      %v2563 = vrot.slane %v2562, 4
      %v2565 = vshll.u32 %v2528, 16
      %v2567 = vrot.slane %v2565, 5
      %v2568 = vsel %vm1608, %v2563, %v2567
      %v2570 = vshrl.u32 %v2529, 16
      %v2572 = vrot.slane %v2570, 4
      %v2573 = vshll.u32 %v2529, 16
      %v2575 = vrot.slane %v2573, 5
      %v2576 = vor.u32 %v2572, %v2575
      %v2577 = vrot.slane %v2576, 4
      %v2579 = vshll.u32 %v2530, 16
      %v2581 = vrot.slane %v2579, 5
      %v2582 = vsel %vm1608, %v2577, %v2581
      %v2584 = vshrl.u32 %v2531, 16
      %v2586 = vrot.slane %v2584, 4
      %v2587 = vshll.u32 %v2531, 16
      %v2589 = vrot.slane %v2587, 5
      %v2590 = vor.u32 %v2586, %v2589
      %v2591 = vrot.slane %v2590, 4
      %v2593 = vshll.u32 %v2532, 16
      %v2595 = vrot.slane %v2593, 5
      %v2596 = vsel %vm1608, %v2591, %v2595
      %v2598 = vshrl.u32 %v2533, 16
      %v2600 = vrot.slane %v2598, 4
      %v2601 = vshll.u32 %v2533, 16
      %v2603 = vrot.slane %v2601, 5
      %v2604 = vor.u32 %v2600, %v2603
      %v2605 = vrot.slane %v2604, 4
      %v2607 = vshll.u32 %v2534, 16
      %v2609 = vrot.slane %v2607, 5
      %v2610 = vsel %vm1608, %v2605, %v2609
      %v2612 = vshrl.u32 %v2535, 16
      %v2614 = vrot.slane %v2612, 4
      %v2615 = vshll.u32 %v2535, 16
      %v2617 = vrot.slane %v2615, 5
      %v2618 = vor.u32 %v2614, %v2617
      %v2619 = vrot.slane %v2618, 4
      %v2621 = vshll.u32 %v2536, 16
      %v2623 = vrot.slane %v2621, 5
      %v2624 = vsel %vm1608, %v2619, %v2623
      %v2626 = vshrl.u32 %v2537, 16
      %v2628 = vrot.slane %v2626, 4
      %v2629 = vshll.u32 %v2537, 16
      %v2631 = vrot.slane %v2629, 5
      %v2632 = vor.u32 %v2628, %v2631
      %v2633 = vrot.slane %v2632, 4
      %v2635 = vshll.u32 %v2538, 16
      %v2637 = vrot.slane %v2635, 5
      %v2638 = vsel %vm1608, %v2633, %v2637
      %v2640 = vshrl.u32 %v2539, 16
      %v2642 = vrot.slane %v2640, 4
      %v2643 = vshll.u32 %v2539, 16
      %v2645 = vrot.slane %v2643, 5
      %v2646 = vor.u32 %v2642, %v2645
      %v2647 = vrot.slane %v2646, 4
      %v2649 = vshll.u32 %v2540, 16
      %v2651 = vrot.slane %v2649, 5
      %v2652 = vsel %vm1608, %v2647, %v2651
      %s2653 = scalar_lea.vmem %s6, 16
      %v2654 = vld [vmem:[%s2653] sm:$0x3]
      %v2655 = vunpack.c.l.b16 %v2554
      %v2656 = vunpack.c.l.b16 %v2568
      %v2657 = vunpack.c.l.b16 %v2582
      %v2658 = vunpack.c.l.b16 %v2596
      %v2659 = vunpack.c.l.b16 %v2610
      %v2660 = vunpack.c.l.b16 %v2624
      %v2661 = vunpack.c.l.b16 %v2638
      %v2662 = vunpack.c.l.b16 %v2652
      %v2663 = vpack.c.b16 %v2656, %v2655
      %v2664 = vpack.c.b16 %v2658, %v2657
      %v2665 = vpack.c.b16 %v2660, %v2659
      %v2666 = vpack.c.b16 %v2662, %v2661
      %v2668 = vsel %vm1408, %v2663, 0
      %v2671 = vsel %vm1408, %v2664, 0
      %v2674 = vsel %vm1408, %v2665, 0
      %v2677 = vsel %vm1408, %v2666, 0
      %v2680 = vsel %vm1421, %v2654, 0
      %2682 = vmatprep.subr.bf16.mxu0 0
      %2683 = vmatpush1.bf16.msra.mxu0 0
      %2684 = vmatprep.subr.bf16.mxu0 0
      %2685 = vmatpush1.bf16.msra.mxu0 0
      %2686 = vmatprep.subr.bf16.mxu0 0
      %2687 = vmatpush1.bf16.msra.mxu0 0
      %2688 = vmatprep.subr.bf16.mxu0 0
      %2689 = vmatpush1.bf16.msra.mxu0 0
      %2690 = vmatprep.subr.bf16.mxu0 0
      %2691 = vmatpush1.bf16.msra.mxu0 0
      %2692 = vmatprep.subr.bf16.mxu0 0
      %2693 = vmatpush1.bf16.msra.mxu0 0
      %2694 = vmatprep.subr.bf16.mxu0 0
      %2695 = vmatpush1.bf16.msra.mxu0 0
      %2696 = vmatprep.subr.bf16.mxu0 0
      %2697 = vmatpush1.bf16.msra.mxu0 %v2680
      %2698 = vmatprep.subr.bf16.mxu0 0
      %2699 = vmatpush2.bf16.msra.mxu0 0
      %2700 = vmatprep.subr.bf16.mxu0 0
      %2701 = vmatpush2.bf16.msra.mxu0 0
      %2702 = vmatprep.subr.bf16.mxu0 0
      %2703 = vmatpush2.bf16.msra.mxu0 0
      %2704 = vmatprep.subr.bf16.mxu0 0
      %2705 = vmatpush2.bf16.msra.mxu0 0
      %2706 = vmatprep.subr.bf16.mxu0 0
      %2707 = vmatpush2.bf16.msra.mxu0 0
      %2708 = vmatprep.subr.bf16.mxu0 0
      %2709 = vmatpush2.bf16.msra.mxu0 0
      %2710 = vmatprep.subr.bf16.mxu0 0
      %2711 = vmatpush2.bf16.msra.mxu0 0
      %2712 = vmatprep.subr.bf16.mxu0 0
      %2713 = vmatpush2.bf16.msra.mxu0 0
      %2714 = vmatprep.mubr.bf16.mxu0 0
      %2715 = vmatmul.mubr.bf16.gmra.mxu0 %v2668
      %v2716 = vpop.f32.mrf.mxu0
      %v2717 = vadd.f32 0.0, %v2716
      %v2718 = vpop.f32.mrf.mxu0
      %v2719 = vpop.f32.mrf.mxu0
      %v2720 = vadd.f32 0.0, %v2719
      %v2721 = vpop.f32.mrf.mxu0
      %2722 = vmatprep.mubr.bf16.mxu0 0
      %2723 = vmatmul.mubr.bf16.gmra.mxu0 %v2671
      %v2724 = vpop.f32.mrf.mxu0
      %v2725 = vadd.f32 0.0, %v2724
      %v2726 = vpop.f32.mrf.mxu0
      %v2727 = vpop.f32.mrf.mxu0
      %v2728 = vadd.f32 0.0, %v2727
      %v2729 = vpop.f32.mrf.mxu0
      %2730 = vmatprep.mubr.bf16.mxu0 0
      %2731 = vmatmul.mubr.bf16.gmra.mxu0 %v2674
      %v2732 = vpop.f32.mrf.mxu0
      %v2733 = vadd.f32 0.0, %v2732
      %v2734 = vpop.f32.mrf.mxu0
      %v2735 = vpop.f32.mrf.mxu0
      %v2736 = vadd.f32 0.0, %v2735
      %v2737 = vpop.f32.mrf.mxu0
      %2738 = vmatprep.mubr.bf16.mxu0 0
      %2739 = vmatmul.mubr.bf16.gmra.mxu0 %v2677
      %v2740 = vpop.f32.mrf.mxu0
      %v2741 = vadd.f32 0.0, %v2740
      %v2742 = vpop.f32.mrf.mxu0
      %v2743 = vpop.f32.mrf.mxu0
      %v2744 = vadd.f32 0.0, %v2743
      %v2745 = vpop.f32.mrf.mxu0
      %2746 = vdwg.mxu0
      %v2747 = vadd.f32 %v2517, %v2717
      %v2748 = vadd.f32 %v2518, %v2720
      %v2749 = vadd.f32 %v2519, %v2725
      %v2750 = vadd.f32 %v2520, %v2728
      %v2751 = vadd.f32 %v2521, %v2733
      %v2752 = vadd.f32 %v2522, %v2736
      %v2753 = vadd.f32 %v2523, %v2741
      %v2754 = vadd.f32 %v2524, %v2744
      %v2755 = vld [vmem:[%s4] sm:$0x1]
      %v2757 = vlaneseq
      %v2758 = vshrl.u32 %v2757, 7
      %v2759 = vsub.s32 0, %v2758
      %v2760 = vrot.slane %v2755, %v2759
      %v2762 = vadd.f32 %v2747, %v2760
      %v2763 = vadd.f32 %v2748, %v2760
      %v2764 = vadd.f32 %v2749, %v2760
      %v2765 = vadd.f32 %v2750, %v2760
      %v2766 = vadd.f32 %v2751, %v2760
      %v2767 = vadd.f32 %v2752, %v2760
      %v2768 = vadd.f32 %v2753, %v2760
      %v2769 = vadd.f32 %v2754, %v2760
      %v2770 = vmax.f32 %v2762, 0.0
      %v2771 = vmax.f32 %v2763, 0.0
      %v2772 = vmax.f32 %v2764, 0.0
      %v2773 = vmax.f32 %v2765, 0.0
      %v2774 = vmax.f32 %v2766, 0.0
      %v2775 = vmax.f32 %v2767, 0.0
      %v2776 = vmax.f32 %v2768, 0.0
      %v2777 = vmax.f32 %v2769, 0.0
      %v2778 = vpack.c.bf16 %v2771, %v2770
      %v2779 = vpack.c.bf16 %v2773, %v2772
      %v2780 = vpack.c.bf16 %v2775, %v2774
      %v2781 = vpack.c.bf16 %v2777, %v2776
      %v2782 = vld [vmem:[%s7] sm:$0x3]
      %v2784 = vsel %vm1408, %v2778, 0
      %v2787 = vsel %vm1408, %v2779, 0
      %v2790 = vsel %vm1408, %v2780, 0
      %v2793 = vsel %vm1408, %v2781, 0
      %v2796 = vsel %vm1421, %v2782, 0
      %2798 = vmatprep.subr.bf16.mxu0 0
      %2799 = vmatpush1.bf16.msra.mxu0 0
      %2800 = vmatprep.subr.bf16.mxu0 0
      %2801 = vmatpush1.bf16.msra.mxu0 0
      %2802 = vmatprep.subr.bf16.mxu0 0
      %2803 = vmatpush1.bf16.msra.mxu0 0
      %2804 = vmatprep.subr.bf16.mxu0 0
      %2805 = vmatpush1.bf16.msra.mxu0 0
      %2806 = vmatprep.subr.bf16.mxu0 0
      %2807 = vmatpush1.bf16.msra.mxu0 0
      %2808 = vmatprep.subr.bf16.mxu0 0
      %2809 = vmatpush1.bf16.msra.mxu0 0
      %2810 = vmatprep.subr.bf16.mxu0 0
      %2811 = vmatpush1.bf16.msra.mxu0 0
      %2812 = vmatprep.subr.bf16.mxu0 0
      %2813 = vmatpush1.bf16.msra.mxu0 %v2796
      %2814 = vmatprep.subr.bf16.mxu0 0
      %2815 = vmatpush2.bf16.msra.mxu0 0
      %2816 = vmatprep.subr.bf16.mxu0 0
      %2817 = vmatpush2.bf16.msra.mxu0 0
      %2818 = vmatprep.subr.bf16.mxu0 0
      %2819 = vmatpush2.bf16.msra.mxu0 0
      %2820 = vmatprep.subr.bf16.mxu0 0
      %2821 = vmatpush2.bf16.msra.mxu0 0
      %2822 = vmatprep.subr.bf16.mxu0 0
      %2823 = vmatpush2.bf16.msra.mxu0 0
      %2824 = vmatprep.subr.bf16.mxu0 0
      %2825 = vmatpush2.bf16.msra.mxu0 0
      %2826 = vmatprep.subr.bf16.mxu0 0
      %2827 = vmatpush2.bf16.msra.mxu0 0
      %2828 = vmatprep.subr.bf16.mxu0 0
      %2829 = vmatpush2.bf16.msra.mxu0 0
      %2830 = vmatprep.mubr.bf16.mxu0 0
      %2831 = vmatmul.mubr.bf16.gmra.mxu0 %v2784
      %v2832 = vpop.f32.mrf.mxu0
      %v2833 = vadd.f32 %v833, %v2832
      %v2834 = vpop.f32.mrf.mxu0
      %v2835 = vpop.f32.mrf.mxu0
      %v2836 = vadd.f32 %v836, %v2835
      %v2837 = vpop.f32.mrf.mxu0
      %2838 = vmatprep.mubr.bf16.mxu0 0
      %2839 = vmatmul.mubr.bf16.gmra.mxu0 %v2787
      %v2840 = vpop.f32.mrf.mxu0
      %v2841 = vadd.f32 %v841, %v2840
      %v2842 = vpop.f32.mrf.mxu0
      %v2843 = vpop.f32.mrf.mxu0
      %v2844 = vadd.f32 %v844, %v2843
      %v2845 = vpop.f32.mrf.mxu0
      %2846 = vmatprep.mubr.bf16.mxu0 0
      %2847 = vmatmul.mubr.bf16.gmra.mxu0 %v2790
      %v2848 = vpop.f32.mrf.mxu0
      %v2849 = vadd.f32 %v849, %v2848
      %v2850 = vpop.f32.mrf.mxu0
      %v2851 = vpop.f32.mrf.mxu0
      %v2852 = vadd.f32 %v852, %v2851
      %v2853 = vpop.f32.mrf.mxu0
      %2854 = vmatprep.mubr.bf16.mxu0 0
      %2855 = vmatmul.mubr.bf16.gmra.mxu0 %v2793
      %v2856 = vpop.f32.mrf.mxu0
      %v2857 = vadd.f32 %v857, %v2856
      %v2858 = vpop.f32.mrf.mxu0
      %v2859 = vpop.f32.mrf.mxu0
      %v2860 = vadd.f32 %v860, %v2859
      %v2861 = vpop.f32.mrf.mxu0
      %2862 = vdwg.mxu0
      %vm2863 = vcmask 130048
      %2864 = vst.msk [vmem:[%s332] sm:$0xff] %vm2863, %v2833
      %2865 = vst.msk [vmem:[%s332 + $0x8] sm:$0xff] %vm2863, %v2836
      %2866 = vst.msk [vmem:[%s332 + $0x10] sm:$0xff] %vm2863, %v2841
      %2867 = vst.msk [vmem:[%s332 + $0x18] sm:$0xff] %vm2863, %v2844
      %2868 = vst.msk [vmem:[%s332 + $0x20] sm:$0xff] %vm2863, %v2849
      %2869 = vst.msk [vmem:[%s332 + $0x28] sm:$0xff] %vm2863, %v2852
      %2870 = vst.msk [vmem:[%s332 + $0x30] sm:$0xff] %vm2863, %v2857
      %2871 = vst.msk [vmem:[%s332 + $0x38] sm:$0xff] %vm2863, %v2860
      %p2872 = scmp.lt.s32.totalorder %s20, 1
      %s2873 = scalar_select %p2872, %s20, 1
      %s2874 = smul.addr %s2873, 8
      %s2875 = smul.addr %s2874, 8
      %s2876 = scalar_lea.vmem %s9, %s2875
      // Predicated region
      $region57: #{tpu_custom_call.1} parent=55 // pred_check
        %p2877 = pneg %p232
      $region58: #{tpu_custom_call.1} parent=55 // pred_check_branch
        %2879 = sbr.rel (%p2877) target = $region60
      $region59: #{tpu_custom_call.1} parent=55 // pred_region
        _
      $region60: #{tpu_custom_call.1} parent=55 // pred_fallthru
        _
    $region56: #{tpu_custom_call.1} parent=5 // pred_fallthru
      _
    %p2880 = scmp.le.s32.totalorder 2, %s15
    // Predicated region
    $region61: #{tpu_custom_call.1} parent=5 // pred_check
      %p2881 = pneg %p2880
    $region62: #{tpu_custom_call.1} parent=5 // pred_check_branch
      %2883 = sbr.rel (%p2881) target = $region64
    $region63: #{tpu_custom_call.1} parent=5 // pred_region
      %s2884 = ssub.s32 %s15, 2
      // Predicated region
      $region65: #{tpu_custom_call.1} parent=63 // pred_check
        %p2885 = pneg %p238
      $region66: #{tpu_custom_call.1} parent=63 // pred_check_branch
        %2887 = sbr.rel (%p2885) target = $region68
      $region67: #{tpu_custom_call.1} parent=63 // pred_region
        %p2888 = scmp.lt.s32.totalorder %s21, 1
        %s2889 = scalar_select %p2888, %s21, 1
        %s2890 = smul.addr %s2889, 8
        %s2891 = smul.addr %s2890, 8
        %s2892 = scalar_lea.vmem %s9, %s2891
      $region68: #{tpu_custom_call.1} parent=63 // pred_fallthru
        _
    $region64: #{tpu_custom_call.1} parent=5 // pred_fallthru
      _
  $region6: #{tpu_custom_call.1} parent=0 // loop_footer
    %s19 = sadd.s32 1, %s15
  $region7: #{tpu_custom_call.1} parent=0 // loop_footer_branch
    %14 = sbr.rel target = $region3
  $region8: #{tpu_custom_call.1} parent=0 // loop_exit
    _

</llo_original>
